<compile_context>
chip_gen: v7x
topology: tpu7x:2x2x1
jax: 0.10.0
libtpu: 0.0.40
codegen_flags: <defaults>
</compile_context>

<pallas_src>
import functools

import jax
import jax.numpy as jnp
from jax import lax
from jax.experimental import pallas as pl
from jax.experimental.pallas import tpu as pltpu


def _conv3x3_ps_kernel(x_ref, w_ref, b_ref, p_ref, o_ref, *,
                       cin, cf, r, tile_h, W, H, use_relu):
    # x_ref: (Cin, H, W)            resident NCHW image for batch n
    # w_ref: (r*r*cf, 9*Cin)        weights, row = (i*r + j)*cf + c,
    #                               col = (kh*3 + kw)*Cin + ci
    # b_ref: (r*r*cf, 1)            bias (f32, same row order)
    # p_ref: (r*W, W*r)             lane-interleave permutation (0/1, f32)
    # o_ref: (cf, tile_h, r, W*r)   shuffled output block for rows [h0, h0+tile_h)
    h = pl.program_id(1)
    h0 = pl.multiple_of(h * tile_h, tile_h)

    # ---- haloed row bands as values (no scratch, no zero-fill pass) ----------
    x_main = x_ref[:, pl.ds(h0, tile_h), :]                          # (Cin, tH, W)
    top = x_ref[:, pl.ds(jnp.maximum(h0 - 1, 0), 1), :]              # (Cin, 1, W)
    bot = x_ref[:, pl.ds(jnp.minimum(h0 + tile_h, H - 1), 1), :]     # (Cin, 1, W)
    zero_row = jnp.zeros_like(top)
    top = jnp.where(h0 > 0, top, zero_row)                           # image top edge
    bot = jnp.where(h0 + tile_h < H, bot, zero_row)                  # image bottom edge

    if tile_h > 1:
        bands = (
            jnp.concatenate([top, x_main[:, :tile_h - 1, :]], axis=1),   # kh = 0
            x_main,                                                      # kh = 1
            jnp.concatenate([x_main[:, 1:, :], bot], axis=1),            # kh = 2
        )
    else:
        bands = (top, x_main, bot)
    zcol = jnp.zeros((cin, tile_h, 1), x_ref.dtype)

    # ---- conv3x3: 9 per-tap dots accumulated in f32 (no im2col slab) ---------
    w_all = w_ref[...]                                               # (r*r*cf, 9*Cin)
    acc = jnp.zeros((r * r * cf, tile_h * W), jnp.float32)
    for kh in range(3):
        band = bands[kh]
        for kw in range(3):
            if kw == 0:        # left zero column, real pixels stay at lane 0
                tap = jnp.concatenate([zcol, band[:, :, :W - 1]], axis=-1)
            elif kw == 1:
                tap = band
            else:              # right zero column
                tap = jnp.concatenate([band[:, :, 1:], zcol], axis=-1)
            t = kh * 3 + kw
            acc = acc + jnp.dot(w_all[:, t * cin:(t + 1) * cin],
                                tap.reshape(cin, tile_h * W),
                                preferred_element_type=jnp.float32)
    acc = acc + b_ref[...]                                           # (Cout, 1) bcast
    if use_relu:                                                     # ReLU commutes with shuffle
        acc = jnp.maximum(acc, 0.0)

    # ---- fused PixelShuffle store --------------------------------------------
    # row phase i  -> the `r` axis of the output block (pure indexing, free)
    # col phase j  -> lane interleave via a small constant permutation matmul
    pmat = p_ref[...]                                                # (r*W, W*r)
    for i in range(r):
        for hh in range(tile_h):
            parts = [acc[(i * r + j) * cf:(i * r + j + 1) * cf,
                         hh * W:(hh + 1) * W] for j in range(r)]
            cat = jnp.concatenate(parts, axis=-1)                    # (cf, r*W)
            row = jnp.dot(cat, pmat, preferred_element_type=jnp.float32)
            o_ref[:, hh, i, :] = row.astype(o_ref.dtype)             # (cf, W*r) store


def _pick_tile_h(H, requested=None, max_tile=16):
    """Largest divisor of H (<= max_tile) unless a valid tile is requested."""
    if requested is not None and 1 <= requested <= H and H % requested == 0:
        return requested
    best = H
    for t in range(min(max_tile, H), 1, -1):
        if H % t == 0:
            best = t
            break
    return best


def conv3x3_pixelshuffle(x_nchw, w_slab, b_slab, *, upscale_factor, use_relu,
                         tile_h=None):
    """conv3x3(pad=1)+bias(+ReLU)+PixelShuffle fully fused in one Pallas kernel.

    x_nchw: (N, Cin, H, W); w_slab: (r*r*cf, 9*Cin); b_slab: (r*r*cf, 1) f32.
    Returns NCHW (N, cf, H*r, W*r).
    """
    N, Cin, H, W = x_nchw.shape
    r = upscale_factor
    cf = w_slab.shape[0] // (r * r)
    th = _pick_tile_h(H, tile_h)
    n_h = H // th

    # Lane-interleave permutation: P[j*W + w, w*r + j] = 1.
    src = jnp.arange(r * W)
    dst = (src % W) * r + (src // W)
    pmat = (jnp.arange(W * r)[None, :] == dst[:, None]).astype(jnp.float32)

    kernel = functools.partial(_conv3x3_ps_kernel, cin=Cin, cf=cf, r=r,
                               tile_h=th, W=W, H=H, use_relu=use_relu)

    # VMEM budget derived from the actual blocks (resident image + output block
    # double-buffered, small constant blocks, headroom for bands/taps/acc).
    ds_x = jnp.dtype(x_nchw.dtype).itemsize
    est = (2 * Cin * H * W * ds_x
           + 2 * cf * th * r * W * r * ds_x
           + 2 * (w_slab.size * jnp.dtype(w_slab.dtype).itemsize
                  + b_slab.size * 4 + pmat.size * 4)
           + (16 * Cin + 4 * r * r * cf) * th * W * 4)
    vmem_limit = int(min(60 * 2 ** 20, max(24 * 2 ** 20, 2 * est)))

    out5 = pl.pallas_call(
        kernel,
        out_shape=jax.ShapeDtypeStruct((N, cf, H, r, W * r), x_nchw.dtype),
        grid_spec=pltpu.PrefetchScalarGridSpec(
            num_scalar_prefetch=0,
            grid=(N, n_h),
            in_specs=[
                # Full-height image, resident per batch element.
                # TODO(synk): manual haloed-row DMA for very large images (v7x).
                pl.BlockSpec((None, Cin, H, W), lambda n, h: (n, 0, 0, 0)),
                # Small constant-index blocks (weights / bias / permutation).
                pl.BlockSpec((r * r * cf, 9 * Cin), lambda n, h: (0, 0)),
                pl.BlockSpec((r * r * cf, 1), lambda n, h: (0, 0)),
                pl.BlockSpec((r * W, W * r), lambda n, h: (0, 0)),
            ],
            # Shuffled output layout (N, cf, H, r, W*r): last two block dims are
            # full array dims -> spec-legal, and every HBM run is W*r contiguous.
            out_specs=pl.BlockSpec((None, cf, th, r, W * r),
                                   lambda n, h: (n, 0, h, 0, 0)),
        ),
        compiler_params=pltpu.CompilerParams(
            dimension_semantics=("parallel", "parallel"),
            vmem_limit_bytes=vmem_limit),
    )(x_nchw, w_slab, b_slab, pmat)

    # The kernel already wrote the PixelShuffle layout; this reshape is free.
    return out5.reshape(N, cf, H * r, W * r)


class PixerShufflePallas:
    def __init__(self, in_channels, out_channels, upscale_factor,
                 use_norm=False, use_relu=True, key=None,
                 compute_dtype=jnp.float32, tile_h=None):
        assert not use_norm, "use_norm path is undefined in the reference module"
        self.r = upscale_factor
        self.use_relu = use_relu
        self.tile_h = tile_h
        self.compute_dtype = compute_dtype
        r = upscale_factor
        cf = out_channels
        cout = cf * r * r

        k_w, k_b = jax.random.split(key)
        fan_in = in_channels * 9
        bound = 1.0 / (fan_in ** 0.5)
        # Conv2d-shaped params (Cout, Cin, 3, 3), deterministic init.
        self.w_oihw = jax.random.uniform(k_w, (cout, in_channels, 3, 3),
                                         jnp.float32, -bound, bound)
        self.bias = jax.random.uniform(k_b, (cout,), jnp.float32, -bound, bound)

        # Weight slab (r*r*cf, 9*Cin): row = (i*r + j)*cf + c, col = (kh*3+kw)*Cin + ci.
        w2d = jnp.transpose(self.w_oihw, (0, 2, 3, 1)).reshape(cout, 9 * in_channels)
        w4 = w2d.reshape(cf, r, r, 9 * in_channels)          # (c, i, j, k)
        w4 = jnp.transpose(w4, (1, 2, 0, 3))                  # (i, j, c, k)
        self.w_slab = w4.reshape(cout, 9 * in_channels).astype(compute_dtype)

        b3 = self.bias.reshape(cf, r, r)                      # (c, i, j)
        b3 = jnp.transpose(b3, (1, 2, 0))                     # (i, j, c)
        self.b_slab = b3.reshape(cout, 1).astype(jnp.float32)

    def __call__(self, x_nchw):
        # bf16 path: pass compute_dtype=jnp.bfloat16 (halves HBM/VMEM traffic on
        # v6e/v7x); accumulation stays f32 inside the kernel.
        x = x_nchw.astype(self.compute_dtype)
        return conv3x3_pixelshuffle(x, self.w_slab, self.b_slab,
                                    upscale_factor=self.r,
                                    use_relu=self.use_relu,
                                    tile_h=self.tile_h)


def _reference(x_nchw, w_oihw, bias, r, use_relu):
    y = lax.conv_general_dilated(
        x_nchw, w_oihw, window_strides=(1, 1), padding=((1, 1), (1, 1)),
        dimension_numbers=("NCHW", "OIHW", "NCHW"),
        precision=lax.Precision.HIGHEST)
    y = y + bias[None, :, None, None]
    if use_relu:
        y = jnp.maximum(y, 0.0)
    N, C, H, W = y.shape
    c_out = C // (r * r)
    y = y.reshape(N, c_out, r, r, H, W)
    y = jnp.transpose(y, (0, 1, 4, 2, 5, 3))
    return y.reshape(N, c_out, H * r, W * r)


if __name__ == "__main__":
    key = jax.random.PRNGKey(0)
    k_x, k_p = jax.random.split(key)

    N, Cin, H, W = 2, 4, 16, 16
    out_channels, r = 4, 2

    x = jax.random.normal(k_x, (N, Cin, H, W), jnp.float32)

    # f32 path (tight check); tile_h=8 exercises the row-tile grid axis.
    mod = PixerShufflePallas(Cin, out_channels, r, use_norm=False, use_relu=True,
                             key=k_p, compute_dtype=jnp.float32, tile_h=8)
    out = jax.block_until_ready(jax.jit(mod.__call__)(x))
    ref = _reference(x, mod.w_oihw, mod.bias, r, use_relu=True)
    assert out.shape == (N, out_channels, H * r, W * r), out.shape
    assert jnp.allclose(out, ref, atol=1e-3, rtol=1e-3), "f32 mismatch vs reference"

    # bf16 path (implements the review's reduced-traffic option) - loose check.
    mod_bf16 = PixerShufflePallas(Cin, out_channels, r, use_norm=False,
                                  use_relu=True, key=k_p,
                                  compute_dtype=jnp.bfloat16, tile_h=8)
    out_bf16 = jax.block_until_ready(jax.jit(mod_bf16.__call__)(x))
    assert out_bf16.shape == (N, out_channels, H * r, W * r)
    assert jnp.allclose(out_bf16.astype(jnp.float32), ref, atol=5e-2, rtol=5e-2), \
        "bf16 mismatch vs reference"

    print("KERNEL_OK")
</pallas_src>

<mosaic_0001>
module attributes {stable_mosaic.version = 11 : i64} {
  func.func @_conv3x3_ps_kernel(%arg0: i32, %arg1: i32, %arg2: memref<1x4x16x16xf32, #tpu.memory_space<vmem>>, %arg3: memref<16x36xf32, #tpu.memory_space<vmem>>, %arg4: memref<16x1xf32, #tpu.memory_space<vmem>>, %arg5: memref<32x32xf32, #tpu.memory_space<vmem>>, %arg6: memref<1x4x8x2x32xf32, #tpu.memory_space<vmem>>) attributes {dimension_semantics = [#tpu.dimension_semantics<parallel>, #tpu.dimension_semantics<parallel>], iteration_bounds = array<i64: 2, 2>, scalar_prefetch = 0 : i64, scratch_operands = 0 : i64, tpu.core_type = #tpu.core_type<tc>, window_params = [{transform_indices = @transform_0, window_bounds = array<i64: 1, 4, 16, 16>}, {pipeline_mode = #tpu.pipeline_mode<synchronous>, transform_indices = @transform_1, window_bounds = array<i64: 16, 36>}, {pipeline_mode = #tpu.pipeline_mode<synchronous>, transform_indices = @transform_2, window_bounds = array<i64: 16, 1>}, {pipeline_mode = #tpu.pipeline_mode<synchronous>, transform_indices = @transform_3, window_bounds = array<i64: 32, 32>}, {transform_indices = @transform_4, window_bounds = array<i64: 1, 4, 8, 2, 32>}]} {
    %c8_i32 = arith.constant 8 : i32
    %0 = arith.muli %arg1, %c8_i32 : i32
    %1 = tpu.assume_multiple %0, 8 : i32
    %c0 = arith.constant 0 : index
    %c0_0 = arith.constant 0 : index
    %2 = arith.index_cast %1 : i32 to index
    %c0_1 = arith.constant 0 : index
    %3 = vector.load %arg2[%c0, %c0_0, %2, %c0_1] : memref<1x4x16x16xf32, #tpu.memory_space<vmem>>, vector<1x4x8x16xf32>
    %4 = vector.shape_cast %3 : vector<1x4x8x16xf32> to vector<4x8x16xf32>
    %c1_i32 = arith.constant 1 : i32
    %5 = arith.subi %1, %c1_i32 : i32
    %c0_i32 = arith.constant 0 : i32
    %6 = arith.maxsi %5, %c0_i32 : i32
    %c0_2 = arith.constant 0 : index
    %c0_3 = arith.constant 0 : index
    %7 = arith.index_cast %6 : i32 to index
    %c0_4 = arith.constant 0 : index
    %8 = vector.load %arg2[%c0_2, %c0_3, %7, %c0_4] : memref<1x4x16x16xf32, #tpu.memory_space<vmem>>, vector<1x4x1x16xf32>
    %9 = vector.shape_cast %8 : vector<1x4x1x16xf32> to vector<4x1x16xf32>
    %c8_i32_5 = arith.constant 8 : i32
    %10 = arith.addi %1, %c8_i32_5 : i32
    %c15_i32 = arith.constant 15 : i32
    %11 = arith.minsi %10, %c15_i32 : i32
    %c0_6 = arith.constant 0 : index
    %c0_7 = arith.constant 0 : index
    %12 = arith.index_cast %11 : i32 to index
    %c0_8 = arith.constant 0 : index
    %13 = vector.load %arg2[%c0_6, %c0_7, %12, %c0_8] : memref<1x4x16x16xf32, #tpu.memory_space<vmem>>, vector<1x4x1x16xf32>
    %14 = vector.shape_cast %13 : vector<1x4x1x16xf32> to vector<4x1x16xf32>
    %cst = arith.constant 0.000000e+00 : f32
    %15 = vector.broadcast %cst : f32 to vector<4x1x16xf32>
    %c0_i32_9 = arith.constant 0 : i32
    %16 = arith.cmpi sgt, %1, %c0_i32_9 : i32
    %17 = arith.select %16, %9, %15 : vector<4x1x16xf32>
    %c8_i32_10 = arith.constant 8 : i32
    %18 = arith.addi %1, %c8_i32_10 : i32
    %c16_i32 = arith.constant 16 : i32
    %19 = arith.cmpi slt, %18, %c16_i32 : i32
    %20 = arith.select %19, %14, %15 : vector<4x1x16xf32>
    %21 = vector.extract_strided_slice %4 {offsets = [0, 0, 0], sizes = [4, 7, 16], strides = [1, 1, 1]} : vector<4x8x16xf32> to vector<4x7x16xf32>
    %22 = tpu.concatenate %17, %21 in 1 : vector<4x1x16xf32>, vector<4x7x16xf32> -> vector<4x8x16xf32>
    %23 = vector.extract_strided_slice %4 {offsets = [0, 1, 0], sizes = [4, 7, 16], strides = [1, 1, 1]} : vector<4x8x16xf32> to vector<4x7x16xf32>
    %24 = tpu.concatenate %23, %20 in 1 : vector<4x7x16xf32>, vector<4x1x16xf32> -> vector<4x8x16xf32>
    %cst_11 = arith.constant 0.000000e+00 : f32
    %25 = vector.broadcast %cst_11 : f32 to vector<4x8x1xf32>
    %c0_12 = arith.constant 0 : index
    %c0_13 = arith.constant 0 : index
    %26 = vector.load %arg3[%c0_12, %c0_13] : memref<16x36xf32, #tpu.memory_space<vmem>>, vector<16x36xf32>
    %cst_14 = arith.constant 0.000000e+00 : f32
    %27 = vector.broadcast %cst_14 : f32 to vector<16x128xf32>
    %28 = vector.extract_strided_slice %22 {offsets = [0, 0, 0], sizes = [4, 8, 15], strides = [1, 1, 1]} : vector<4x8x16xf32> to vector<4x8x15xf32>
    %29 = tpu.concatenate %25, %28 in 2 : vector<4x8x1xf32>, vector<4x8x15xf32> -> vector<4x8x16xf32>
    %30 = vector.extract_strided_slice %26 {offsets = [0, 0], sizes = [16, 4], strides = [1, 1]} : vector<16x36xf32> to vector<16x4xf32>
    %31 = vector.shape_cast %29 : vector<4x8x16xf32> to vector<4x128xf32>
    %cst_15 = arith.constant dense<0.000000e+00> : vector<16x128xf32>
    %32 = tpu.matmul %30, %31, %cst_15 {dimension_numbers = #tpu.dot_dimension_numbers<[1], [0], [0], [1], [0, 0, 1, 1], [], []>} : vector<16x4xf32>, vector<4x128xf32>, vector<16x128xf32> -> vector<16x128xf32>
    %33 = arith.addf %27, %32 : vector<16x128xf32>
    %34 = vector.extract_strided_slice %26 {offsets = [0, 4], sizes = [16, 4], strides = [1, 1]} : vector<16x36xf32> to vector<16x4xf32>
    %35 = vector.shape_cast %22 : vector<4x8x16xf32> to vector<4x128xf32>
    %cst_16 = arith.constant dense<0.000000e+00> : vector<16x128xf32>
    %36 = tpu.matmul %34, %35, %cst_16 {dimension_numbers = #tpu.dot_dimension_numbers<[1], [0], [0], [1], [0, 0, 1, 1], [], []>} : vector<16x4xf32>, vector<4x128xf32>, vector<16x128xf32> -> vector<16x128xf32>
    %37 = arith.addf %33, %36 : vector<16x128xf32>
    %38 = vector.extract_strided_slice %22 {offsets = [0, 0, 1], sizes = [4, 8, 15], strides = [1, 1, 1]} : vector<4x8x16xf32> to vector<4x8x15xf32>
    %39 = tpu.concatenate %38, %25 in 2 : vector<4x8x15xf32>, vector<4x8x1xf32> -> vector<4x8x16xf32>
    %40 = vector.extract_strided_slice %26 {offsets = [0, 8], sizes = [16, 4], strides = [1, 1]} : vector<16x36xf32> to vector<16x4xf32>
    %41 = vector.shape_cast %39 : vector<4x8x16xf32> to vector<4x128xf32>
    %cst_17 = arith.constant dense<0.000000e+00> : vector<16x128xf32>
    %42 = tpu.matmul %40, %41, %cst_17 {dimension_numbers = #tpu.dot_dimension_numbers<[1], [0], [0], [1], [0, 0, 1, 1], [], []>} : vector<16x4xf32>, vector<4x128xf32>, vector<16x128xf32> -> vector<16x128xf32>
    %43 = arith.addf %37, %42 : vector<16x128xf32>
    %44 = vector.extract_strided_slice %4 {offsets = [0, 0, 0], sizes = [4, 8, 15], strides = [1, 1, 1]} : vector<4x8x16xf32> to vector<4x8x15xf32>
    %45 = tpu.concatenate %25, %44 in 2 : vector<4x8x1xf32>, vector<4x8x15xf32> -> vector<4x8x16xf32>
    %46 = vector.extract_strided_slice %26 {offsets = [0, 12], sizes = [16, 4], strides = [1, 1]} : vector<16x36xf32> to vector<16x4xf32>
    %47 = vector.shape_cast %45 : vector<4x8x16xf32> to vector<4x128xf32>
    %cst_18 = arith.constant dense<0.000000e+00> : vector<16x128xf32>
    %48 = tpu.matmul %46, %47, %cst_18 {dimension_numbers = #tpu.dot_dimension_numbers<[1], [0], [0], [1], [0, 0, 1, 1], [], []>} : vector<16x4xf32>, vector<4x128xf32>, vector<16x128xf32> -> vector<16x128xf32>
    %49 = arith.addf %43, %48 : vector<16x128xf32>
    %50 = vector.extract_strided_slice %26 {offsets = [0, 16], sizes = [16, 4], strides = [1, 1]} : vector<16x36xf32> to vector<16x4xf32>
    %51 = vector.shape_cast %4 : vector<4x8x16xf32> to vector<4x128xf32>
    %cst_19 = arith.constant dense<0.000000e+00> : vector<16x128xf32>
    %52 = tpu.matmul %50, %51, %cst_19 {dimension_numbers = #tpu.dot_dimension_numbers<[1], [0], [0], [1], [0, 0, 1, 1], [], []>} : vector<16x4xf32>, vector<4x128xf32>, vector<16x128xf32> -> vector<16x128xf32>
    %53 = arith.addf %49, %52 : vector<16x128xf32>
    %54 = vector.extract_strided_slice %4 {offsets = [0, 0, 1], sizes = [4, 8, 15], strides = [1, 1, 1]} : vector<4x8x16xf32> to vector<4x8x15xf32>
    %55 = tpu.concatenate %54, %25 in 2 : vector<4x8x15xf32>, vector<4x8x1xf32> -> vector<4x8x16xf32>
    %56 = vector.extract_strided_slice %26 {offsets = [0, 20], sizes = [16, 4], strides = [1, 1]} : vector<16x36xf32> to vector<16x4xf32>
    %57 = vector.shape_cast %55 : vector<4x8x16xf32> to vector<4x128xf32>
    %cst_20 = arith.constant dense<0.000000e+00> : vector<16x128xf32>
    %58 = tpu.matmul %56, %57, %cst_20 {dimension_numbers = #tpu.dot_dimension_numbers<[1], [0], [0], [1], [0, 0, 1, 1], [], []>} : vector<16x4xf32>, vector<4x128xf32>, vector<16x128xf32> -> vector<16x128xf32>
    %59 = arith.addf %53, %58 : vector<16x128xf32>
    %60 = vector.extract_strided_slice %24 {offsets = [0, 0, 0], sizes = [4, 8, 15], strides = [1, 1, 1]} : vector<4x8x16xf32> to vector<4x8x15xf32>
    %61 = tpu.concatenate %25, %60 in 2 : vector<4x8x1xf32>, vector<4x8x15xf32> -> vector<4x8x16xf32>
    %62 = vector.extract_strided_slice %26 {offsets = [0, 24], sizes = [16, 4], strides = [1, 1]} : vector<16x36xf32> to vector<16x4xf32>
    %63 = vector.shape_cast %61 : vector<4x8x16xf32> to vector<4x128xf32>
    %cst_21 = arith.constant dense<0.000000e+00> : vector<16x128xf32>
    %64 = tpu.matmul %62, %63, %cst_21 {dimension_numbers = #tpu.dot_dimension_numbers<[1], [0], [0], [1], [0, 0, 1, 1], [], []>} : vector<16x4xf32>, vector<4x128xf32>, vector<16x128xf32> -> vector<16x128xf32>
    %65 = arith.addf %59, %64 : vector<16x128xf32>
    %66 = vector.extract_strided_slice %26 {offsets = [0, 28], sizes = [16, 4], strides = [1, 1]} : vector<16x36xf32> to vector<16x4xf32>
    %67 = vector.shape_cast %24 : vector<4x8x16xf32> to vector<4x128xf32>
    %cst_22 = arith.constant dense<0.000000e+00> : vector<16x128xf32>
    %68 = tpu.matmul %66, %67, %cst_22 {dimension_numbers = #tpu.dot_dimension_numbers<[1], [0], [0], [1], [0, 0, 1, 1], [], []>} : vector<16x4xf32>, vector<4x128xf32>, vector<16x128xf32> -> vector<16x128xf32>
    %69 = arith.addf %65, %68 : vector<16x128xf32>
    %70 = vector.extract_strided_slice %24 {offsets = [0, 0, 1], sizes = [4, 8, 15], strides = [1, 1, 1]} : vector<4x8x16xf32> to vector<4x8x15xf32>
    %71 = tpu.concatenate %70, %25 in 2 : vector<4x8x15xf32>, vector<4x8x1xf32> -> vector<4x8x16xf32>
    %72 = vector.extract_strided_slice %26 {offsets = [0, 32], sizes = [16, 4], strides = [1, 1]} : vector<16x36xf32> to vector<16x4xf32>
    %73 = vector.shape_cast %71 : vector<4x8x16xf32> to vector<4x128xf32>
    %cst_23 = arith.constant dense<0.000000e+00> : vector<16x128xf32>
    %74 = tpu.matmul %72, %73, %cst_23 {dimension_numbers = #tpu.dot_dimension_numbers<[1], [0], [0], [1], [0, 0, 1, 1], [], []>} : vector<16x4xf32>, vector<4x128xf32>, vector<16x128xf32> -> vector<16x128xf32>
    %75 = arith.addf %69, %74 : vector<16x128xf32>
    %c0_24 = arith.constant 0 : index
    %c0_25 = arith.constant 0 : index
    %76 = vector.load %arg4[%c0_24, %c0_25] : memref<16x1xf32, #tpu.memory_space<vmem>>, vector<16x1xf32>
    %77 = vector.broadcast %76 : vector<16x1xf32> to vector<16x128xf32>
    %78 = arith.addf %75, %77 : vector<16x128xf32>
    %cst_26 = arith.constant 0.000000e+00 : f32
    %79 = vector.broadcast %cst_26 : f32 to vector<16x128xf32>
    %80 = arith.maximumf %78, %79 : vector<16x128xf32>
    %c0_27 = arith.constant 0 : index
    %c0_28 = arith.constant 0 : index
    %81 = vector.load %arg5[%c0_27, %c0_28] : memref<32x32xf32, #tpu.memory_space<vmem>>, vector<32x32xf32>
    %82 = vector.extract_strided_slice %80 {offsets = [0, 0], sizes = [4, 16], strides = [1, 1]} : vector<16x128xf32> to vector<4x16xf32>
    %83 = vector.extract_strided_slice %80 {offsets = [4, 0], sizes = [4, 16], strides = [1, 1]} : vector<16x128xf32> to vector<4x16xf32>
    %84 = tpu.concatenate %82, %83 in 1 : vector<4x16xf32>, vector<4x16xf32> -> vector<4x32xf32>
    %cst_29 = arith.constant dense<0.000000e+00> : vector<4x32xf32>
    %85 = tpu.matmul %84, %81, %cst_29 {dimension_numbers = #tpu.dot_dimension_numbers<[1], [0], [0], [1], [0, 0, 1, 1], [], []>} : vector<4x32xf32>, vector<32x32xf32>, vector<4x32xf32> -> vector<4x32xf32>
    %c0_30 = arith.constant 0 : index
    %c0_31 = arith.constant 0 : index
    %c0_32 = arith.constant 0 : index
    %c0_33 = arith.constant 0 : index
    %c0_34 = arith.constant 0 : index
    %86 = vector.load %arg6[%c0_30, %c0_31, %c0_32, %c0_33, %c0_34] : memref<1x4x8x2x32xf32, #tpu.memory_space<vmem>>, vector<1x4x1x1x32xf32>
    %87 = vector.shape_cast %86 : vector<1x4x1x1x32xf32> to vector<4x32xf32>
    %88 = vector.shape_cast %85 : vector<4x32xf32> to vector<1x4x1x1x32xf32>
    tpu.vector_store %arg6[%c0_30, %c0_31, %c0_32, %c0_33, %c0_34], %88 {strides = array<i32>} : memref<1x4x8x2x32xf32, #tpu.memory_space<vmem>>, vector<1x4x1x1x32xf32>,
    %89 = vector.extract_strided_slice %80 {offsets = [0, 16], sizes = [4, 16], strides = [1, 1]} : vector<16x128xf32> to vector<4x16xf32>
    %90 = vector.extract_strided_slice %80 {offsets = [4, 16], sizes = [4, 16], strides = [1, 1]} : vector<16x128xf32> to vector<4x16xf32>
    %91 = tpu.concatenate %89, %90 in 1 : vector<4x16xf32>, vector<4x16xf32> -> vector<4x32xf32>
    %cst_35 = arith.constant dense<0.000000e+00> : vector<4x32xf32>
    %92 = tpu.matmul %91, %81, %cst_35 {dimension_numbers = #tpu.dot_dimension_numbers<[1], [0], [0], [1], [0, 0, 1, 1], [], []>} : vector<4x32xf32>, vector<32x32xf32>, vector<4x32xf32> -> vector<4x32xf32>
    %c0_36 = arith.constant 0 : index
    %c0_37 = arith.constant 0 : index
    %c1 = arith.constant 1 : index
    %c0_38 = arith.constant 0 : index
    %c0_39 = arith.constant 0 : index
    %93 = vector.load %arg6[%c0_36, %c0_37, %c1, %c0_38, %c0_39] : memref<1x4x8x2x32xf32, #tpu.memory_space<vmem>>, vector<1x4x1x1x32xf32>
    %94 = vector.shape_cast %93 : vector<1x4x1x1x32xf32> to vector<4x32xf32>
    %95 = vector.shape_cast %92 : vector<4x32xf32> to vector<1x4x1x1x32xf32>
    tpu.vector_store %arg6[%c0_36, %c0_37, %c1, %c0_38, %c0_39], %95 {strides = array<i32>} : memref<1x4x8x2x32xf32, #tpu.memory_space<vmem>>, vector<1x4x1x1x32xf32>,
    %96 = vector.extract_strided_slice %80 {offsets = [0, 32], sizes = [4, 16], strides = [1, 1]} : vector<16x128xf32> to vector<4x16xf32>
    %97 = vector.extract_strided_slice %80 {offsets = [4, 32], sizes = [4, 16], strides = [1, 1]} : vector<16x128xf32> to vector<4x16xf32>
    %98 = tpu.concatenate %96, %97 in 1 : vector<4x16xf32>, vector<4x16xf32> -> vector<4x32xf32>
    %cst_40 = arith.constant dense<0.000000e+00> : vector<4x32xf32>
    %99 = tpu.matmul %98, %81, %cst_40 {dimension_numbers = #tpu.dot_dimension_numbers<[1], [0], [0], [1], [0, 0, 1, 1], [], []>} : vector<4x32xf32>, vector<32x32xf32>, vector<4x32xf32> -> vector<4x32xf32>
    %c0_41 = arith.constant 0 : index
    %c0_42 = arith.constant 0 : index
    %c2 = arith.constant 2 : index
    %c0_43 = arith.constant 0 : index
    %c0_44 = arith.constant 0 : index
    %100 = vector.load %arg6[%c0_41, %c0_42, %c2, %c0_43, %c0_44] : memref<1x4x8x2x32xf32, #tpu.memory_space<vmem>>, vector<1x4x1x1x32xf32>
    %101 = vector.shape_cast %100 : vector<1x4x1x1x32xf32> to vector<4x32xf32>
    %102 = vector.shape_cast %99 : vector<4x32xf32> to vector<1x4x1x1x32xf32>
    tpu.vector_store %arg6[%c0_41, %c0_42, %c2, %c0_43, %c0_44], %102 {strides = array<i32>} : memref<1x4x8x2x32xf32, #tpu.memory_space<vmem>>, vector<1x4x1x1x32xf32>,
    %103 = vector.extract_strided_slice %80 {offsets = [0, 48], sizes = [4, 16], strides = [1, 1]} : vector<16x128xf32> to vector<4x16xf32>
    %104 = vector.extract_strided_slice %80 {offsets = [4, 48], sizes = [4, 16], strides = [1, 1]} : vector<16x128xf32> to vector<4x16xf32>
    %105 = tpu.concatenate %103, %104 in 1 : vector<4x16xf32>, vector<4x16xf32> -> vector<4x32xf32>
    %cst_45 = arith.constant dense<0.000000e+00> : vector<4x32xf32>
    %106 = tpu.matmul %105, %81, %cst_45 {dimension_numbers = #tpu.dot_dimension_numbers<[1], [0], [0], [1], [0, 0, 1, 1], [], []>} : vector<4x32xf32>, vector<32x32xf32>, vector<4x32xf32> -> vector<4x32xf32>
    %c0_46 = arith.constant 0 : index
    %c0_47 = arith.constant 0 : index
    %c3 = arith.constant 3 : index
    %c0_48 = arith.constant 0 : index
    %c0_49 = arith.constant 0 : index
    %107 = vector.load %arg6[%c0_46, %c0_47, %c3, %c0_48, %c0_49] : memref<1x4x8x2x32xf32, #tpu.memory_space<vmem>>, vector<1x4x1x1x32xf32>
    %108 = vector.shape_cast %107 : vector<1x4x1x1x32xf32> to vector<4x32xf32>
    %109 = vector.shape_cast %106 : vector<4x32xf32> to vector<1x4x1x1x32xf32>
    tpu.vector_store %arg6[%c0_46, %c0_47, %c3, %c0_48, %c0_49], %109 {strides = array<i32>} : memref<1x4x8x2x32xf32, #tpu.memory_space<vmem>>, vector<1x4x1x1x32xf32>,
    %110 = vector.extract_strided_slice %80 {offsets = [0, 64], sizes = [4, 16], strides = [1, 1]} : vector<16x128xf32> to vector<4x16xf32>
    %111 = vector.extract_strided_slice %80 {offsets = [4, 64], sizes = [4, 16], strides = [1, 1]} : vector<16x128xf32> to vector<4x16xf32>
    %112 = tpu.concatenate %110, %111 in 1 : vector<4x16xf32>, vector<4x16xf32> -> vector<4x32xf32>
    %cst_50 = arith.constant dense<0.000000e+00> : vector<4x32xf32>
    %113 = tpu.matmul %112, %81, %cst_50 {dimension_numbers = #tpu.dot_dimension_numbers<[1], [0], [0], [1], [0, 0, 1, 1], [], []>} : vector<4x32xf32>, vector<32x32xf32>, vector<4x32xf32> -> vector<4x32xf32>
    %c0_51 = arith.constant 0 : index
    %c0_52 = arith.constant 0 : index
    %c4 = arith.constant 4 : index
    %c0_53 = arith.constant 0 : index
    %c0_54 = arith.constant 0 : index
    %114 = vector.load %arg6[%c0_51, %c0_52, %c4, %c0_53, %c0_54] : memref<1x4x8x2x32xf32, #tpu.memory_space<vmem>>, vector<1x4x1x1x32xf32>
    %115 = vector.shape_cast %114 : vector<1x4x1x1x32xf32> to vector<4x32xf32>
    %116 = vector.shape_cast %113 : vector<4x32xf32> to vector<1x4x1x1x32xf32>
    tpu.vector_store %arg6[%c0_51, %c0_52, %c4, %c0_53, %c0_54], %116 {strides = array<i32>} : memref<1x4x8x2x32xf32, #tpu.memory_space<vmem>>, vector<1x4x1x1x32xf32>,
    %117 = vector.extract_strided_slice %80 {offsets = [0, 80], sizes = [4, 16], strides = [1, 1]} : vector<16x128xf32> to vector<4x16xf32>
    %118 = vector.extract_strided_slice %80 {offsets = [4, 80], sizes = [4, 16], strides = [1, 1]} : vector<16x128xf32> to vector<4x16xf32>
    %119 = tpu.concatenate %117, %118 in 1 : vector<4x16xf32>, vector<4x16xf32> -> vector<4x32xf32>
    %cst_55 = arith.constant dense<0.000000e+00> : vector<4x32xf32>
    %120 = tpu.matmul %119, %81, %cst_55 {dimension_numbers = #tpu.dot_dimension_numbers<[1], [0], [0], [1], [0, 0, 1, 1], [], []>} : vector<4x32xf32>, vector<32x32xf32>, vector<4x32xf32> -> vector<4x32xf32>
    %c0_56 = arith.constant 0 : index
    %c0_57 = arith.constant 0 : index
    %c5 = arith.constant 5 : index
    %c0_58 = arith.constant 0 : index
    %c0_59 = arith.constant 0 : index
    %121 = vector.load %arg6[%c0_56, %c0_57, %c5, %c0_58, %c0_59] : memref<1x4x8x2x32xf32, #tpu.memory_space<vmem>>, vector<1x4x1x1x32xf32>
    %122 = vector.shape_cast %121 : vector<1x4x1x1x32xf32> to vector<4x32xf32>
    %123 = vector.shape_cast %120 : vector<4x32xf32> to vector<1x4x1x1x32xf32>
    tpu.vector_store %arg6[%c0_56, %c0_57, %c5, %c0_58, %c0_59], %123 {strides = array<i32>} : memref<1x4x8x2x32xf32, #tpu.memory_space<vmem>>, vector<1x4x1x1x32xf32>,
    %124 = vector.extract_strided_slice %80 {offsets = [0, 96], sizes = [4, 16], strides = [1, 1]} : vector<16x128xf32> to vector<4x16xf32>
    %125 = vector.extract_strided_slice %80 {offsets = [4, 96], sizes = [4, 16], strides = [1, 1]} : vector<16x128xf32> to vector<4x16xf32>
    %126 = tpu.concatenate %124, %125 in 1 : vector<4x16xf32>, vector<4x16xf32> -> vector<4x32xf32>
    %cst_60 = arith.constant dense<0.000000e+00> : vector<4x32xf32>
    %127 = tpu.matmul %126, %81, %cst_60 {dimension_numbers = #tpu.dot_dimension_numbers<[1], [0], [0], [1], [0, 0, 1, 1], [], []>} : vector<4x32xf32>, vector<32x32xf32>, vector<4x32xf32> -> vector<4x32xf32>
    %c0_61 = arith.constant 0 : index
    %c0_62 = arith.constant 0 : index
    %c6 = arith.constant 6 : index
    %c0_63 = arith.constant 0 : index
    %c0_64 = arith.constant 0 : index
    %128 = vector.load %arg6[%c0_61, %c0_62, %c6, %c0_63, %c0_64] : memref<1x4x8x2x32xf32, #tpu.memory_space<vmem>>, vector<1x4x1x1x32xf32>
    %129 = vector.shape_cast %128 : vector<1x4x1x1x32xf32> to vector<4x32xf32>
    %130 = vector.shape_cast %127 : vector<4x32xf32> to vector<1x4x1x1x32xf32>
    tpu.vector_store %arg6[%c0_61, %c0_62, %c6, %c0_63, %c0_64], %130 {strides = array<i32>} : memref<1x4x8x2x32xf32, #tpu.memory_space<vmem>>, vector<1x4x1x1x32xf32>,
    %131 = vector.extract_strided_slice %80 {offsets = [0, 112], sizes = [4, 16], strides = [1, 1]} : vector<16x128xf32> to vector<4x16xf32>
    %132 = vector.extract_strided_slice %80 {offsets = [4, 112], sizes = [4, 16], strides = [1, 1]} : vector<16x128xf32> to vector<4x16xf32>
    %133 = tpu.concatenate %131, %132 in 1 : vector<4x16xf32>, vector<4x16xf32> -> vector<4x32xf32>
    %cst_65 = arith.constant dense<0.000000e+00> : vector<4x32xf32>
    %134 = tpu.matmul %133, %81, %cst_65 {dimension_numbers = #tpu.dot_dimension_numbers<[1], [0], [0], [1], [0, 0, 1, 1], [], []>} : vector<4x32xf32>, vector<32x32xf32>, vector<4x32xf32> -> vector<4x32xf32>
    %c0_66 = arith.constant 0 : index
    %c0_67 = arith.constant 0 : index
    %c7 = arith.constant 7 : index
    %c0_68 = arith.constant 0 : index
    %c0_69 = arith.constant 0 : index
    %135 = vector.load %arg6[%c0_66, %c0_67, %c7, %c0_68, %c0_69] : memref<1x4x8x2x32xf32, #tpu.memory_space<vmem>>, vector<1x4x1x1x32xf32>
    %136 = vector.shape_cast %135 : vector<1x4x1x1x32xf32> to vector<4x32xf32>
    %137 = vector.shape_cast %134 : vector<4x32xf32> to vector<1x4x1x1x32xf32>
    tpu.vector_store %arg6[%c0_66, %c0_67, %c7, %c0_68, %c0_69], %137 {strides = array<i32>} : memref<1x4x8x2x32xf32, #tpu.memory_space<vmem>>, vector<1x4x1x1x32xf32>,
    %138 = vector.extract_strided_slice %80 {offsets = [8, 0], sizes = [4, 16], strides = [1, 1]} : vector<16x128xf32> to vector<4x16xf32>
    %139 = vector.extract_strided_slice %80 {offsets = [12, 0], sizes = [4, 16], strides = [1, 1]} : vector<16x128xf32> to vector<4x16xf32>
    %140 = tpu.concatenate %138, %139 in 1 : vector<4x16xf32>, vector<4x16xf32> -> vector<4x32xf32>
    %cst_70 = arith.constant dense<0.000000e+00> : vector<4x32xf32>
    %141 = tpu.matmul %140, %81, %cst_70 {dimension_numbers = #tpu.dot_dimension_numbers<[1], [0], [0], [1], [0, 0, 1, 1], [], []>} : vector<4x32xf32>, vector<32x32xf32>, vector<4x32xf32> -> vector<4x32xf32>
    %c0_71 = arith.constant 0 : index
    %c0_72 = arith.constant 0 : index
    %c0_73 = arith.constant 0 : index
    %c1_74 = arith.constant 1 : index
    %c0_75 = arith.constant 0 : index
    %142 = vector.load %arg6[%c0_71, %c0_72, %c0_73, %c1_74, %c0_75] : memref<1x4x8x2x32xf32, #tpu.memory_space<vmem>>, vector<1x4x1x1x32xf32>
    %143 = vector.shape_cast %142 : vector<1x4x1x1x32xf32> to vector<4x32xf32>
    %144 = vector.shape_cast %141 : vector<4x32xf32> to vector<1x4x1x1x32xf32>
    tpu.vector_store %arg6[%c0_71, %c0_72, %c0_73, %c1_74, %c0_75], %144 {strides = array<i32>} : memref<1x4x8x2x32xf32, #tpu.memory_space<vmem>>, vector<1x4x1x1x32xf32>,
    %145 = vector.extract_strided_slice %80 {offsets = [8, 16], sizes = [4, 16], strides = [1, 1]} : vector<16x128xf32> to vector<4x16xf32>
    %146 = vector.extract_strided_slice %80 {offsets = [12, 16], sizes = [4, 16], strides = [1, 1]} : vector<16x128xf32> to vector<4x16xf32>
    %147 = tpu.concatenate %145, %146 in 1 : vector<4x16xf32>, vector<4x16xf32> -> vector<4x32xf32>
    %cst_76 = arith.constant dense<0.000000e+00> : vector<4x32xf32>
    %148 = tpu.matmul %147, %81, %cst_76 {dimension_numbers = #tpu.dot_dimension_numbers<[1], [0], [0], [1], [0, 0, 1, 1], [], []>} : vector<4x32xf32>, vector<32x32xf32>, vector<4x32xf32> -> vector<4x32xf32>
    %c0_77 = arith.constant 0 : index
    %c0_78 = arith.constant 0 : index
    %c1_79 = arith.constant 1 : index
    %c1_80 = arith.constant 1 : index
    %c0_81 = arith.constant 0 : index
    %149 = vector.load %arg6[%c0_77, %c0_78, %c1_79, %c1_80, %c0_81] : memref<1x4x8x2x32xf32, #tpu.memory_space<vmem>>, vector<1x4x1x1x32xf32>
    %150 = vector.shape_cast %149 : vector<1x4x1x1x32xf32> to vector<4x32xf32>
    %151 = vector.shape_cast %148 : vector<4x32xf32> to vector<1x4x1x1x32xf32>
    tpu.vector_store %arg6[%c0_77, %c0_78, %c1_79, %c1_80, %c0_81], %151 {strides = array<i32>} : memref<1x4x8x2x32xf32, #tpu.memory_space<vmem>>, vector<1x4x1x1x32xf32>,
    %152 = vector.extract_strided_slice %80 {offsets = [8, 32], sizes = [4, 16], strides = [1, 1]} : vector<16x128xf32> to vector<4x16xf32>
    %153 = vector.extract_strided_slice %80 {offsets = [12, 32], sizes = [4, 16], strides = [1, 1]} : vector<16x128xf32> to vector<4x16xf32>
    %154 = tpu.concatenate %152, %153 in 1 : vector<4x16xf32>, vector<4x16xf32> -> vector<4x32xf32>
    %cst_82 = arith.constant dense<0.000000e+00> : vector<4x32xf32>
    %155 = tpu.matmul %154, %81, %cst_82 {dimension_numbers = #tpu.dot_dimension_numbers<[1], [0], [0], [1], [0, 0, 1, 1], [], []>} : vector<4x32xf32>, vector<32x32xf32>, vector<4x32xf32> -> vector<4x32xf32>
    %c0_83 = arith.constant 0 : index
    %c0_84 = arith.constant 0 : index
    %c2_85 = arith.constant 2 : index
    %c1_86 = arith.constant 1 : index
    %c0_87 = arith.constant 0 : index
    %156 = vector.load %arg6[%c0_83, %c0_84, %c2_85, %c1_86, %c0_87] : memref<1x4x8x2x32xf32, #tpu.memory_space<vmem>>, vector<1x4x1x1x32xf32>
    %157 = vector.shape_cast %156 : vector<1x4x1x1x32xf32> to vector<4x32xf32>
    %158 = vector.shape_cast %155 : vector<4x32xf32> to vector<1x4x1x1x32xf32>
    tpu.vector_store %arg6[%c0_83, %c0_84, %c2_85, %c1_86, %c0_87], %158 {strides = array<i32>} : memref<1x4x8x2x32xf32, #tpu.memory_space<vmem>>, vector<1x4x1x1x32xf32>,
    %159 = vector.extract_strided_slice %80 {offsets = [8, 48], sizes = [4, 16], strides = [1, 1]} : vector<16x128xf32> to vector<4x16xf32>
    %160 = vector.extract_strided_slice %80 {offsets = [12, 48], sizes = [4, 16], strides = [1, 1]} : vector<16x128xf32> to vector<4x16xf32>
    %161 = tpu.concatenate %159, %160 in 1 : vector<4x16xf32>, vector<4x16xf32> -> vector<4x32xf32>
    %cst_88 = arith.constant dense<0.000000e+00> : vector<4x32xf32>
    %162 = tpu.matmul %161, %81, %cst_88 {dimension_numbers = #tpu.dot_dimension_numbers<[1], [0], [0], [1], [0, 0, 1, 1], [], []>} : vector<4x32xf32>, vector<32x32xf32>, vector<4x32xf32> -> vector<4x32xf32>
    %c0_89 = arith.constant 0 : index
    %c0_90 = arith.constant 0 : index
    %c3_91 = arith.constant 3 : index
    %c1_92 = arith.constant 1 : index
    %c0_93 = arith.constant 0 : index
    %163 = vector.load %arg6[%c0_89, %c0_90, %c3_91, %c1_92, %c0_93] : memref<1x4x8x2x32xf32, #tpu.memory_space<vmem>>, vector<1x4x1x1x32xf32>
    %164 = vector.shape_cast %163 : vector<1x4x1x1x32xf32> to vector<4x32xf32>
    %165 = vector.shape_cast %162 : vector<4x32xf32> to vector<1x4x1x1x32xf32>
    tpu.vector_store %arg6[%c0_89, %c0_90, %c3_91, %c1_92, %c0_93], %165 {strides = array<i32>} : memref<1x4x8x2x32xf32, #tpu.memory_space<vmem>>, vector<1x4x1x1x32xf32>,
    %166 = vector.extract_strided_slice %80 {offsets = [8, 64], sizes = [4, 16], strides = [1, 1]} : vector<16x128xf32> to vector<4x16xf32>
    %167 = vector.extract_strided_slice %80 {offsets = [12, 64], sizes = [4, 16], strides = [1, 1]} : vector<16x128xf32> to vector<4x16xf32>
    %168 = tpu.concatenate %166, %167 in 1 : vector<4x16xf32>, vector<4x16xf32> -> vector<4x32xf32>
    %cst_94 = arith.constant dense<0.000000e+00> : vector<4x32xf32>
    %169 = tpu.matmul %168, %81, %cst_94 {dimension_numbers = #tpu.dot_dimension_numbers<[1], [0], [0], [1], [0, 0, 1, 1], [], []>} : vector<4x32xf32>, vector<32x32xf32>, vector<4x32xf32> -> vector<4x32xf32>
    %c0_95 = arith.constant 0 : index
    %c0_96 = arith.constant 0 : index
    %c4_97 = arith.constant 4 : index
    %c1_98 = arith.constant 1 : index
    %c0_99 = arith.constant 0 : index
    %170 = vector.load %arg6[%c0_95, %c0_96, %c4_97, %c1_98, %c0_99] : memref<1x4x8x2x32xf32, #tpu.memory_space<vmem>>, vector<1x4x1x1x32xf32>
    %171 = vector.shape_cast %170 : vector<1x4x1x1x32xf32> to vector<4x32xf32>
    %172 = vector.shape_cast %169 : vector<4x32xf32> to vector<1x4x1x1x32xf32>
    tpu.vector_store %arg6[%c0_95, %c0_96, %c4_97, %c1_98, %c0_99], %172 {strides = array<i32>} : memref<1x4x8x2x32xf32, #tpu.memory_space<vmem>>, vector<1x4x1x1x32xf32>,
    %173 = vector.extract_strided_slice %80 {offsets = [8, 80], sizes = [4, 16], strides = [1, 1]} : vector<16x128xf32> to vector<4x16xf32>
    %174 = vector.extract_strided_slice %80 {offsets = [12, 80], sizes = [4, 16], strides = [1, 1]} : vector<16x128xf32> to vector<4x16xf32>
    %175 = tpu.concatenate %173, %174 in 1 : vector<4x16xf32>, vector<4x16xf32> -> vector<4x32xf32>
    %cst_100 = arith.constant dense<0.000000e+00> : vector<4x32xf32>
    %176 = tpu.matmul %175, %81, %cst_100 {dimension_numbers = #tpu.dot_dimension_numbers<[1], [0], [0], [1], [0, 0, 1, 1], [], []>} : vector<4x32xf32>, vector<32x32xf32>, vector<4x32xf32> -> vector<4x32xf32>
    %c0_101 = arith.constant 0 : index
    %c0_102 = arith.constant 0 : index
    %c5_103 = arith.constant 5 : index
    %c1_104 = arith.constant 1 : index
    %c0_105 = arith.constant 0 : index
    %177 = vector.load %arg6[%c0_101, %c0_102, %c5_103, %c1_104, %c0_105] : memref<1x4x8x2x32xf32, #tpu.memory_space<vmem>>, vector<1x4x1x1x32xf32>
    %178 = vector.shape_cast %177 : vector<1x4x1x1x32xf32> to vector<4x32xf32>
    %179 = vector.shape_cast %176 : vector<4x32xf32> to vector<1x4x1x1x32xf32>
    tpu.vector_store %arg6[%c0_101, %c0_102, %c5_103, %c1_104, %c0_105], %179 {strides = array<i32>} : memref<1x4x8x2x32xf32, #tpu.memory_space<vmem>>, vector<1x4x1x1x32xf32>,
    %180 = vector.extract_strided_slice %80 {offsets = [8, 96], sizes = [4, 16], strides = [1, 1]} : vector<16x128xf32> to vector<4x16xf32>
    %181 = vector.extract_strided_slice %80 {offsets = [12, 96], sizes = [4, 16], strides = [1, 1]} : vector<16x128xf32> to vector<4x16xf32>
    %182 = tpu.concatenate %180, %181 in 1 : vector<4x16xf32>, vector<4x16xf32> -> vector<4x32xf32>
    %cst_106 = arith.constant dense<0.000000e+00> : vector<4x32xf32>
    %183 = tpu.matmul %182, %81, %cst_106 {dimension_numbers = #tpu.dot_dimension_numbers<[1], [0], [0], [1], [0, 0, 1, 1], [], []>} : vector<4x32xf32>, vector<32x32xf32>, vector<4x32xf32> -> vector<4x32xf32>
    %c0_107 = arith.constant 0 : index
    %c0_108 = arith.constant 0 : index
    %c6_109 = arith.constant 6 : index
    %c1_110 = arith.constant 1 : index
    %c0_111 = arith.constant 0 : index
    %184 = vector.load %arg6[%c0_107, %c0_108, %c6_109, %c1_110, %c0_111] : memref<1x4x8x2x32xf32, #tpu.memory_space<vmem>>, vector<1x4x1x1x32xf32>
    %185 = vector.shape_cast %184 : vector<1x4x1x1x32xf32> to vector<4x32xf32>
    %186 = vector.shape_cast %183 : vector<4x32xf32> to vector<1x4x1x1x32xf32>
    tpu.vector_store %arg6[%c0_107, %c0_108, %c6_109, %c1_110, %c0_111], %186 {strides = array<i32>} : memref<1x4x8x2x32xf32, #tpu.memory_space<vmem>>, vector<1x4x1x1x32xf32>,
    %187 = vector.extract_strided_slice %80 {offsets = [8, 112], sizes = [4, 16], strides = [1, 1]} : vector<16x128xf32> to vector<4x16xf32>
    %188 = vector.extract_strided_slice %80 {offsets = [12, 112], sizes = [4, 16], strides = [1, 1]} : vector<16x128xf32> to vector<4x16xf32>
    %189 = tpu.concatenate %187, %188 in 1 : vector<4x16xf32>, vector<4x16xf32> -> vector<4x32xf32>
    %cst_112 = arith.constant dense<0.000000e+00> : vector<4x32xf32>
    %190 = tpu.matmul %189, %81, %cst_112 {dimension_numbers = #tpu.dot_dimension_numbers<[1], [0], [0], [1], [0, 0, 1, 1], [], []>} : vector<4x32xf32>, vector<32x32xf32>, vector<4x32xf32> -> vector<4x32xf32>
    %c0_113 = arith.constant 0 : index
    %c0_114 = arith.constant 0 : index
    %c7_115 = arith.constant 7 : index
    %c1_116 = arith.constant 1 : index
    %c0_117 = arith.constant 0 : index
    %191 = vector.load %arg6[%c0_113, %c0_114, %c7_115, %c1_116, %c0_117] : memref<1x4x8x2x32xf32, #tpu.memory_space<vmem>>, vector<1x4x1x1x32xf32>
    %192 = vector.shape_cast %191 : vector<1x4x1x1x32xf32> to vector<4x32xf32>
    %193 = vector.shape_cast %190 : vector<4x32xf32> to vector<1x4x1x1x32xf32>
    tpu.vector_store %arg6[%c0_113, %c0_114, %c7_115, %c1_116, %c0_117], %193 {strides = array<i32>} : memref<1x4x8x2x32xf32, #tpu.memory_space<vmem>>, vector<1x4x1x1x32xf32>,
    return
  }
  func.func @transform_0(%arg0: i32, %arg1: i32) -> (i32, i32, i32, i32) {
    %c0_i32 = arith.constant 0 : i32
    %c0_i32_0 = arith.constant 0 : i32
    %c0_i32_1 = arith.constant 0 : i32
    %c0_i32_2 = arith.constant 0 : i32
    return %arg0, %c0_i32, %c0_i32_0, %c0_i32_1 : i32, i32, i32, i32
  }
  func.func @transform_1(%arg0: i32, %arg1: i32) -> (i32, i32) {
    %c0_i32 = arith.constant 0 : i32
    %c0_i32_0 = arith.constant 0 : i32
    %c0_i32_1 = arith.constant 0 : i32
    return %c0_i32, %c0_i32_0 : i32, i32
  }
  func.func @transform_2(%arg0: i32, %arg1: i32) -> (i32, i32) {
    %c0_i32 = arith.constant 0 : i32
    %c0_i32_0 = arith.constant 0 : i32
    %c0_i32_1 = arith.constant 0 : i32
    return %c0_i32, %c0_i32_0 : i32, i32
  }
  func.func @transform_3(%arg0: i32, %arg1: i32) -> (i32, i32) {
    %c0_i32 = arith.constant 0 : i32
    %c0_i32_0 = arith.constant 0 : i32
    %c0_i32_1 = arith.constant 0 : i32
    return %c0_i32, %c0_i32_0 : i32, i32
  }
  func.func @transform_4(%arg0: i32, %arg1: i32) -> (i32, i32, i32, i32, i32) {
    %c0_i32 = arith.constant 0 : i32
    %c0_i32_0 = arith.constant 0 : i32
    %c0_i32_1 = arith.constant 0 : i32
    %c0_i32_2 = arith.constant 0 : i32
    return %arg0, %c0_i32, %arg1, %c0_i32_0, %c0_i32_1 : i32, i32, i32, i32, i32
  }
}

</mosaic_0001>

<llo_original>
// kernel: a_call__.1
$region0: #{a_call__.1}
  #allocation0 [shape = 'u32[]', space=smem, size = 0x4, offset = 0x4, fixed_abs, tag = 'smem constant byte address 0x4 - core index']
  #allocation1 [shape = 'u32[144,128]{1,0:T(1,128)}', space=vmem, size = 0x12000, scoped, tag = 'internal scratch']
  #allocation6 [shape = 's32[]', space=sflag, size = 0x4, offset = 0, fixed_abs, tag = 'sflag constant byte address 0x0 - dummy sync flag']
  %s0 = inlined_call_operand.hbm [shape: f32[2,4,16,16], index: 0, kind: input, shape index: {}]
  %s1 = inlined_call_operand.vmem [shape: f32[16,36], index: 1, kind: input, shape index: {}]
  %s2 = inlined_call_operand.vmem [shape: f32[16,1], index: 2, kind: input, shape index: {}]
  %s3 = inlined_call_operand.vmem [shape: f32[32,32], index: 3, kind: input, shape index: {}]
  %s4 = inlined_call_operand.hbm [shape: f32[2,4,16,2,32], index: 4, kind: output, shape index: {}]
  %s5 = sld [smem:[#allocation0]]
  $region53: #{a_call__.1} parent=0
    _
  %s7 = ssub.s32 1, %s5
  %s8 = scalar_select 0, %s7, %s5
  $region1: #{a_call__.1} parent=0
    #allocation2 [shape = 'u8[65536]{0}', space=vmem, size = 0x10000, scoped, tag = 'input window, operand 0']
    #allocation3 [shape = 's32[2]{0}', space=sflag, size = 0x8, scoped, tag = 'scoped memory for a_call__.1']
    #allocation4 [shape = 's32[2]{0}', space=sflag, size = 0x8, scoped, tag = 'scoped memory for a_call__.1']
    #allocation5 [shape = 'u8[65536]{0}', space=vmem, size = 0x10000, scoped, tag = 'output window, operand 0']
    %9 = vsyncpa [#allocation3], 0
    %s10 = scalar_lea.sflag [#allocation3], 1
    %11 = vsyncpa %s10, 0
    %12 = vsyncpa [#allocation4], 0
    %s13 = scalar_lea.sflag [#allocation4], 1
    %14 = vsyncpa %s13, 0
    loop: start=0, step=1, limit=6
    $region2: #{a_call__.1} parent=1 // loop_pre_header
      _
    $region3: #{a_call__.1} parent=1 // loop_header
      %s16 = sphi 0, %s20
      %p17 = scmp.ge.s32.totalorder %s16, 6
      %s23 = sphi 0, %s35
      %s24 = sphi 0, %s31
      %s25 = sphi 0, %s23
      %s26 = sphi 0, %s24
      %s27 = sphi 0, %s25
      %s28 = sphi 0, %s26
      %s38 = sphi 0, %s40
      %s41 = sphi 0, %s38
      %s42 = sphi 0, %s41
      %s58 = sphi 0, %s42
      %s62 = sphi 0, %s62
      %s64 = sphi 0, %s62
      %s65 = sphi 0, %s64
      %s79 = sphi 0, %s65
      %s83 = sphi 0, %s83
      %s85 = sphi 0, %s83
      %s86 = sphi 0, %s85
      %s100 = sphi 0, %s86
      %s104 = sphi 0, %s104
      %s106 = sphi 0, %s104
      %s107 = sphi 0, %s106
      %s121 = sphi 0, %s107
      %s129 = sphi 0, %s131
      %s132 = sphi 0, %s129
      %s133 = sphi 0, %s132
      %s149 = sphi 0, %s133
    $region4: #{a_call__.1} parent=1 // loop_header_branch
      %19 = sbr.rel (%p17) target = $region8
    $region5: #{a_call__.1} parent=1 // loop_body
      %s21 = ssub.s32 %s16, 1
      %s22 = ssub.s32 %s16, 2
      %s29 = sadd.s32 1, %s24
      %p30 = scmp.ge.s32.totalorder %s29, 2
      %s31 = scalar_select %p30, 0, %s29
      %s32 = sadd.s32 1, %s23
      %s33 = scalar_select %p30, %s32, %s23
      %p34 = scmp.ge.s32.totalorder %s33, 2
      %s35 = scalar_select %p34, 0, %s33
      %s36 = ssub.s32 %s23, %s35
      %p37 = scmp.eq.s32.totalorder %s36, 0
      %s39 = sadd.s32 %s38, 1
      %s40 = scalar_select %p37, %s38, %s39
      %p43 = pneg %p37
      %p44 = scmp.eq.s32.totalorder %s16, 3
      %p45 = por %p43, %p44
      %p46 = scmp.ne.s32.totalorder %s38, %s41
      %p47 = scmp.eq.s32.totalorder %s16, 0
      %p48 = por %p46, %p47
      %p49 = scmp.ne.s32.totalorder %s38, %s41
      %p50 = scmp.eq.s32.totalorder %s21, 3
      %p51 = por %p49, %p50
      %p52 = scmp.ne.s32.totalorder %s41, %s42
      %p53 = scmp.eq.s32.totalorder %s21, 0
      %p54 = por %p52, %p53
      %p55 = scmp.ne.s32.totalorder %s41, %s42
      %p56 = scmp.eq.s32.totalorder %s22, 3
      %p57 = por %p55, %p56
      %p59 = scmp.ne.s32.totalorder %s42, %s58
      %p60 = scmp.eq.s32.totalorder %s22, 0
      %p61 = por %p59, %p60
      %s63 = sadd.s32 %s62, 1
      %p66 = scmp.eq.s32.totalorder %s16, 3
      %p67 = scmp.ne.s32.totalorder %s62, %s64
      %p68 = scmp.eq.s32.totalorder %s16, 0
      %p69 = por %p67, %p68
      %p70 = scmp.ne.s32.totalorder %s62, %s64
      %p71 = scmp.eq.s32.totalorder %s21, 3
      %p72 = por %p70, %p71
      %p73 = scmp.ne.s32.totalorder %s64, %s65
      %p74 = scmp.eq.s32.totalorder %s21, 0
      %p75 = por %p73, %p74
      %p76 = scmp.ne.s32.totalorder %s64, %s65
      %p77 = scmp.eq.s32.totalorder %s22, 3
      %p78 = por %p76, %p77
      %p80 = scmp.ne.s32.totalorder %s65, %s79
      %p81 = scmp.eq.s32.totalorder %s22, 0
      %p82 = por %p80, %p81
      %s84 = sadd.s32 %s83, 1
      %p87 = scmp.eq.s32.totalorder %s16, 3
      %p88 = scmp.ne.s32.totalorder %s83, %s85
      %p89 = scmp.eq.s32.totalorder %s16, 0
      %p90 = por %p88, %p89
      %p91 = scmp.ne.s32.totalorder %s83, %s85
      %p92 = scmp.eq.s32.totalorder %s21, 3
      %p93 = por %p91, %p92
      %p94 = scmp.ne.s32.totalorder %s85, %s86
      %p95 = scmp.eq.s32.totalorder %s21, 0
      %p96 = por %p94, %p95
      %p97 = scmp.ne.s32.totalorder %s85, %s86
      %p98 = scmp.eq.s32.totalorder %s22, 3
      %p99 = por %p97, %p98
      %p101 = scmp.ne.s32.totalorder %s86, %s100
      %p102 = scmp.eq.s32.totalorder %s22, 0
      %p103 = por %p101, %p102
      %s105 = sadd.s32 %s104, 1
      %p108 = scmp.eq.s32.totalorder %s16, 3
      %p109 = scmp.ne.s32.totalorder %s104, %s106
      %p110 = scmp.eq.s32.totalorder %s16, 0
      %p111 = por %p109, %p110
      %p112 = scmp.ne.s32.totalorder %s104, %s106
      %p113 = scmp.eq.s32.totalorder %s21, 3
      %p114 = por %p112, %p113
      %p115 = scmp.ne.s32.totalorder %s106, %s107
      %p116 = scmp.eq.s32.totalorder %s21, 0
      %p117 = por %p115, %p116
      %p118 = scmp.ne.s32.totalorder %s106, %s107
      %p119 = scmp.eq.s32.totalorder %s22, 3
      %p120 = por %p118, %p119
      %p122 = scmp.ne.s32.totalorder %s107, %s121
      %p123 = scmp.eq.s32.totalorder %s22, 0
      %p124 = por %p122, %p123
      %s125 = ssub.s32 %s23, %s35
      %s126 = ssub.s32 %s24, %s31
      %s127 = sor.u32 %s125, %s126
      %p128 = scmp.eq.s32.totalorder %s127, 0
      %s130 = sadd.s32 %s129, 1
      %s131 = scalar_select %p128, %s129, %s130
      %p134 = pneg %p128
      %p135 = scmp.eq.s32.totalorder %s16, 3
      %p136 = por %p134, %p135
      %p137 = scmp.ne.s32.totalorder %s129, %s132
      %p138 = scmp.eq.s32.totalorder %s16, 0
      %p139 = por %p137, %p138
      %p140 = scmp.ne.s32.totalorder %s129, %s132
      %p141 = scmp.eq.s32.totalorder %s21, 3
      %p142 = por %p140, %p141
      %p143 = scmp.ne.s32.totalorder %s132, %s133
      %p144 = scmp.eq.s32.totalorder %s21, 0
      %p145 = por %p143, %p144
      %p146 = scmp.ne.s32.totalorder %s132, %s133
      %p147 = scmp.eq.s32.totalorder %s22, 3
      %p148 = por %p146, %p147
      %p150 = scmp.ne.s32.totalorder %s133, %s149
      %p151 = scmp.eq.s32.totalorder %s22, 0
      %p152 = por %p150, %p151
      %p153 = scmp.le.s32.totalorder 1, %s16
      %p154 = scmp.lt.s32.totalorder %s16, 5
      %p155 = pnand %p153, %p154
      %p156 = pneg %p155
      // Predicated region
      $region9: #{a_call__.1} parent=5 // pred_check
        _
      $region10: #{a_call__.1} parent=5 // pred_check_branch
        %158 = sbr.rel (%p155) target = $region12
      $region11: #{a_call__.1} parent=5 // pred_region
        %s159 = ssub.s32 %s16, 1
        // Predicated region
        $region13: #{a_call__.1} parent=11 // pred_check
          %p160 = pneg %p75
        $region14: #{a_call__.1} parent=11 // pred_check_branch
          %162 = sbr.rel (%p160) target = $region16
        $region15: #{a_call__.1} parent=11 // pred_region
          _
        $region16: #{a_call__.1} parent=11 // pred_fallthru
          _
        // Predicated region
        $region17: #{a_call__.1} parent=11 // pred_check
          %p163 = pneg %p96
        $region18: #{a_call__.1} parent=11 // pred_check_branch
          %165 = sbr.rel (%p163) target = $region20
        $region19: #{a_call__.1} parent=11 // pred_region
          _
        $region20: #{a_call__.1} parent=11 // pred_fallthru
          _
        // Predicated region
        $region21: #{a_call__.1} parent=11 // pred_check
          %p166 = pneg %p117
        $region22: #{a_call__.1} parent=11 // pred_check_branch
          %168 = sbr.rel (%p166) target = $region24
        $region23: #{a_call__.1} parent=11 // pred_region
          _
        $region24: #{a_call__.1} parent=11 // pred_fallthru
          _
      $region12: #{a_call__.1} parent=5 // pred_fallthru
        _
      %p169 = scmp.lt.s32.totalorder %s16, 4
      // Predicated region
      $region25: #{a_call__.1} parent=5 // pred_check
        %p170 = pneg %p169
      $region26: #{a_call__.1} parent=5 // pred_check_branch
        %172 = sbr.rel (%p170) target = $region28
      $region27: #{a_call__.1} parent=5 // pred_region
        // Predicated region
        $region29: #{a_call__.1} parent=27 // pred_check
          %p173 = pneg %p48
        $region30: #{a_call__.1} parent=27 // pred_check_branch
          %175 = sbr.rel (%p173) target = $region32
        $region31: #{a_call__.1} parent=27 // pred_region
          %s176 = sand.u32 %s38, 1
          %s177 = scalar_lea.sflag [#allocation3], %s176
          %s178 = sand.u32 %s38, 1
          %s179 = smul.addr %s178, 64
          %s180 = scalar_lea.vmem [#allocation2], %s179
          %s182 = ssub.s32 1024, 1024
          %183 = vsyncadd %s177, %s182
          %s184 = smul.addr %s23, 8
          %s185 = smul.addr %s184, 128
          %s186 = scalar_lea.hbm %s0, %s185
          %s187 = sshll.u32 %s180, 4
          %s188 = int_to_ptr.vmem [resolvable:$true] %s187
          %193 = dma.hbm_to_vmem [thread:$0]  %s186, 1024, %s188, %s177, 128, 128, 8
        $region32: #{a_call__.1} parent=27 // pred_fallthru
          _
      $region28: #{a_call__.1} parent=5 // pred_fallthru
        _
      %p194 = scmp.le.s32.totalorder 1, %s16
      %p195 = scmp.lt.s32.totalorder %s16, 5
      %p196 = pnand %p194, %p195
      %p197 = pneg %p196
      // Predicated region
      $region33: #{a_call__.1} parent=5 // pred_check
        _
      $region34: #{a_call__.1} parent=5 // pred_check_branch
        %199 = sbr.rel (%p196) target = $region36
      $region35: #{a_call__.1} parent=5 // pred_region
        %s200 = ssub.s32 %s16, 1
        %s201 = sand.u32 %s41, 1
        %s202 = scalar_lea.sflag [#allocation3], %s201
        %s203 = sand.u32 %s41, 1
        %s204 = smul.addr %s203, 64
        %s205 = scalar_lea.vmem [#allocation2], %s204
        // Predicated region
        $region37: #{a_call__.1} parent=35 // pred_check
          %p206 = pneg %p54
        $region38: #{a_call__.1} parent=35 // pred_check_branch
          %208 = sbr.rel (%p206) target = $region40
        $region39: #{a_call__.1} parent=35 // pred_region
          %209 = dma.done %s202, 1024
        $region40: #{a_call__.1} parent=35 // pred_fallthru
          _
        %s210 = sand.u32 %s41, 1
        %s211 = scalar_lea.sflag [#allocation3], %s210
        %s212 = sand.u32 %s41, 1
        %s213 = smul.addr %s212, 64
        %s214 = scalar_lea.vmem [#allocation2], %s213
        %p215 = pneg %p54
        %p216 = pneg %p51
        %p217 = pneg %p75
        %p218 = pneg %p72
        %p219 = pneg %p96
        %p220 = pneg %p93
        %p221 = pneg %p117
        %p222 = pneg %p114
        %p223 = pneg %p145
        %p224 = pneg %p142
        %s225 = sand.u32 %s132, 1
        %s226 = scalar_lea.sflag [#allocation4], %s225
        %s227 = sand.u32 %s132, 1
        %s228 = smul.addr %s227, 64
        %s229 = scalar_lea.vmem [#allocation5], %s228
        %s230 = smul.u32 8, %s26
        %s231 = smul.u32 %s26, 8
        %s232 = scalar_lea.vmem %s205, %s231 [#allocation2]
        %v233 = vld [vmem:[%s232] sm:$0xff]
        %v234 = vld [vmem:[%s232 + $0x10] sm:$0xff]
        %v235 = vld [vmem:[%s232 + $0x20] sm:$0xff]
        %v236 = vld [vmem:[%s232 + $0x30] sm:$0xff]
        %s237 = ssub.s32 %s231, 1
        %p238 = scmp.gt.s32.totalorder %s237, 0
        %s239 = scalar_select %p238, %s237, 0
        %s240 = scalar_lea.vmem %s205, %s239 [#allocation2]
        %v241 = vld [vmem:[%s240] sm:$0x1]
        %v242 = vld [vmem:[%s240 + $0x10] sm:$0x1]
        %v243 = vld [vmem:[%s240 + $0x20] sm:$0x1]
        %v244 = vld [vmem:[%s240 + $0x30] sm:$0x1]
        %s245 = sadd.s32 %s231, 8
        %p246 = scmp.lt.s32.totalorder %s245, 15
        %s247 = scalar_select %p246, %s245, 15
        %s248 = scalar_lea.vmem %s205, %s247 [#allocation2]
        %v249 = vld [vmem:[%s248] sm:$0x1]
        %v250 = vld [vmem:[%s248 + $0x10] sm:$0x1]
        %v251 = vld [vmem:[%s248 + $0x20] sm:$0x1]
        %v252 = vld [vmem:[%s248 + $0x30] sm:$0x1]
        %p253 = scmp.gt.s32.totalorder %s231, 0
        %s254 = scalar_select %p253, 1, 0
        %v255 = vstv %s254
        %vm256 = vcmp.eq.s32.totalorder %v255, 1
        %v257 = vsel %vm256, %v241, 0.0
        %v258 = vsel %vm256, %v242, 0.0
        %v259 = vsel %vm256, %v243, 0.0
        %v260 = vsel %vm256, %v244, 0.0
        %p261 = scmp.lt.s32.totalorder %s245, 16
        %s262 = scalar_select %p261, 1, 0
        %v263 = vstv %s262
        %vm264 = vcmp.eq.s32.totalorder %v263, 1
        %v265 = vsel %vm264, %v249, 0.0
        %v266 = vsel %vm264, %v250, 0.0
        %v267 = vsel %vm264, %v251, 0.0
        %v268 = vsel %vm264, %v252, 0.0
        %v273 = vrot.slane %v233, 7
        %v274 = vrot.slane %v234, 7
        %v275 = vrot.slane %v235, 7
        %v276 = vrot.slane %v236, 7
        %vm281 = vcmask 1040384
        %v282 = vsel %vm281, %v257, %v273
        %v283 = vsel %vm281, %v258, %v274
        %v284 = vsel %vm281, %v259, %v275
        %v285 = vsel %vm281, %v260, %v276
        %v286 = vrot.slane %v233, 1
        %v287 = vrot.slane %v234, 1
        %v288 = vrot.slane %v235, 1
        %v289 = vrot.slane %v236, 1
        %v298 = vrot.slane %v265, 1
        %v299 = vrot.slane %v266, 1
        %v300 = vrot.slane %v267, 1
        %v301 = vrot.slane %v268, 1
        %vm306 = vcmask 1046528
        %v307 = vsel %vm306, %v286, %v298
        %v308 = vsel %vm306, %v287, %v299
        %v309 = vsel %vm306, %v288, %v300
        %v310 = vsel %vm306, %v289, %v301
        %v311 = vld [vmem:[%s1] sm:$0xff]
        %v312 = vld [vmem:[%s1 + $0x8] sm:$0xff]
        %317 = vrot.lane.b32.xlu0 %v282, 1
        %v318 = vpop.permute.xlu0 %317
        %319 = vrot.lane.b32.xlu0 %v283, 1
        %v320 = vpop.permute.xlu0 %319
        %321 = vrot.lane.b32.xlu0 %v284, 1
        %v322 = vpop.permute.xlu0 %321
        %323 = vrot.lane.b32.xlu0 %v285, 1
        %v324 = vpop.permute.xlu0 %323
        %vm329 = vcmask 7168
        %v330 = vsel %vm329, 0.0, %v318
        %v331 = vsel %vm329, 0.0, %v320
        %v332 = vsel %vm329, 0.0, %v322
        %v333 = vsel %vm329, 0.0, %v324
        %v334 = vcombine.low %v330, %v332
        %v335 = vcombine.high %v330, %v332
        %v337 = vunpack.c.l.s4 1983009808
        %v338 = vunpack.c.0.s8 %v337
        %v339 = vlaneseq
        %v340 = vshrl.u32 %v339, 7
        %v341 = vsub.s32 %v338, %v340
        %v342 = vrot.slane %v334, %v341
        %v344 = vunpack.c.l.s4 1983009808
        %v345 = vunpack.c.0.s8 %v344
        %v346 = vlaneseq
        %v347 = vshrl.u32 %v346, 7
        %v348 = vsub.s32 %v345, %v347
        %v349 = vrot.slane %v335, %v348
        %v350 = vcombine.low %v331, %v333
        %v351 = vcombine.high %v331, %v333
        %v353 = vunpack.c.l.s4 1983009808
        %v354 = vunpack.c.0.s8 %v353
        %v355 = vlaneseq
        %v356 = vshrl.u32 %v355, 7
        %v357 = vsub.s32 %v354, %v356
        %v358 = vrot.slane %v350, %v357
        %v360 = vunpack.c.l.s4 1983009808
        %v361 = vunpack.c.0.s8 %v360
        %v362 = vlaneseq
        %v363 = vshrl.u32 %v362, 7
        %v364 = vsub.s32 %v361, %v363
        %v365 = vrot.slane %v351, %v364
        %v366 = vcombine.low %v342, %v358
        %v367 = vcombine.high %v342, %v358
        %v369 = vunpack.c.l.s4 1934713408
        %v370 = vunpack.c.0.s8 %v369
        %v371 = vlaneseq
        %v372 = vshrl.u32 %v371, 7
        %v373 = vsub.s32 %v370, %v372
        %v374 = vrot.slane %v366, %v373
        %v376 = vunpack.c.l.s4 1934713408
        %v377 = vunpack.c.0.s8 %v376
        %v378 = vlaneseq
        %v379 = vshrl.u32 %v378, 7
        %v380 = vsub.s32 %v377, %v379
        %v381 = vrot.slane %v367, %v380
        %v382 = vcombine.low %v349, %v365
        %v383 = vcombine.high %v349, %v365
        %v385 = vunpack.c.l.s4 1934713408
        %v386 = vunpack.c.0.s8 %v385
        %v387 = vlaneseq
        %v388 = vshrl.u32 %v387, 7
        %v389 = vsub.s32 %v386, %v388
        %v390 = vrot.slane %v382, %v389
        %v392 = vunpack.c.l.s4 1934713408
        %v393 = vunpack.c.0.s8 %v392
        %v394 = vlaneseq
        %v395 = vshrl.u32 %v394, 7
        %v396 = vsub.s32 %v393, %v395
        %v397 = vrot.slane %v383, %v396
        %v398 = vcombine.high %v374, 0.0
        %v399 = vcombine.high %v381, 0.0
        %v400 = vcombine.high %v390, 0.0
        %v401 = vcombine.high %v397, 0.0
        %403 = vrot.lane.b32.xlu0 %v398, 16
        %v404 = vpop.permute.xlu0 %403
        %407 = vrot.lane.b32.xlu0 %v381, 32
        %v408 = vpop.permute.xlu0 %407
        %411 = vrot.lane.b32.xlu0 %v399, 48
        %v412 = vpop.permute.xlu0 %411
        %415 = vrot.lane.b32.xlu0 %v390, 64
        %v416 = vpop.permute.xlu0 %415
        %419 = vrot.lane.b32.xlu0 %v400, 80
        %v420 = vpop.permute.xlu0 %419
        %423 = vrot.lane.b32.xlu0 %v397, 96
        %v424 = vpop.permute.xlu0 %423
        %427 = vrot.lane.b32.xlu0 %v401, 112
        %v428 = vpop.permute.xlu0 %427
        %vm430 = vcmask 130048
        %v431 = vsel %vm430, %v374, %v404
        %vm432 = vcmask 261120
        %v433 = vsel %vm432, %v431, %v408
        %vm434 = vcmask 392192
        %v435 = vsel %vm434, %v433, %v412
        %vm436 = vcmask 523264
        %v437 = vsel %vm436, %v435, %v416
        %vm438 = vcmask 654336
        %v439 = vsel %vm438, %v437, %v420
        %vm440 = vcmask 785408
        %v441 = vsel %vm440, %v439, %v424
        %vm442 = vcmask 916480
        %v443 = vsel %vm442, %v441, %v428
        %v444 = vcombine.low %v282, %v284
        %v445 = vcombine.high %v282, %v284
        %v447 = vunpack.c.l.s4 1983009808
        %v448 = vunpack.c.0.s8 %v447
        %v449 = vlaneseq
        %v450 = vshrl.u32 %v449, 7
        %v451 = vsub.s32 %v448, %v450
        %v452 = vrot.slane %v444, %v451
        %v454 = vunpack.c.l.s4 1983009808
        %v455 = vunpack.c.0.s8 %v454
        %v456 = vlaneseq
        %v457 = vshrl.u32 %v456, 7
        %v458 = vsub.s32 %v455, %v457
        %v459 = vrot.slane %v445, %v458
        %v460 = vcombine.low %v283, %v285
        %v461 = vcombine.high %v283, %v285
        %v463 = vunpack.c.l.s4 1983009808
        %v464 = vunpack.c.0.s8 %v463
        %v465 = vlaneseq
        %v466 = vshrl.u32 %v465, 7
        %v467 = vsub.s32 %v464, %v466
        %v468 = vrot.slane %v460, %v467
        %v470 = vunpack.c.l.s4 1983009808
        %v471 = vunpack.c.0.s8 %v470
        %v472 = vlaneseq
        %v473 = vshrl.u32 %v472, 7
        %v474 = vsub.s32 %v471, %v473
        %v475 = vrot.slane %v461, %v474
        %v476 = vcombine.low %v452, %v468
        %v477 = vcombine.high %v452, %v468
        %v479 = vunpack.c.l.s4 1934713408
        %v480 = vunpack.c.0.s8 %v479
        %v481 = vlaneseq
        %v482 = vshrl.u32 %v481, 7
        %v483 = vsub.s32 %v480, %v482
        %v484 = vrot.slane %v476, %v483
        %v486 = vunpack.c.l.s4 1934713408
        %v487 = vunpack.c.0.s8 %v486
        %v488 = vlaneseq
        %v489 = vshrl.u32 %v488, 7
        %v490 = vsub.s32 %v487, %v489
        %v491 = vrot.slane %v477, %v490
        %v492 = vcombine.low %v459, %v475
        %v493 = vcombine.high %v459, %v475
        %v495 = vunpack.c.l.s4 1934713408
        %v496 = vunpack.c.0.s8 %v495
        %v497 = vlaneseq
        %v498 = vshrl.u32 %v497, 7
        %v499 = vsub.s32 %v496, %v498
        %v500 = vrot.slane %v492, %v499
        %v502 = vunpack.c.l.s4 1934713408
        %v503 = vunpack.c.0.s8 %v502
        %v504 = vlaneseq
        %v505 = vshrl.u32 %v504, 7
        %v506 = vsub.s32 %v503, %v505
        %v507 = vrot.slane %v493, %v506
        %v508 = vcombine.high %v484, 0.0
        %v509 = vcombine.high %v491, 0.0
        %v510 = vcombine.high %v500, 0.0
        %v511 = vcombine.high %v507, 0.0
        %513 = vrot.lane.b32.xlu0 %v508, 16
        %v514 = vpop.permute.xlu0 %513
        %517 = vrot.lane.b32.xlu0 %v491, 32
        %v518 = vpop.permute.xlu0 %517
        %521 = vrot.lane.b32.xlu0 %v509, 48
        %v522 = vpop.permute.xlu0 %521
        %525 = vrot.lane.b32.xlu0 %v500, 64
        %v526 = vpop.permute.xlu0 %525
        %529 = vrot.lane.b32.xlu0 %v510, 80
        %v530 = vpop.permute.xlu0 %529
        %533 = vrot.lane.b32.xlu0 %v507, 96
        %v534 = vpop.permute.xlu0 %533
        %537 = vrot.lane.b32.xlu0 %v511, 112
        %v538 = vpop.permute.xlu0 %537
        %v540 = vsel %vm430, %v484, %v514
        %v541 = vsel %vm432, %v540, %v518
        %v542 = vsel %vm434, %v541, %v522
        %v543 = vsel %vm436, %v542, %v526
        %v544 = vsel %vm438, %v543, %v530
        %v545 = vsel %vm440, %v544, %v534
        %v546 = vsel %vm442, %v545, %v538
        %549 = vrot.lane.b32.xlu0 %v311, 124
        %v550 = vpop.permute.xlu0 %549
        %551 = vrot.lane.b32.xlu0 %v312, 124
        %v552 = vpop.permute.xlu0 %551
        %vm553 = vcmask 31744
        %v554 = vsel %vm553, %v550, 0
        %v556 = vsel %vm553, %v552, 0
        %vm558 = vcmask 1043456
        %v560 = vsel %vm558, %v546, 0
        %562 = vmatprep.subr.mxu0 0.0
        %563 = vmatpush1.msra.mxu0 %v560
        %564 = vmatprep.subr.mxu0 0.0
        %565 = vmatpush1.msra.mxu0 0.0
        %566 = vmatprep.subr.mxu0 0.0
        %567 = vmatpush1.msra.mxu0 0.0
        %568 = vmatprep.subr.mxu0 0.0
        %569 = vmatpush1.msra.mxu0 0.0
        %570 = vmatprep.subr.mxu0 0.0
        %571 = vmatpush1.msra.mxu0 0.0
        %572 = vmatprep.subr.mxu0 0.0
        %573 = vmatpush1.msra.mxu0 0.0
        %574 = vmatprep.subr.mxu0 0.0
        %575 = vmatpush1.msra.mxu0 0.0
        %576 = vmatprep.subr.mxu0 0.0
        %577 = vmatpush1.msra.mxu0 0.0
        %578 = vmatprep.subr.mxu0 0.0
        %579 = vmatpush1.msra.mxu0 0.0
        %580 = vmatprep.subr.mxu0 0.0
        %581 = vmatpush1.msra.mxu0 0.0
        %582 = vmatprep.subr.mxu0 0.0
        %583 = vmatpush1.msra.mxu0 0.0
        %584 = vmatprep.subr.mxu0 0.0
        %585 = vmatpush1.msra.mxu0 0.0
        %586 = vmatprep.subr.mxu0 0.0
        %587 = vmatpush1.msra.mxu0 0.0
        %588 = vmatprep.subr.mxu0 0.0
        %589 = vmatpush1.msra.mxu0 0.0
        %590 = vmatprep.subr.mxu0 0.0
        %591 = vmatpush1.msra.mxu0 0.0
        %592 = vmatprep.subr.mxu0 0.0
        %593 = vmatpush1.msra.mxu0 0.0
        %594 = vmatprep.subr.mxu0 0.0
        %595 = vmatpush1.msra.mxu0 0.0
        %596 = vmatprep.subr.mxu0 0.0
        %597 = vmatpush1.msra.mxu0 0.0
        %598 = vmatprep.subr.mxu0 0.0
        %599 = vmatpush1.msra.mxu0 0.0
        %600 = vmatprep.subr.mxu0 0.0
        %601 = vmatpush1.msra.mxu0 0.0
        %602 = vmatprep.subr.mxu0 0.0
        %603 = vmatpush1.msra.mxu0 0.0
        %604 = vmatprep.subr.mxu0 0.0
        %605 = vmatpush1.msra.mxu0 0.0
        %606 = vmatprep.subr.mxu0 0.0
        %607 = vmatpush1.msra.mxu0 0.0
        %608 = vmatprep.subr.mxu0 0.0
        %609 = vmatpush1.msra.mxu0 0.0
        %610 = vmatprep.subr.mxu0 0.0
        %611 = vmatpush1.msra.mxu0 0.0
        %612 = vmatprep.subr.mxu0 0.0
        %613 = vmatpush1.msra.mxu0 0.0
        %614 = vmatprep.subr.mxu0 0.0
        %615 = vmatpush1.msra.mxu0 0.0
        %616 = vmatprep.subr.mxu0 0.0
        %617 = vmatpush1.msra.mxu0 0.0
        %618 = vmatprep.subr.mxu0 0.0
        %619 = vmatpush1.msra.mxu0 0.0
        %620 = vmatprep.subr.mxu0 0.0
        %621 = vmatpush1.msra.mxu0 0.0
        %622 = vmatprep.subr.mxu0 0.0
        %623 = vmatpush1.msra.mxu0 0.0
        %624 = vmatprep.subr.mxu0 0.0
        %625 = vmatpush1.msra.mxu0 0.0
        %626 = vmatprep.mubr.f32.mxu0 0.0
        %627 = vmatmul.mubr.f32.gmra.mrb[0].mxu0 %v554
        %v628 = vpop.f32.mrb[0].mxu0
        %v629 = vadd.f32 0.0, %v628
        %v630 = vpop.f32.mrb[0].mxu0
        %631 = vmatprep.mubr.f32.mxu0 0.0
        %632 = vmatmul.mubr.f32.gmra.mrb[0].mxu0 %v556
        %v633 = vpop.f32.mrb[0].mxu0
        %v634 = vadd.f32 0.0, %v633
        %v635 = vpop.f32.mrb[0].mxu0
        %636 = vdwg.mxu0
        %v637 = vsel %vm553, %v311, 0
        %v639 = vsel %vm553, %v312, 0
        %v642 = vsel %vm558, %v443, 0
        %644 = vmatprep.subr.mxu0 0.0
        %645 = vmatpush1.msra.mxu0 %v642
        %646 = vmatprep.subr.mxu0 0.0
        %647 = vmatpush1.msra.mxu0 0.0
        %648 = vmatprep.subr.mxu0 0.0
        %649 = vmatpush1.msra.mxu0 0.0
        %650 = vmatprep.subr.mxu0 0.0
        %651 = vmatpush1.msra.mxu0 0.0
        %652 = vmatprep.subr.mxu0 0.0
        %653 = vmatpush1.msra.mxu0 0.0
        %654 = vmatprep.subr.mxu0 0.0
        %655 = vmatpush1.msra.mxu0 0.0
        %656 = vmatprep.subr.mxu0 0.0
        %657 = vmatpush1.msra.mxu0 0.0
        %658 = vmatprep.subr.mxu0 0.0
        %659 = vmatpush1.msra.mxu0 0.0
        %660 = vmatprep.subr.mxu0 0.0
        %661 = vmatpush1.msra.mxu0 0.0
        %662 = vmatprep.subr.mxu0 0.0
        %663 = vmatpush1.msra.mxu0 0.0
        %664 = vmatprep.subr.mxu0 0.0
        %665 = vmatpush1.msra.mxu0 0.0
        %666 = vmatprep.subr.mxu0 0.0
        %667 = vmatpush1.msra.mxu0 0.0
        %668 = vmatprep.subr.mxu0 0.0
        %669 = vmatpush1.msra.mxu0 0.0
        %670 = vmatprep.subr.mxu0 0.0
        %671 = vmatpush1.msra.mxu0 0.0
        %672 = vmatprep.subr.mxu0 0.0
        %673 = vmatpush1.msra.mxu0 0.0
        %674 = vmatprep.subr.mxu0 0.0
        %675 = vmatpush1.msra.mxu0 0.0
        %676 = vmatprep.subr.mxu0 0.0
        %677 = vmatpush1.msra.mxu0 0.0
        %678 = vmatprep.subr.mxu0 0.0
        %679 = vmatpush1.msra.mxu0 0.0
        %680 = vmatprep.subr.mxu0 0.0
        %681 = vmatpush1.msra.mxu0 0.0
        %682 = vmatprep.subr.mxu0 0.0
        %683 = vmatpush1.msra.mxu0 0.0
        %684 = vmatprep.subr.mxu0 0.0
        %685 = vmatpush1.msra.mxu0 0.0
        %686 = vmatprep.subr.mxu0 0.0
        %687 = vmatpush1.msra.mxu0 0.0
        %688 = vmatprep.subr.mxu0 0.0
        %689 = vmatpush1.msra.mxu0 0.0
        %690 = vmatprep.subr.mxu0 0.0
        %691 = vmatpush1.msra.mxu0 0.0
        %692 = vmatprep.subr.mxu0 0.0
        %693 = vmatpush1.msra.mxu0 0.0
        %694 = vmatprep.subr.mxu0 0.0
        %695 = vmatpush1.msra.mxu0 0.0
        %696 = vmatprep.subr.mxu0 0.0
        %697 = vmatpush1.msra.mxu0 0.0
        %698 = vmatprep.subr.mxu0 0.0
        %699 = vmatpush1.msra.mxu0 0.0
        %700 = vmatprep.subr.mxu0 0.0
        %701 = vmatpush1.msra.mxu0 0.0
        %702 = vmatprep.subr.mxu0 0.0
        %703 = vmatpush1.msra.mxu0 0.0
        %704 = vmatprep.subr.mxu0 0.0
        %705 = vmatpush1.msra.mxu0 0.0
        %706 = vmatprep.subr.mxu0 0.0
        %707 = vmatpush1.msra.mxu0 0.0
        %708 = vmatprep.mubr.f32.mxu0 0.0
        %709 = vmatmul.mubr.f32.gmra.mrb[0].mxu0 %v637
        %v710 = vpop.f32.mrb[0].mxu0
        %v711 = vadd.f32 %v629, %v710
        %v712 = vpop.f32.mrb[0].mxu0
        %713 = vmatprep.mubr.f32.mxu0 0.0
        %714 = vmatmul.mubr.f32.gmra.mrb[0].mxu0 %v639
        %v715 = vpop.f32.mrb[0].mxu0
        %v716 = vadd.f32 %v634, %v715
        %v717 = vpop.f32.mrb[0].mxu0
        %718 = vdwg.mxu0
        %719 = vrot.lane.b32.xlu0 %v282, 127
        %v720 = vpop.permute.xlu0 %719
        %721 = vrot.lane.b32.xlu0 %v283, 127
        %v722 = vpop.permute.xlu0 %721
        %723 = vrot.lane.b32.xlu0 %v284, 127
        %v724 = vpop.permute.xlu0 %723
        %725 = vrot.lane.b32.xlu0 %v285, 127
        %v726 = vpop.permute.xlu0 %725
        %vm731 = vcmask 121856
        %v732 = vsel %vm731, %v720, 0.0
        %v733 = vsel %vm731, %v722, 0.0
        %v734 = vsel %vm731, %v724, 0.0
        %v735 = vsel %vm731, %v726, 0.0
        %v736 = vcombine.low %v732, %v734
        %v737 = vcombine.high %v732, %v734
        %v739 = vunpack.c.l.s4 1983009808
        %v740 = vunpack.c.0.s8 %v739
        %v741 = vlaneseq
        %v742 = vshrl.u32 %v741, 7
        %v743 = vsub.s32 %v740, %v742
        %v744 = vrot.slane %v736, %v743
        %v746 = vunpack.c.l.s4 1983009808
        %v747 = vunpack.c.0.s8 %v746
        %v748 = vlaneseq
        %v749 = vshrl.u32 %v748, 7
        %v750 = vsub.s32 %v747, %v749
        %v751 = vrot.slane %v737, %v750
        %v752 = vcombine.low %v733, %v735
        %v753 = vcombine.high %v733, %v735
        %v755 = vunpack.c.l.s4 1983009808
        %v756 = vunpack.c.0.s8 %v755
        %v757 = vlaneseq
        %v758 = vshrl.u32 %v757, 7
        %v759 = vsub.s32 %v756, %v758
        %v760 = vrot.slane %v752, %v759
        %v762 = vunpack.c.l.s4 1983009808
        %v763 = vunpack.c.0.s8 %v762
        %v764 = vlaneseq
        %v765 = vshrl.u32 %v764, 7
        %v766 = vsub.s32 %v763, %v765
        %v767 = vrot.slane %v753, %v766
        %v768 = vcombine.low %v744, %v760
        %v769 = vcombine.high %v744, %v760
        %v771 = vunpack.c.l.s4 1934713408
        %v772 = vunpack.c.0.s8 %v771
        %v773 = vlaneseq
        %v774 = vshrl.u32 %v773, 7
        %v775 = vsub.s32 %v772, %v774
        %v776 = vrot.slane %v768, %v775
        %v778 = vunpack.c.l.s4 1934713408
        %v779 = vunpack.c.0.s8 %v778
        %v780 = vlaneseq
        %v781 = vshrl.u32 %v780, 7
        %v782 = vsub.s32 %v779, %v781
        %v783 = vrot.slane %v769, %v782
        %v784 = vcombine.low %v751, %v767
        %v785 = vcombine.high %v751, %v767
        %v787 = vunpack.c.l.s4 1934713408
        %v788 = vunpack.c.0.s8 %v787
        %v789 = vlaneseq
        %v790 = vshrl.u32 %v789, 7
        %v791 = vsub.s32 %v788, %v790
        %v792 = vrot.slane %v784, %v791
        %v794 = vunpack.c.l.s4 1934713408
        %v795 = vunpack.c.0.s8 %v794
        %v796 = vlaneseq
        %v797 = vshrl.u32 %v796, 7
        %v798 = vsub.s32 %v795, %v797
        %v799 = vrot.slane %v785, %v798
        %v800 = vcombine.high %v776, 0.0
        %v801 = vcombine.high %v783, 0.0
        %v802 = vcombine.high %v792, 0.0
        %v803 = vcombine.high %v799, 0.0
        %805 = vrot.lane.b32.xlu0 %v800, 16
        %v806 = vpop.permute.xlu0 %805
        %809 = vrot.lane.b32.xlu0 %v783, 32
        %v810 = vpop.permute.xlu0 %809
        %813 = vrot.lane.b32.xlu0 %v801, 48
        %v814 = vpop.permute.xlu0 %813
        %817 = vrot.lane.b32.xlu0 %v792, 64
        %v818 = vpop.permute.xlu0 %817
        %821 = vrot.lane.b32.xlu0 %v802, 80
        %v822 = vpop.permute.xlu0 %821
        %825 = vrot.lane.b32.xlu0 %v799, 96
        %v826 = vpop.permute.xlu0 %825
        %829 = vrot.lane.b32.xlu0 %v803, 112
        %v830 = vpop.permute.xlu0 %829
        %v832 = vsel %vm430, %v776, %v806
        %v833 = vsel %vm432, %v832, %v810
        %v834 = vsel %vm434, %v833, %v814
        %v835 = vsel %vm436, %v834, %v818
        %v836 = vsel %vm438, %v835, %v822
        %v837 = vsel %vm440, %v836, %v826
        %v838 = vsel %vm442, %v837, %v830
        %839 = vrot.lane.b32.xlu0 %v311, 120
        %v840 = vpop.permute.xlu0 %839
        %841 = vrot.lane.b32.xlu0 %v312, 120
        %v842 = vpop.permute.xlu0 %841
        %v843 = vsel %vm553, %v840, 0
        %v845 = vsel %vm553, %v842, 0
        %v848 = vsel %vm558, %v838, 0
        %850 = vmatprep.subr.mxu0 0.0
        %851 = vmatpush1.msra.mxu0 %v848
        %852 = vmatprep.subr.mxu0 0.0
        %853 = vmatpush1.msra.mxu0 0.0
        %854 = vmatprep.subr.mxu0 0.0
        %855 = vmatpush1.msra.mxu0 0.0
        %856 = vmatprep.subr.mxu0 0.0
        %857 = vmatpush1.msra.mxu0 0.0
        %858 = vmatprep.subr.mxu0 0.0
        %859 = vmatpush1.msra.mxu0 0.0
        %860 = vmatprep.subr.mxu0 0.0
        %861 = vmatpush1.msra.mxu0 0.0
        %862 = vmatprep.subr.mxu0 0.0
        %863 = vmatpush1.msra.mxu0 0.0
        %864 = vmatprep.subr.mxu0 0.0
        %865 = vmatpush1.msra.mxu0 0.0
        %866 = vmatprep.subr.mxu0 0.0
        %867 = vmatpush1.msra.mxu0 0.0
        %868 = vmatprep.subr.mxu0 0.0
        %869 = vmatpush1.msra.mxu0 0.0
        %870 = vmatprep.subr.mxu0 0.0
        %871 = vmatpush1.msra.mxu0 0.0
        %872 = vmatprep.subr.mxu0 0.0
        %873 = vmatpush1.msra.mxu0 0.0
        %874 = vmatprep.subr.mxu0 0.0
        %875 = vmatpush1.msra.mxu0 0.0
        %876 = vmatprep.subr.mxu0 0.0
        %877 = vmatpush1.msra.mxu0 0.0
        %878 = vmatprep.subr.mxu0 0.0
        %879 = vmatpush1.msra.mxu0 0.0
        %880 = vmatprep.subr.mxu0 0.0
        %881 = vmatpush1.msra.mxu0 0.0
        %882 = vmatprep.subr.mxu0 0.0
        %883 = vmatpush1.msra.mxu0 0.0
        %884 = vmatprep.subr.mxu0 0.0
        %885 = vmatpush1.msra.mxu0 0.0
        %886 = vmatprep.subr.mxu0 0.0
        %887 = vmatpush1.msra.mxu0 0.0
        %888 = vmatprep.subr.mxu0 0.0
        %889 = vmatpush1.msra.mxu0 0.0
        %890 = vmatprep.subr.mxu0 0.0
        %891 = vmatpush1.msra.mxu0 0.0
        %892 = vmatprep.subr.mxu0 0.0
        %893 = vmatpush1.msra.mxu0 0.0
        %894 = vmatprep.subr.mxu0 0.0
        %895 = vmatpush1.msra.mxu0 0.0
        %896 = vmatprep.subr.mxu0 0.0
        %897 = vmatpush1.msra.mxu0 0.0
        %898 = vmatprep.subr.mxu0 0.0
        %899 = vmatpush1.msra.mxu0 0.0
        %900 = vmatprep.subr.mxu0 0.0
        %901 = vmatpush1.msra.mxu0 0.0
        %902 = vmatprep.subr.mxu0 0.0
        %903 = vmatpush1.msra.mxu0 0.0
        %904 = vmatprep.subr.mxu0 0.0
        %905 = vmatpush1.msra.mxu0 0.0
        %906 = vmatprep.subr.mxu0 0.0
        %907 = vmatpush1.msra.mxu0 0.0
        %908 = vmatprep.subr.mxu0 0.0
        %909 = vmatpush1.msra.mxu0 0.0
        %910 = vmatprep.subr.mxu0 0.0
        %911 = vmatpush1.msra.mxu0 0.0
        %912 = vmatprep.subr.mxu0 0.0
        %913 = vmatpush1.msra.mxu0 0.0
        %914 = vmatprep.mubr.f32.mxu0 0.0
        %915 = vmatmul.mubr.f32.gmra.mrb[0].mxu0 %v843
        %v916 = vpop.f32.mrb[0].mxu0
        %v917 = vadd.f32 0.0, %v916
        %v918 = vpop.f32.mrb[0].mxu0
        %919 = vmatprep.mubr.f32.mxu0 0.0
        %920 = vmatmul.mubr.f32.gmra.mrb[0].mxu0 %v845
        %v921 = vpop.f32.mrb[0].mxu0
        %v922 = vadd.f32 0.0, %v921
        %v923 = vpop.f32.mrb[0].mxu0
        %924 = vdwg.mxu0
        %v925 = vadd.f32 %v711, %v917
        %v926 = vadd.f32 %v716, %v922
        %927 = vrot.lane.b32.xlu0 %v233, 1
        %v928 = vpop.permute.xlu0 %927
        %929 = vrot.lane.b32.xlu0 %v234, 1
        %v930 = vpop.permute.xlu0 %929
        %931 = vrot.lane.b32.xlu0 %v235, 1
        %v932 = vpop.permute.xlu0 %931
        %933 = vrot.lane.b32.xlu0 %v236, 1
        %v934 = vpop.permute.xlu0 %933
        %v939 = vsel %vm329, 0.0, %v928
        %v940 = vsel %vm329, 0.0, %v930
        %v941 = vsel %vm329, 0.0, %v932
        %v942 = vsel %vm329, 0.0, %v934
        %v943 = vcombine.low %v939, %v941
        %v944 = vcombine.high %v939, %v941
        %v946 = vunpack.c.l.s4 1983009808
        %v947 = vunpack.c.0.s8 %v946
        %v948 = vlaneseq
        %v949 = vshrl.u32 %v948, 7
        %v950 = vsub.s32 %v947, %v949
        %v951 = vrot.slane %v943, %v950
        %v953 = vunpack.c.l.s4 1983009808
        %v954 = vunpack.c.0.s8 %v953
        %v955 = vlaneseq
        %v956 = vshrl.u32 %v955, 7
        %v957 = vsub.s32 %v954, %v956
        %v958 = vrot.slane %v944, %v957
        %v959 = vcombine.low %v940, %v942
        %v960 = vcombine.high %v940, %v942
        %v962 = vunpack.c.l.s4 1983009808
        %v963 = vunpack.c.0.s8 %v962
        %v964 = vlaneseq
        %v965 = vshrl.u32 %v964, 7
        %v966 = vsub.s32 %v963, %v965
        %v967 = vrot.slane %v959, %v966
        %v969 = vunpack.c.l.s4 1983009808
        %v970 = vunpack.c.0.s8 %v969
        %v971 = vlaneseq
        %v972 = vshrl.u32 %v971, 7
        %v973 = vsub.s32 %v970, %v972
        %v974 = vrot.slane %v960, %v973
        %v975 = vcombine.low %v951, %v967
        %v976 = vcombine.high %v951, %v967
        %v978 = vunpack.c.l.s4 1934713408
        %v979 = vunpack.c.0.s8 %v978
        %v980 = vlaneseq
        %v981 = vshrl.u32 %v980, 7
        %v982 = vsub.s32 %v979, %v981
        %v983 = vrot.slane %v975, %v982
        %v985 = vunpack.c.l.s4 1934713408
        %v986 = vunpack.c.0.s8 %v985
        %v987 = vlaneseq
        %v988 = vshrl.u32 %v987, 7
        %v989 = vsub.s32 %v986, %v988
        %v990 = vrot.slane %v976, %v989
        %v991 = vcombine.low %v958, %v974
        %v992 = vcombine.high %v958, %v974
        %v994 = vunpack.c.l.s4 1934713408
        %v995 = vunpack.c.0.s8 %v994
        %v996 = vlaneseq
        %v997 = vshrl.u32 %v996, 7
        %v998 = vsub.s32 %v995, %v997
        %v999 = vrot.slane %v991, %v998
        %v1001 = vunpack.c.l.s4 1934713408
        %v1002 = vunpack.c.0.s8 %v1001
        %v1003 = vlaneseq
        %v1004 = vshrl.u32 %v1003, 7
        %v1005 = vsub.s32 %v1002, %v1004
        %v1006 = vrot.slane %v992, %v1005
        %v1007 = vcombine.high %v983, 0.0
        %v1008 = vcombine.high %v990, 0.0
        %v1009 = vcombine.high %v999, 0.0
        %v1010 = vcombine.high %v1006, 0.0
        %1012 = vrot.lane.b32.xlu0 %v1007, 16
        %v1013 = vpop.permute.xlu0 %1012
        %1016 = vrot.lane.b32.xlu0 %v990, 32
        %v1017 = vpop.permute.xlu0 %1016
        %1020 = vrot.lane.b32.xlu0 %v1008, 48
        %v1021 = vpop.permute.xlu0 %1020
        %1024 = vrot.lane.b32.xlu0 %v999, 64
        %v1025 = vpop.permute.xlu0 %1024
        %1028 = vrot.lane.b32.xlu0 %v1009, 80
        %v1029 = vpop.permute.xlu0 %1028
        %1032 = vrot.lane.b32.xlu0 %v1006, 96
        %v1033 = vpop.permute.xlu0 %1032
        %1036 = vrot.lane.b32.xlu0 %v1010, 112
        %v1037 = vpop.permute.xlu0 %1036
        %v1039 = vsel %vm430, %v983, %v1013
        %v1040 = vsel %vm432, %v1039, %v1017
        %v1041 = vsel %vm434, %v1040, %v1021
        %v1042 = vsel %vm436, %v1041, %v1025
        %v1043 = vsel %vm438, %v1042, %v1029
        %v1044 = vsel %vm440, %v1043, %v1033
        %v1045 = vsel %vm442, %v1044, %v1037
        %1046 = vrot.lane.b32.xlu0 %v311, 116
        %v1047 = vpop.permute.xlu0 %1046
        %1048 = vrot.lane.b32.xlu0 %v312, 116
        %v1049 = vpop.permute.xlu0 %1048
        %v1050 = vsel %vm553, %v1047, 0
        %v1052 = vsel %vm553, %v1049, 0
        %v1055 = vsel %vm558, %v1045, 0
        %1057 = vmatprep.subr.mxu0 0.0
        %1058 = vmatpush1.msra.mxu0 %v1055
        %1059 = vmatprep.subr.mxu0 0.0
        %1060 = vmatpush1.msra.mxu0 0.0
        %1061 = vmatprep.subr.mxu0 0.0
        %1062 = vmatpush1.msra.mxu0 0.0
        %1063 = vmatprep.subr.mxu0 0.0
        %1064 = vmatpush1.msra.mxu0 0.0
        %1065 = vmatprep.subr.mxu0 0.0
        %1066 = vmatpush1.msra.mxu0 0.0
        %1067 = vmatprep.subr.mxu0 0.0
        %1068 = vmatpush1.msra.mxu0 0.0
        %1069 = vmatprep.subr.mxu0 0.0
        %1070 = vmatpush1.msra.mxu0 0.0
        %1071 = vmatprep.subr.mxu0 0.0
        %1072 = vmatpush1.msra.mxu0 0.0
        %1073 = vmatprep.subr.mxu0 0.0
        %1074 = vmatpush1.msra.mxu0 0.0
        %1075 = vmatprep.subr.mxu0 0.0
        %1076 = vmatpush1.msra.mxu0 0.0
        %1077 = vmatprep.subr.mxu0 0.0
        %1078 = vmatpush1.msra.mxu0 0.0
        %1079 = vmatprep.subr.mxu0 0.0
        %1080 = vmatpush1.msra.mxu0 0.0
        %1081 = vmatprep.subr.mxu0 0.0
        %1082 = vmatpush1.msra.mxu0 0.0
        %1083 = vmatprep.subr.mxu0 0.0
        %1084 = vmatpush1.msra.mxu0 0.0
        %1085 = vmatprep.subr.mxu0 0.0
        %1086 = vmatpush1.msra.mxu0 0.0
        %1087 = vmatprep.subr.mxu0 0.0
        %1088 = vmatpush1.msra.mxu0 0.0
        %1089 = vmatprep.subr.mxu0 0.0
        %1090 = vmatpush1.msra.mxu0 0.0
        %1091 = vmatprep.subr.mxu0 0.0
        %1092 = vmatpush1.msra.mxu0 0.0
        %1093 = vmatprep.subr.mxu0 0.0
        %1094 = vmatpush1.msra.mxu0 0.0
        %1095 = vmatprep.subr.mxu0 0.0
        %1096 = vmatpush1.msra.mxu0 0.0
        %1097 = vmatprep.subr.mxu0 0.0
        %1098 = vmatpush1.msra.mxu0 0.0
        %1099 = vmatprep.subr.mxu0 0.0
        %1100 = vmatpush1.msra.mxu0 0.0
        %1101 = vmatprep.subr.mxu0 0.0
        %1102 = vmatpush1.msra.mxu0 0.0
        %1103 = vmatprep.subr.mxu0 0.0
        %1104 = vmatpush1.msra.mxu0 0.0
        %1105 = vmatprep.subr.mxu0 0.0
        %1106 = vmatpush1.msra.mxu0 0.0
        %1107 = vmatprep.subr.mxu0 0.0
        %1108 = vmatpush1.msra.mxu0 0.0
        %1109 = vmatprep.subr.mxu0 0.0
        %1110 = vmatpush1.msra.mxu0 0.0
        %1111 = vmatprep.subr.mxu0 0.0
        %1112 = vmatpush1.msra.mxu0 0.0
        %1113 = vmatprep.subr.mxu0 0.0
        %1114 = vmatpush1.msra.mxu0 0.0
        %1115 = vmatprep.subr.mxu0 0.0
        %1116 = vmatpush1.msra.mxu0 0.0
        %1117 = vmatprep.subr.mxu0 0.0
        %1118 = vmatpush1.msra.mxu0 0.0
        %1119 = vmatprep.subr.mxu0 0.0
        %1120 = vmatpush1.msra.mxu0 0.0
        %1121 = vmatprep.mubr.f32.mxu0 0.0
        %1122 = vmatmul.mubr.f32.gmra.mrb[0].mxu0 %v1050
        %v1123 = vpop.f32.mrb[0].mxu0
        %v1124 = vadd.f32 0.0, %v1123
        %v1125 = vpop.f32.mrb[0].mxu0
        %1126 = vmatprep.mubr.f32.mxu0 0.0
        %1127 = vmatmul.mubr.f32.gmra.mrb[0].mxu0 %v1052
        %v1128 = vpop.f32.mrb[0].mxu0
        %v1129 = vadd.f32 0.0, %v1128
        %v1130 = vpop.f32.mrb[0].mxu0
        %1131 = vdwg.mxu0
        %v1132 = vadd.f32 %v925, %v1124
        %v1133 = vadd.f32 %v926, %v1129
        %v1134 = vcombine.low %v233, %v235
        %v1135 = vcombine.high %v233, %v235
        %v1137 = vunpack.c.l.s4 1983009808
        %v1138 = vunpack.c.0.s8 %v1137
        %v1139 = vlaneseq
        %v1140 = vshrl.u32 %v1139, 7
        %v1141 = vsub.s32 %v1138, %v1140
        %v1142 = vrot.slane %v1134, %v1141
        %v1144 = vunpack.c.l.s4 1983009808
        %v1145 = vunpack.c.0.s8 %v1144
        %v1146 = vlaneseq
        %v1147 = vshrl.u32 %v1146, 7
        %v1148 = vsub.s32 %v1145, %v1147
        %v1149 = vrot.slane %v1135, %v1148
        %v1150 = vcombine.low %v234, %v236
        %v1151 = vcombine.high %v234, %v236
        %v1153 = vunpack.c.l.s4 1983009808
        %v1154 = vunpack.c.0.s8 %v1153
        %v1155 = vlaneseq
        %v1156 = vshrl.u32 %v1155, 7
        %v1157 = vsub.s32 %v1154, %v1156
        %v1158 = vrot.slane %v1150, %v1157
        %v1160 = vunpack.c.l.s4 1983009808
        %v1161 = vunpack.c.0.s8 %v1160
        %v1162 = vlaneseq
        %v1163 = vshrl.u32 %v1162, 7
        %v1164 = vsub.s32 %v1161, %v1163
        %v1165 = vrot.slane %v1151, %v1164
        %v1166 = vcombine.low %v1142, %v1158
        %v1167 = vcombine.high %v1142, %v1158
        %v1169 = vunpack.c.l.s4 1934713408
        %v1170 = vunpack.c.0.s8 %v1169
        %v1171 = vlaneseq
        %v1172 = vshrl.u32 %v1171, 7
        %v1173 = vsub.s32 %v1170, %v1172
        %v1174 = vrot.slane %v1166, %v1173
        %v1176 = vunpack.c.l.s4 1934713408
        %v1177 = vunpack.c.0.s8 %v1176
        %v1178 = vlaneseq
        %v1179 = vshrl.u32 %v1178, 7
        %v1180 = vsub.s32 %v1177, %v1179
        %v1181 = vrot.slane %v1167, %v1180
        %v1182 = vcombine.low %v1149, %v1165
        %v1183 = vcombine.high %v1149, %v1165
        %v1185 = vunpack.c.l.s4 1934713408
        %v1186 = vunpack.c.0.s8 %v1185
        %v1187 = vlaneseq
        %v1188 = vshrl.u32 %v1187, 7
        %v1189 = vsub.s32 %v1186, %v1188
        %v1190 = vrot.slane %v1182, %v1189
        %v1192 = vunpack.c.l.s4 1934713408
        %v1193 = vunpack.c.0.s8 %v1192
        %v1194 = vlaneseq
        %v1195 = vshrl.u32 %v1194, 7
        %v1196 = vsub.s32 %v1193, %v1195
        %v1197 = vrot.slane %v1183, %v1196
        %v1198 = vcombine.high %v1174, 0.0
        %v1199 = vcombine.high %v1181, 0.0
        %v1200 = vcombine.high %v1190, 0.0
        %v1201 = vcombine.high %v1197, 0.0
        %1203 = vrot.lane.b32.xlu0 %v1198, 16
        %v1204 = vpop.permute.xlu0 %1203
        %1207 = vrot.lane.b32.xlu0 %v1181, 32
        %v1208 = vpop.permute.xlu0 %1207
        %1211 = vrot.lane.b32.xlu0 %v1199, 48
        %v1212 = vpop.permute.xlu0 %1211
        %1215 = vrot.lane.b32.xlu0 %v1190, 64
        %v1216 = vpop.permute.xlu0 %1215
        %1219 = vrot.lane.b32.xlu0 %v1200, 80
        %v1220 = vpop.permute.xlu0 %1219
        %1223 = vrot.lane.b32.xlu0 %v1197, 96
        %v1224 = vpop.permute.xlu0 %1223
        %1227 = vrot.lane.b32.xlu0 %v1201, 112
        %v1228 = vpop.permute.xlu0 %1227
        %v1230 = vsel %vm430, %v1174, %v1204
        %v1231 = vsel %vm432, %v1230, %v1208
        %v1232 = vsel %vm434, %v1231, %v1212
        %v1233 = vsel %vm436, %v1232, %v1216
        %v1234 = vsel %vm438, %v1233, %v1220
        %v1235 = vsel %vm440, %v1234, %v1224
        %v1236 = vsel %vm442, %v1235, %v1228
        %1237 = vrot.lane.b32.xlu0 %v311, 112
        %v1238 = vpop.permute.xlu0 %1237
        %1239 = vrot.lane.b32.xlu0 %v312, 112
        %v1240 = vpop.permute.xlu0 %1239
        %v1241 = vsel %vm553, %v1238, 0
        %v1243 = vsel %vm553, %v1240, 0
        %v1246 = vsel %vm558, %v1236, 0
        %1248 = vmatprep.subr.mxu0 0.0
        %1249 = vmatpush1.msra.mxu0 %v1246
        %1250 = vmatprep.subr.mxu0 0.0
        %1251 = vmatpush1.msra.mxu0 0.0
        %1252 = vmatprep.subr.mxu0 0.0
        %1253 = vmatpush1.msra.mxu0 0.0
        %1254 = vmatprep.subr.mxu0 0.0
        %1255 = vmatpush1.msra.mxu0 0.0
        %1256 = vmatprep.subr.mxu0 0.0
        %1257 = vmatpush1.msra.mxu0 0.0
        %1258 = vmatprep.subr.mxu0 0.0
        %1259 = vmatpush1.msra.mxu0 0.0
        %1260 = vmatprep.subr.mxu0 0.0
        %1261 = vmatpush1.msra.mxu0 0.0
        %1262 = vmatprep.subr.mxu0 0.0
        %1263 = vmatpush1.msra.mxu0 0.0
        %1264 = vmatprep.subr.mxu0 0.0
        %1265 = vmatpush1.msra.mxu0 0.0
        %1266 = vmatprep.subr.mxu0 0.0
        %1267 = vmatpush1.msra.mxu0 0.0
        %1268 = vmatprep.subr.mxu0 0.0
        %1269 = vmatpush1.msra.mxu0 0.0
        %1270 = vmatprep.subr.mxu0 0.0
        %1271 = vmatpush1.msra.mxu0 0.0
        %1272 = vmatprep.subr.mxu0 0.0
        %1273 = vmatpush1.msra.mxu0 0.0
        %1274 = vmatprep.subr.mxu0 0.0
        %1275 = vmatpush1.msra.mxu0 0.0
        %1276 = vmatprep.subr.mxu0 0.0
        %1277 = vmatpush1.msra.mxu0 0.0
        %1278 = vmatprep.subr.mxu0 0.0
        %1279 = vmatpush1.msra.mxu0 0.0
        %1280 = vmatprep.subr.mxu0 0.0
        %1281 = vmatpush1.msra.mxu0 0.0
        %1282 = vmatprep.subr.mxu0 0.0
        %1283 = vmatpush1.msra.mxu0 0.0
        %1284 = vmatprep.subr.mxu0 0.0
        %1285 = vmatpush1.msra.mxu0 0.0
        %1286 = vmatprep.subr.mxu0 0.0
        %1287 = vmatpush1.msra.mxu0 0.0
        %1288 = vmatprep.subr.mxu0 0.0
        %1289 = vmatpush1.msra.mxu0 0.0
        %1290 = vmatprep.subr.mxu0 0.0
        %1291 = vmatpush1.msra.mxu0 0.0
        %1292 = vmatprep.subr.mxu0 0.0
        %1293 = vmatpush1.msra.mxu0 0.0
        %1294 = vmatprep.subr.mxu0 0.0
        %1295 = vmatpush1.msra.mxu0 0.0
        %1296 = vmatprep.subr.mxu0 0.0
        %1297 = vmatpush1.msra.mxu0 0.0
        %1298 = vmatprep.subr.mxu0 0.0
        %1299 = vmatpush1.msra.mxu0 0.0
        %1300 = vmatprep.subr.mxu0 0.0
        %1301 = vmatpush1.msra.mxu0 0.0
        %1302 = vmatprep.subr.mxu0 0.0
        %1303 = vmatpush1.msra.mxu0 0.0
        %1304 = vmatprep.subr.mxu0 0.0
        %1305 = vmatpush1.msra.mxu0 0.0
        %1306 = vmatprep.subr.mxu0 0.0
        %1307 = vmatpush1.msra.mxu0 0.0
        %1308 = vmatprep.subr.mxu0 0.0
        %1309 = vmatpush1.msra.mxu0 0.0
        %1310 = vmatprep.subr.mxu0 0.0
        %1311 = vmatpush1.msra.mxu0 0.0
        %1312 = vmatprep.mubr.f32.mxu0 0.0
        %1313 = vmatmul.mubr.f32.gmra.mrb[0].mxu0 %v1241
        %v1314 = vpop.f32.mrb[0].mxu0
        %v1315 = vadd.f32 0.0, %v1314
        %v1316 = vpop.f32.mrb[0].mxu0
        %1317 = vmatprep.mubr.f32.mxu0 0.0
        %1318 = vmatmul.mubr.f32.gmra.mrb[0].mxu0 %v1243
        %v1319 = vpop.f32.mrb[0].mxu0
        %v1320 = vadd.f32 0.0, %v1319
        %v1321 = vpop.f32.mrb[0].mxu0
        %1322 = vdwg.mxu0
        %v1323 = vadd.f32 %v1132, %v1315
        %v1324 = vadd.f32 %v1133, %v1320
        %1325 = vrot.lane.b32.xlu0 %v233, 127
        %v1326 = vpop.permute.xlu0 %1325
        %1327 = vrot.lane.b32.xlu0 %v234, 127
        %v1328 = vpop.permute.xlu0 %1327
        %1329 = vrot.lane.b32.xlu0 %v235, 127
        %v1330 = vpop.permute.xlu0 %1329
        %1331 = vrot.lane.b32.xlu0 %v236, 127
        %v1332 = vpop.permute.xlu0 %1331
        %v1337 = vsel %vm731, %v1326, 0.0
        %v1338 = vsel %vm731, %v1328, 0.0
        %v1339 = vsel %vm731, %v1330, 0.0
        %v1340 = vsel %vm731, %v1332, 0.0
        %v1341 = vcombine.low %v1337, %v1339
        %v1342 = vcombine.high %v1337, %v1339
        %v1344 = vunpack.c.l.s4 1983009808
        %v1345 = vunpack.c.0.s8 %v1344
        %v1346 = vlaneseq
        %v1347 = vshrl.u32 %v1346, 7
        %v1348 = vsub.s32 %v1345, %v1347
        %v1349 = vrot.slane %v1341, %v1348
        %v1351 = vunpack.c.l.s4 1983009808
        %v1352 = vunpack.c.0.s8 %v1351
        %v1353 = vlaneseq
        %v1354 = vshrl.u32 %v1353, 7
        %v1355 = vsub.s32 %v1352, %v1354
        %v1356 = vrot.slane %v1342, %v1355
        %v1357 = vcombine.low %v1338, %v1340
        %v1358 = vcombine.high %v1338, %v1340
        %v1360 = vunpack.c.l.s4 1983009808
        %v1361 = vunpack.c.0.s8 %v1360
        %v1362 = vlaneseq
        %v1363 = vshrl.u32 %v1362, 7
        %v1364 = vsub.s32 %v1361, %v1363
        %v1365 = vrot.slane %v1357, %v1364
        %v1367 = vunpack.c.l.s4 1983009808
        %v1368 = vunpack.c.0.s8 %v1367
        %v1369 = vlaneseq
        %v1370 = vshrl.u32 %v1369, 7
        %v1371 = vsub.s32 %v1368, %v1370
        %v1372 = vrot.slane %v1358, %v1371
        %v1373 = vcombine.low %v1349, %v1365
        %v1374 = vcombine.high %v1349, %v1365
        %v1376 = vunpack.c.l.s4 1934713408
        %v1377 = vunpack.c.0.s8 %v1376
        %v1378 = vlaneseq
        %v1379 = vshrl.u32 %v1378, 7
        %v1380 = vsub.s32 %v1377, %v1379
        %v1381 = vrot.slane %v1373, %v1380
        %v1383 = vunpack.c.l.s4 1934713408
        %v1384 = vunpack.c.0.s8 %v1383
        %v1385 = vlaneseq
        %v1386 = vshrl.u32 %v1385, 7
        %v1387 = vsub.s32 %v1384, %v1386
        %v1388 = vrot.slane %v1374, %v1387
        %v1389 = vcombine.low %v1356, %v1372
        %v1390 = vcombine.high %v1356, %v1372
        %v1392 = vunpack.c.l.s4 1934713408
        %v1393 = vunpack.c.0.s8 %v1392
        %v1394 = vlaneseq
        %v1395 = vshrl.u32 %v1394, 7
        %v1396 = vsub.s32 %v1393, %v1395
        %v1397 = vrot.slane %v1389, %v1396
        %v1399 = vunpack.c.l.s4 1934713408
        %v1400 = vunpack.c.0.s8 %v1399
        %v1401 = vlaneseq
        %v1402 = vshrl.u32 %v1401, 7
        %v1403 = vsub.s32 %v1400, %v1402
        %v1404 = vrot.slane %v1390, %v1403
        %v1405 = vcombine.high %v1381, 0.0
        %v1406 = vcombine.high %v1388, 0.0
        %v1407 = vcombine.high %v1397, 0.0
        %v1408 = vcombine.high %v1404, 0.0
        %1410 = vrot.lane.b32.xlu0 %v1405, 16
        %v1411 = vpop.permute.xlu0 %1410
        %1414 = vrot.lane.b32.xlu0 %v1388, 32
        %v1415 = vpop.permute.xlu0 %1414
        %1418 = vrot.lane.b32.xlu0 %v1406, 48
        %v1419 = vpop.permute.xlu0 %1418
        %1422 = vrot.lane.b32.xlu0 %v1397, 64
        %v1423 = vpop.permute.xlu0 %1422
        %1426 = vrot.lane.b32.xlu0 %v1407, 80
        %v1427 = vpop.permute.xlu0 %1426
        %1430 = vrot.lane.b32.xlu0 %v1404, 96
        %v1431 = vpop.permute.xlu0 %1430
        %1434 = vrot.lane.b32.xlu0 %v1408, 112
        %v1435 = vpop.permute.xlu0 %1434
        %v1437 = vsel %vm430, %v1381, %v1411
        %v1438 = vsel %vm432, %v1437, %v1415
        %v1439 = vsel %vm434, %v1438, %v1419
        %v1440 = vsel %vm436, %v1439, %v1423
        %v1441 = vsel %vm438, %v1440, %v1427
        %v1442 = vsel %vm440, %v1441, %v1431
        %v1443 = vsel %vm442, %v1442, %v1435
        %1444 = vrot.lane.b32.xlu0 %v311, 108
        %v1445 = vpop.permute.xlu0 %1444
        %1446 = vrot.lane.b32.xlu0 %v312, 108
        %v1447 = vpop.permute.xlu0 %1446
        %v1448 = vsel %vm553, %v1445, 0
        %v1450 = vsel %vm553, %v1447, 0
        %v1453 = vsel %vm558, %v1443, 0
        %1455 = vmatprep.subr.mxu0 0.0
        %1456 = vmatpush1.msra.mxu0 %v1453
        %1457 = vmatprep.subr.mxu0 0.0
        %1458 = vmatpush1.msra.mxu0 0.0
        %1459 = vmatprep.subr.mxu0 0.0
        %1460 = vmatpush1.msra.mxu0 0.0
        %1461 = vmatprep.subr.mxu0 0.0
        %1462 = vmatpush1.msra.mxu0 0.0
        %1463 = vmatprep.subr.mxu0 0.0
        %1464 = vmatpush1.msra.mxu0 0.0
        %1465 = vmatprep.subr.mxu0 0.0
        %1466 = vmatpush1.msra.mxu0 0.0
        %1467 = vmatprep.subr.mxu0 0.0
        %1468 = vmatpush1.msra.mxu0 0.0
        %1469 = vmatprep.subr.mxu0 0.0
        %1470 = vmatpush1.msra.mxu0 0.0
        %1471 = vmatprep.subr.mxu0 0.0
        %1472 = vmatpush1.msra.mxu0 0.0
        %1473 = vmatprep.subr.mxu0 0.0
        %1474 = vmatpush1.msra.mxu0 0.0
        %1475 = vmatprep.subr.mxu0 0.0
        %1476 = vmatpush1.msra.mxu0 0.0
        %1477 = vmatprep.subr.mxu0 0.0
        %1478 = vmatpush1.msra.mxu0 0.0
        %1479 = vmatprep.subr.mxu0 0.0
        %1480 = vmatpush1.msra.mxu0 0.0
        %1481 = vmatprep.subr.mxu0 0.0
        %1482 = vmatpush1.msra.mxu0 0.0
        %1483 = vmatprep.subr.mxu0 0.0
        %1484 = vmatpush1.msra.mxu0 0.0
        %1485 = vmatprep.subr.mxu0 0.0
        %1486 = vmatpush1.msra.mxu0 0.0
        %1487 = vmatprep.subr.mxu0 0.0
        %1488 = vmatpush1.msra.mxu0 0.0
        %1489 = vmatprep.subr.mxu0 0.0
        %1490 = vmatpush1.msra.mxu0 0.0
        %1491 = vmatprep.subr.mxu0 0.0
        %1492 = vmatpush1.msra.mxu0 0.0
        %1493 = vmatprep.subr.mxu0 0.0
        %1494 = vmatpush1.msra.mxu0 0.0
        %1495 = vmatprep.subr.mxu0 0.0
        %1496 = vmatpush1.msra.mxu0 0.0
        %1497 = vmatprep.subr.mxu0 0.0
        %1498 = vmatpush1.msra.mxu0 0.0
        %1499 = vmatprep.subr.mxu0 0.0
        %1500 = vmatpush1.msra.mxu0 0.0
        %1501 = vmatprep.subr.mxu0 0.0
        %1502 = vmatpush1.msra.mxu0 0.0
        %1503 = vmatprep.subr.mxu0 0.0
        %1504 = vmatpush1.msra.mxu0 0.0
        %1505 = vmatprep.subr.mxu0 0.0
        %1506 = vmatpush1.msra.mxu0 0.0
        %1507 = vmatprep.subr.mxu0 0.0
        %1508 = vmatpush1.msra.mxu0 0.0
        %1509 = vmatprep.subr.mxu0 0.0
        %1510 = vmatpush1.msra.mxu0 0.0
        %1511 = vmatprep.subr.mxu0 0.0
        %1512 = vmatpush1.msra.mxu0 0.0
        %1513 = vmatprep.subr.mxu0 0.0
        %1514 = vmatpush1.msra.mxu0 0.0
        %1515 = vmatprep.subr.mxu0 0.0
        %1516 = vmatpush1.msra.mxu0 0.0
        %1517 = vmatprep.subr.mxu0 0.0
        %1518 = vmatpush1.msra.mxu0 0.0
        %1519 = vmatprep.mubr.f32.mxu0 0.0
        %1520 = vmatmul.mubr.f32.gmra.mrb[0].mxu0 %v1448
        %v1521 = vpop.f32.mrb[0].mxu0
        %v1522 = vadd.f32 0.0, %v1521
        %v1523 = vpop.f32.mrb[0].mxu0
        %1524 = vmatprep.mubr.f32.mxu0 0.0
        %1525 = vmatmul.mubr.f32.gmra.mrb[0].mxu0 %v1450
        %v1526 = vpop.f32.mrb[0].mxu0
        %v1527 = vadd.f32 0.0, %v1526
        %v1528 = vpop.f32.mrb[0].mxu0
        %1529 = vdwg.mxu0
        %v1530 = vadd.f32 %v1323, %v1522
        %v1531 = vadd.f32 %v1324, %v1527
        %1536 = vrot.lane.b32.xlu0 %v307, 1
        %v1537 = vpop.permute.xlu0 %1536
        %1538 = vrot.lane.b32.xlu0 %v308, 1
        %v1539 = vpop.permute.xlu0 %1538
        %1540 = vrot.lane.b32.xlu0 %v309, 1
        %v1541 = vpop.permute.xlu0 %1540
        %1542 = vrot.lane.b32.xlu0 %v310, 1
        %v1543 = vpop.permute.xlu0 %1542
        %v1548 = vsel %vm329, 0.0, %v1537
        %v1549 = vsel %vm329, 0.0, %v1539
        %v1550 = vsel %vm329, 0.0, %v1541
        %v1551 = vsel %vm329, 0.0, %v1543
        %v1552 = vcombine.low %v1548, %v1550
        %v1553 = vcombine.high %v1548, %v1550
        %v1555 = vunpack.c.l.s4 1983009808
        %v1556 = vunpack.c.0.s8 %v1555
        %v1557 = vlaneseq
        %v1558 = vshrl.u32 %v1557, 7
        %v1559 = vsub.s32 %v1556, %v1558
        %v1560 = vrot.slane %v1552, %v1559
        %v1562 = vunpack.c.l.s4 1983009808
        %v1563 = vunpack.c.0.s8 %v1562
        %v1564 = vlaneseq
        %v1565 = vshrl.u32 %v1564, 7
        %v1566 = vsub.s32 %v1563, %v1565
        %v1567 = vrot.slane %v1553, %v1566
        %v1568 = vcombine.low %v1549, %v1551
        %v1569 = vcombine.high %v1549, %v1551
        %v1571 = vunpack.c.l.s4 1983009808
        %v1572 = vunpack.c.0.s8 %v1571
        %v1573 = vlaneseq
        %v1574 = vshrl.u32 %v1573, 7
        %v1575 = vsub.s32 %v1572, %v1574
        %v1576 = vrot.slane %v1568, %v1575
        %v1578 = vunpack.c.l.s4 1983009808
        %v1579 = vunpack.c.0.s8 %v1578
        %v1580 = vlaneseq
        %v1581 = vshrl.u32 %v1580, 7
        %v1582 = vsub.s32 %v1579, %v1581
        %v1583 = vrot.slane %v1569, %v1582
        %v1584 = vcombine.low %v1560, %v1576
        %v1585 = vcombine.high %v1560, %v1576
        %v1587 = vunpack.c.l.s4 1934713408
        %v1588 = vunpack.c.0.s8 %v1587
        %v1589 = vlaneseq
        %v1590 = vshrl.u32 %v1589, 7
        %v1591 = vsub.s32 %v1588, %v1590
        %v1592 = vrot.slane %v1584, %v1591
        %v1594 = vunpack.c.l.s4 1934713408
        %v1595 = vunpack.c.0.s8 %v1594
        %v1596 = vlaneseq
        %v1597 = vshrl.u32 %v1596, 7
        %v1598 = vsub.s32 %v1595, %v1597
        %v1599 = vrot.slane %v1585, %v1598
        %v1600 = vcombine.low %v1567, %v1583
        %v1601 = vcombine.high %v1567, %v1583
        %v1603 = vunpack.c.l.s4 1934713408
        %v1604 = vunpack.c.0.s8 %v1603
        %v1605 = vlaneseq
        %v1606 = vshrl.u32 %v1605, 7
        %v1607 = vsub.s32 %v1604, %v1606
        %v1608 = vrot.slane %v1600, %v1607
        %v1610 = vunpack.c.l.s4 1934713408
        %v1611 = vunpack.c.0.s8 %v1610
        %v1612 = vlaneseq
        %v1613 = vshrl.u32 %v1612, 7
        %v1614 = vsub.s32 %v1611, %v1613
        %v1615 = vrot.slane %v1601, %v1614
        %v1616 = vcombine.high %v1592, 0.0
        %v1617 = vcombine.high %v1599, 0.0
        %v1618 = vcombine.high %v1608, 0.0
        %v1619 = vcombine.high %v1615, 0.0
        %1621 = vrot.lane.b32.xlu0 %v1616, 16
        %v1622 = vpop.permute.xlu0 %1621
        %1625 = vrot.lane.b32.xlu0 %v1599, 32
        %v1626 = vpop.permute.xlu0 %1625
        %1629 = vrot.lane.b32.xlu0 %v1617, 48
        %v1630 = vpop.permute.xlu0 %1629
        %1633 = vrot.lane.b32.xlu0 %v1608, 64
        %v1634 = vpop.permute.xlu0 %1633
        %1637 = vrot.lane.b32.xlu0 %v1618, 80
        %v1638 = vpop.permute.xlu0 %1637
        %1641 = vrot.lane.b32.xlu0 %v1615, 96
        %v1642 = vpop.permute.xlu0 %1641
        %1645 = vrot.lane.b32.xlu0 %v1619, 112
        %v1646 = vpop.permute.xlu0 %1645
        %v1648 = vsel %vm430, %v1592, %v1622
        %v1649 = vsel %vm432, %v1648, %v1626
        %v1650 = vsel %vm434, %v1649, %v1630
        %v1651 = vsel %vm436, %v1650, %v1634
        %v1652 = vsel %vm438, %v1651, %v1638
        %v1653 = vsel %vm440, %v1652, %v1642
        %v1654 = vsel %vm442, %v1653, %v1646
        %1655 = vrot.lane.b32.xlu0 %v311, 104
        %v1656 = vpop.permute.xlu0 %1655
        %1657 = vrot.lane.b32.xlu0 %v312, 104
        %v1658 = vpop.permute.xlu0 %1657
        %v1659 = vsel %vm553, %v1656, 0
        %v1661 = vsel %vm553, %v1658, 0
        %v1664 = vsel %vm558, %v1654, 0
        %1666 = vmatprep.subr.mxu0 0.0
        %1667 = vmatpush1.msra.mxu0 %v1664
        %1668 = vmatprep.subr.mxu0 0.0
        %1669 = vmatpush1.msra.mxu0 0.0
        %1670 = vmatprep.subr.mxu0 0.0
        %1671 = vmatpush1.msra.mxu0 0.0
        %1672 = vmatprep.subr.mxu0 0.0
        %1673 = vmatpush1.msra.mxu0 0.0
        %1674 = vmatprep.subr.mxu0 0.0
        %1675 = vmatpush1.msra.mxu0 0.0
        %1676 = vmatprep.subr.mxu0 0.0
        %1677 = vmatpush1.msra.mxu0 0.0
        %1678 = vmatprep.subr.mxu0 0.0
        %1679 = vmatpush1.msra.mxu0 0.0
        %1680 = vmatprep.subr.mxu0 0.0
        %1681 = vmatpush1.msra.mxu0 0.0
        %1682 = vmatprep.subr.mxu0 0.0
        %1683 = vmatpush1.msra.mxu0 0.0
        %1684 = vmatprep.subr.mxu0 0.0
        %1685 = vmatpush1.msra.mxu0 0.0
        %1686 = vmatprep.subr.mxu0 0.0
        %1687 = vmatpush1.msra.mxu0 0.0
        %1688 = vmatprep.subr.mxu0 0.0
        %1689 = vmatpush1.msra.mxu0 0.0
        %1690 = vmatprep.subr.mxu0 0.0
        %1691 = vmatpush1.msra.mxu0 0.0
        %1692 = vmatprep.subr.mxu0 0.0
        %1693 = vmatpush1.msra.mxu0 0.0
        %1694 = vmatprep.subr.mxu0 0.0
        %1695 = vmatpush1.msra.mxu0 0.0
        %1696 = vmatprep.subr.mxu0 0.0
        %1697 = vmatpush1.msra.mxu0 0.0
        %1698 = vmatprep.subr.mxu0 0.0
        %1699 = vmatpush1.msra.mxu0 0.0
        %1700 = vmatprep.subr.mxu0 0.0
        %1701 = vmatpush1.msra.mxu0 0.0
        %1702 = vmatprep.subr.mxu0 0.0
        %1703 = vmatpush1.msra.mxu0 0.0
        %1704 = vmatprep.subr.mxu0 0.0
        %1705 = vmatpush1.msra.mxu0 0.0
        %1706 = vmatprep.subr.mxu0 0.0
        %1707 = vmatpush1.msra.mxu0 0.0
        %1708 = vmatprep.subr.mxu0 0.0
        %1709 = vmatpush1.msra.mxu0 0.0
        %1710 = vmatprep.subr.mxu0 0.0
        %1711 = vmatpush1.msra.mxu0 0.0
        %1712 = vmatprep.subr.mxu0 0.0
        %1713 = vmatpush1.msra.mxu0 0.0
        %1714 = vmatprep.subr.mxu0 0.0
        %1715 = vmatpush1.msra.mxu0 0.0
        %1716 = vmatprep.subr.mxu0 0.0
        %1717 = vmatpush1.msra.mxu0 0.0
        %1718 = vmatprep.subr.mxu0 0.0
        %1719 = vmatpush1.msra.mxu0 0.0
        %1720 = vmatprep.subr.mxu0 0.0
        %1721 = vmatpush1.msra.mxu0 0.0
        %1722 = vmatprep.subr.mxu0 0.0
        %1723 = vmatpush1.msra.mxu0 0.0
        %1724 = vmatprep.subr.mxu0 0.0
        %1725 = vmatpush1.msra.mxu0 0.0
        %1726 = vmatprep.subr.mxu0 0.0
        %1727 = vmatpush1.msra.mxu0 0.0
        %1728 = vmatprep.subr.mxu0 0.0
        %1729 = vmatpush1.msra.mxu0 0.0
        %1730 = vmatprep.mubr.f32.mxu0 0.0
        %1731 = vmatmul.mubr.f32.gmra.mrb[0].mxu0 %v1659
        %v1732 = vpop.f32.mrb[0].mxu0
        %v1733 = vadd.f32 0.0, %v1732
        %v1734 = vpop.f32.mrb[0].mxu0
        %1735 = vmatprep.mubr.f32.mxu0 0.0
        %1736 = vmatmul.mubr.f32.gmra.mrb[0].mxu0 %v1661
        %v1737 = vpop.f32.mrb[0].mxu0
        %v1738 = vadd.f32 0.0, %v1737
        %v1739 = vpop.f32.mrb[0].mxu0
        %1740 = vdwg.mxu0
        %v1741 = vadd.f32 %v1530, %v1733
        %v1742 = vadd.f32 %v1531, %v1738
        %v1743 = vcombine.low %v307, %v309
        %v1744 = vcombine.high %v307, %v309
        %v1746 = vunpack.c.l.s4 1983009808
        %v1747 = vunpack.c.0.s8 %v1746
        %v1748 = vlaneseq
        %v1749 = vshrl.u32 %v1748, 7
        %v1750 = vsub.s32 %v1747, %v1749
        %v1751 = vrot.slane %v1743, %v1750
        %v1753 = vunpack.c.l.s4 1983009808
        %v1754 = vunpack.c.0.s8 %v1753
        %v1755 = vlaneseq
        %v1756 = vshrl.u32 %v1755, 7
        %v1757 = vsub.s32 %v1754, %v1756
        %v1758 = vrot.slane %v1744, %v1757
        %v1759 = vcombine.low %v308, %v310
        %v1760 = vcombine.high %v308, %v310
        %v1762 = vunpack.c.l.s4 1983009808
        %v1763 = vunpack.c.0.s8 %v1762
        %v1764 = vlaneseq
        %v1765 = vshrl.u32 %v1764, 7
        %v1766 = vsub.s32 %v1763, %v1765
        %v1767 = vrot.slane %v1759, %v1766
        %v1769 = vunpack.c.l.s4 1983009808
        %v1770 = vunpack.c.0.s8 %v1769
        %v1771 = vlaneseq
        %v1772 = vshrl.u32 %v1771, 7
        %v1773 = vsub.s32 %v1770, %v1772
        %v1774 = vrot.slane %v1760, %v1773
        %v1775 = vcombine.low %v1751, %v1767
        %v1776 = vcombine.high %v1751, %v1767
        %v1778 = vunpack.c.l.s4 1934713408
        %v1779 = vunpack.c.0.s8 %v1778
        %v1780 = vlaneseq
        %v1781 = vshrl.u32 %v1780, 7
        %v1782 = vsub.s32 %v1779, %v1781
        %v1783 = vrot.slane %v1775, %v1782
        %v1785 = vunpack.c.l.s4 1934713408
        %v1786 = vunpack.c.0.s8 %v1785
        %v1787 = vlaneseq
        %v1788 = vshrl.u32 %v1787, 7
        %v1789 = vsub.s32 %v1786, %v1788
        %v1790 = vrot.slane %v1776, %v1789
        %v1791 = vcombine.low %v1758, %v1774
        %v1792 = vcombine.high %v1758, %v1774
        %v1794 = vunpack.c.l.s4 1934713408
        %v1795 = vunpack.c.0.s8 %v1794
        %v1796 = vlaneseq
        %v1797 = vshrl.u32 %v1796, 7
        %v1798 = vsub.s32 %v1795, %v1797
        %v1799 = vrot.slane %v1791, %v1798
        %v1801 = vunpack.c.l.s4 1934713408
        %v1802 = vunpack.c.0.s8 %v1801
        %v1803 = vlaneseq
        %v1804 = vshrl.u32 %v1803, 7
        %v1805 = vsub.s32 %v1802, %v1804
        %v1806 = vrot.slane %v1792, %v1805
        %v1807 = vcombine.high %v1783, 0.0
        %v1808 = vcombine.high %v1790, 0.0
        %v1809 = vcombine.high %v1799, 0.0
        %v1810 = vcombine.high %v1806, 0.0
        %1812 = vrot.lane.b32.xlu0 %v1807, 16
        %v1813 = vpop.permute.xlu0 %1812
        %1816 = vrot.lane.b32.xlu0 %v1790, 32
        %v1817 = vpop.permute.xlu0 %1816
        %1820 = vrot.lane.b32.xlu0 %v1808, 48
        %v1821 = vpop.permute.xlu0 %1820
        %1824 = vrot.lane.b32.xlu0 %v1799, 64
        %v1825 = vpop.permute.xlu0 %1824
        %1828 = vrot.lane.b32.xlu0 %v1809, 80
        %v1829 = vpop.permute.xlu0 %1828
        %1832 = vrot.lane.b32.xlu0 %v1806, 96
        %v1833 = vpop.permute.xlu0 %1832
        %1836 = vrot.lane.b32.xlu0 %v1810, 112
        %v1837 = vpop.permute.xlu0 %1836
        %v1839 = vsel %vm430, %v1783, %v1813
        %v1840 = vsel %vm432, %v1839, %v1817
        %v1841 = vsel %vm434, %v1840, %v1821
        %v1842 = vsel %vm436, %v1841, %v1825
        %v1843 = vsel %vm438, %v1842, %v1829
        %v1844 = vsel %vm440, %v1843, %v1833
        %v1845 = vsel %vm442, %v1844, %v1837
        %1846 = vrot.lane.b32.xlu0 %v311, 100
        %v1847 = vpop.permute.xlu0 %1846
        %1848 = vrot.lane.b32.xlu0 %v312, 100
        %v1849 = vpop.permute.xlu0 %1848
        %v1850 = vsel %vm553, %v1847, 0
        %v1852 = vsel %vm553, %v1849, 0
        %v1855 = vsel %vm558, %v1845, 0
        %1857 = vmatprep.subr.mxu0 0.0
        %1858 = vmatpush1.msra.mxu0 %v1855
        %1859 = vmatprep.subr.mxu0 0.0
        %1860 = vmatpush1.msra.mxu0 0.0
        %1861 = vmatprep.subr.mxu0 0.0
        %1862 = vmatpush1.msra.mxu0 0.0
        %1863 = vmatprep.subr.mxu0 0.0
        %1864 = vmatpush1.msra.mxu0 0.0
        %1865 = vmatprep.subr.mxu0 0.0
        %1866 = vmatpush1.msra.mxu0 0.0
        %1867 = vmatprep.subr.mxu0 0.0
        %1868 = vmatpush1.msra.mxu0 0.0
        %1869 = vmatprep.subr.mxu0 0.0
        %1870 = vmatpush1.msra.mxu0 0.0
        %1871 = vmatprep.subr.mxu0 0.0
        %1872 = vmatpush1.msra.mxu0 0.0
        %1873 = vmatprep.subr.mxu0 0.0
        %1874 = vmatpush1.msra.mxu0 0.0
        %1875 = vmatprep.subr.mxu0 0.0
        %1876 = vmatpush1.msra.mxu0 0.0
        %1877 = vmatprep.subr.mxu0 0.0
        %1878 = vmatpush1.msra.mxu0 0.0
        %1879 = vmatprep.subr.mxu0 0.0
        %1880 = vmatpush1.msra.mxu0 0.0
        %1881 = vmatprep.subr.mxu0 0.0
        %1882 = vmatpush1.msra.mxu0 0.0
        %1883 = vmatprep.subr.mxu0 0.0
        %1884 = vmatpush1.msra.mxu0 0.0
        %1885 = vmatprep.subr.mxu0 0.0
        %1886 = vmatpush1.msra.mxu0 0.0
        %1887 = vmatprep.subr.mxu0 0.0
        %1888 = vmatpush1.msra.mxu0 0.0
        %1889 = vmatprep.subr.mxu0 0.0
        %1890 = vmatpush1.msra.mxu0 0.0
        %1891 = vmatprep.subr.mxu0 0.0
        %1892 = vmatpush1.msra.mxu0 0.0
        %1893 = vmatprep.subr.mxu0 0.0
        %1894 = vmatpush1.msra.mxu0 0.0
        %1895 = vmatprep.subr.mxu0 0.0
        %1896 = vmatpush1.msra.mxu0 0.0
        %1897 = vmatprep.subr.mxu0 0.0
        %1898 = vmatpush1.msra.mxu0 0.0
        %1899 = vmatprep.subr.mxu0 0.0
        %1900 = vmatpush1.msra.mxu0 0.0
        %1901 = vmatprep.subr.mxu0 0.0
        %1902 = vmatpush1.msra.mxu0 0.0
        %1903 = vmatprep.subr.mxu0 0.0
        %1904 = vmatpush1.msra.mxu0 0.0
        %1905 = vmatprep.subr.mxu0 0.0
        %1906 = vmatpush1.msra.mxu0 0.0
        %1907 = vmatprep.subr.mxu0 0.0
        %1908 = vmatpush1.msra.mxu0 0.0
        %1909 = vmatprep.subr.mxu0 0.0
        %1910 = vmatpush1.msra.mxu0 0.0
        %1911 = vmatprep.subr.mxu0 0.0
        %1912 = vmatpush1.msra.mxu0 0.0
        %1913 = vmatprep.subr.mxu0 0.0
        %1914 = vmatpush1.msra.mxu0 0.0
        %1915 = vmatprep.subr.mxu0 0.0
        %1916 = vmatpush1.msra.mxu0 0.0
        %1917 = vmatprep.subr.mxu0 0.0
        %1918 = vmatpush1.msra.mxu0 0.0
        %1919 = vmatprep.subr.mxu0 0.0
        %1920 = vmatpush1.msra.mxu0 0.0
        %1921 = vmatprep.mubr.f32.mxu0 0.0
        %1922 = vmatmul.mubr.f32.gmra.mrb[0].mxu0 %v1850
        %v1923 = vpop.f32.mrb[0].mxu0
        %v1924 = vadd.f32 0.0, %v1923
        %v1925 = vpop.f32.mrb[0].mxu0
        %1926 = vmatprep.mubr.f32.mxu0 0.0
        %1927 = vmatmul.mubr.f32.gmra.mrb[0].mxu0 %v1852
        %v1928 = vpop.f32.mrb[0].mxu0
        %v1929 = vadd.f32 0.0, %v1928
        %v1930 = vpop.f32.mrb[0].mxu0
        %1931 = vdwg.mxu0
        %v1932 = vadd.f32 %v1741, %v1924
        %v1933 = vadd.f32 %v1742, %v1929
        %1934 = vrot.lane.b32.xlu0 %v307, 127
        %v1935 = vpop.permute.xlu0 %1934
        %1936 = vrot.lane.b32.xlu0 %v308, 127
        %v1937 = vpop.permute.xlu0 %1936
        %1938 = vrot.lane.b32.xlu0 %v309, 127
        %v1939 = vpop.permute.xlu0 %1938
        %1940 = vrot.lane.b32.xlu0 %v310, 127
        %v1941 = vpop.permute.xlu0 %1940
        %v1946 = vsel %vm731, %v1935, 0.0
        %v1947 = vsel %vm731, %v1937, 0.0
        %v1948 = vsel %vm731, %v1939, 0.0
        %v1949 = vsel %vm731, %v1941, 0.0
        %v1950 = vcombine.low %v1946, %v1948
        %v1951 = vcombine.high %v1946, %v1948
        %v1953 = vunpack.c.l.s4 1983009808
        %v1954 = vunpack.c.0.s8 %v1953
        %v1955 = vlaneseq
        %v1956 = vshrl.u32 %v1955, 7
        %v1957 = vsub.s32 %v1954, %v1956
        %v1958 = vrot.slane %v1950, %v1957
        %v1960 = vunpack.c.l.s4 1983009808
        %v1961 = vunpack.c.0.s8 %v1960
        %v1962 = vlaneseq
        %v1963 = vshrl.u32 %v1962, 7
        %v1964 = vsub.s32 %v1961, %v1963
        %v1965 = vrot.slane %v1951, %v1964
        %v1966 = vcombine.low %v1947, %v1949
        %v1967 = vcombine.high %v1947, %v1949
        %v1969 = vunpack.c.l.s4 1983009808
        %v1970 = vunpack.c.0.s8 %v1969
        %v1971 = vlaneseq
        %v1972 = vshrl.u32 %v1971, 7
        %v1973 = vsub.s32 %v1970, %v1972
        %v1974 = vrot.slane %v1966, %v1973
        %v1976 = vunpack.c.l.s4 1983009808
        %v1977 = vunpack.c.0.s8 %v1976
        %v1978 = vlaneseq
        %v1979 = vshrl.u32 %v1978, 7
        %v1980 = vsub.s32 %v1977, %v1979
        %v1981 = vrot.slane %v1967, %v1980
        %v1982 = vcombine.low %v1958, %v1974
        %v1983 = vcombine.high %v1958, %v1974
        %v1985 = vunpack.c.l.s4 1934713408
        %v1986 = vunpack.c.0.s8 %v1985
        %v1987 = vlaneseq
        %v1988 = vshrl.u32 %v1987, 7
        %v1989 = vsub.s32 %v1986, %v1988
        %v1990 = vrot.slane %v1982, %v1989
        %v1992 = vunpack.c.l.s4 1934713408
        %v1993 = vunpack.c.0.s8 %v1992
        %v1994 = vlaneseq
        %v1995 = vshrl.u32 %v1994, 7
        %v1996 = vsub.s32 %v1993, %v1995
        %v1997 = vrot.slane %v1983, %v1996
        %v1998 = vcombine.low %v1965, %v1981
        %v1999 = vcombine.high %v1965, %v1981
        %v2001 = vunpack.c.l.s4 1934713408
        %v2002 = vunpack.c.0.s8 %v2001
        %v2003 = vlaneseq
        %v2004 = vshrl.u32 %v2003, 7
        %v2005 = vsub.s32 %v2002, %v2004
        %v2006 = vrot.slane %v1998, %v2005
        %v2008 = vunpack.c.l.s4 1934713408
        %v2009 = vunpack.c.0.s8 %v2008
        %v2010 = vlaneseq
        %v2011 = vshrl.u32 %v2010, 7
        %v2012 = vsub.s32 %v2009, %v2011
        %v2013 = vrot.slane %v1999, %v2012
        %v2014 = vcombine.high %v1990, 0.0
        %v2015 = vcombine.high %v1997, 0.0
        %v2016 = vcombine.high %v2006, 0.0
        %v2017 = vcombine.high %v2013, 0.0
        %2019 = vrot.lane.b32.xlu0 %v2014, 16
        %v2020 = vpop.permute.xlu0 %2019
        %2023 = vrot.lane.b32.xlu0 %v1997, 32
        %v2024 = vpop.permute.xlu0 %2023
        %2027 = vrot.lane.b32.xlu0 %v2015, 48
        %v2028 = vpop.permute.xlu0 %2027
        %2031 = vrot.lane.b32.xlu0 %v2006, 64
        %v2032 = vpop.permute.xlu0 %2031
        %2035 = vrot.lane.b32.xlu0 %v2016, 80
        %v2036 = vpop.permute.xlu0 %2035
        %2039 = vrot.lane.b32.xlu0 %v2013, 96
        %v2040 = vpop.permute.xlu0 %2039
        %2043 = vrot.lane.b32.xlu0 %v2017, 112
        %v2044 = vpop.permute.xlu0 %2043
        %v2046 = vsel %vm430, %v1990, %v2020
        %v2047 = vsel %vm432, %v2046, %v2024
        %v2048 = vsel %vm434, %v2047, %v2028
        %v2049 = vsel %vm436, %v2048, %v2032
        %v2050 = vsel %vm438, %v2049, %v2036
        %v2051 = vsel %vm440, %v2050, %v2040
        %v2052 = vsel %vm442, %v2051, %v2044
        %2053 = vrot.lane.b32.xlu0 %v311, 96
        %v2054 = vpop.permute.xlu0 %2053
        %2055 = vrot.lane.b32.xlu0 %v312, 96
        %v2056 = vpop.permute.xlu0 %2055
        %v2057 = vsel %vm553, %v2054, 0
        %v2059 = vsel %vm553, %v2056, 0
        %v2062 = vsel %vm558, %v2052, 0
        %2064 = vmatprep.subr.mxu0 0.0
        %2065 = vmatpush1.msra.mxu0 %v2062
        %2066 = vmatprep.subr.mxu0 0.0
        %2067 = vmatpush1.msra.mxu0 0.0
        %2068 = vmatprep.subr.mxu0 0.0
        %2069 = vmatpush1.msra.mxu0 0.0
        %2070 = vmatprep.subr.mxu0 0.0
        %2071 = vmatpush1.msra.mxu0 0.0
        %2072 = vmatprep.subr.mxu0 0.0
        %2073 = vmatpush1.msra.mxu0 0.0
        %2074 = vmatprep.subr.mxu0 0.0
        %2075 = vmatpush1.msra.mxu0 0.0
        %2076 = vmatprep.subr.mxu0 0.0
        %2077 = vmatpush1.msra.mxu0 0.0
        %2078 = vmatprep.subr.mxu0 0.0
        %2079 = vmatpush1.msra.mxu0 0.0
        %2080 = vmatprep.subr.mxu0 0.0
        %2081 = vmatpush1.msra.mxu0 0.0
        %2082 = vmatprep.subr.mxu0 0.0
        %2083 = vmatpush1.msra.mxu0 0.0
        %2084 = vmatprep.subr.mxu0 0.0
        %2085 = vmatpush1.msra.mxu0 0.0
        %2086 = vmatprep.subr.mxu0 0.0
        %2087 = vmatpush1.msra.mxu0 0.0
        %2088 = vmatprep.subr.mxu0 0.0
        %2089 = vmatpush1.msra.mxu0 0.0
        %2090 = vmatprep.subr.mxu0 0.0
        %2091 = vmatpush1.msra.mxu0 0.0
        %2092 = vmatprep.subr.mxu0 0.0
        %2093 = vmatpush1.msra.mxu0 0.0
        %2094 = vmatprep.subr.mxu0 0.0
        %2095 = vmatpush1.msra.mxu0 0.0
        %2096 = vmatprep.subr.mxu0 0.0
        %2097 = vmatpush1.msra.mxu0 0.0
        %2098 = vmatprep.subr.mxu0 0.0
        %2099 = vmatpush1.msra.mxu0 0.0
        %2100 = vmatprep.subr.mxu0 0.0
        %2101 = vmatpush1.msra.mxu0 0.0
        %2102 = vmatprep.subr.mxu0 0.0
        %2103 = vmatpush1.msra.mxu0 0.0
        %2104 = vmatprep.subr.mxu0 0.0
        %2105 = vmatpush1.msra.mxu0 0.0
        %2106 = vmatprep.subr.mxu0 0.0
        %2107 = vmatpush1.msra.mxu0 0.0
        %2108 = vmatprep.subr.mxu0 0.0
        %2109 = vmatpush1.msra.mxu0 0.0
        %2110 = vmatprep.subr.mxu0 0.0
        %2111 = vmatpush1.msra.mxu0 0.0
        %2112 = vmatprep.subr.mxu0 0.0
        %2113 = vmatpush1.msra.mxu0 0.0
        %2114 = vmatprep.subr.mxu0 0.0
        %2115 = vmatpush1.msra.mxu0 0.0
        %2116 = vmatprep.subr.mxu0 0.0
        %2117 = vmatpush1.msra.mxu0 0.0
        %2118 = vmatprep.subr.mxu0 0.0
        %2119 = vmatpush1.msra.mxu0 0.0
        %2120 = vmatprep.subr.mxu0 0.0
        %2121 = vmatpush1.msra.mxu0 0.0
        %2122 = vmatprep.subr.mxu0 0.0
        %2123 = vmatpush1.msra.mxu0 0.0
        %2124 = vmatprep.subr.mxu0 0.0
        %2125 = vmatpush1.msra.mxu0 0.0
        %2126 = vmatprep.subr.mxu0 0.0
        %2127 = vmatpush1.msra.mxu0 0.0
        %2128 = vmatprep.mubr.f32.mxu0 0.0
        %2129 = vmatmul.mubr.f32.gmra.mrb[0].mxu0 %v2057
        %v2130 = vpop.f32.mrb[0].mxu0
        %v2131 = vadd.f32 0.0, %v2130
        %v2132 = vpop.f32.mrb[0].mxu0
        %2133 = vmatprep.mubr.f32.mxu0 0.0
        %2134 = vmatmul.mubr.f32.gmra.mrb[0].mxu0 %v2059
        %v2135 = vpop.f32.mrb[0].mxu0
        %v2136 = vadd.f32 0.0, %v2135
        %v2137 = vpop.f32.mrb[0].mxu0
        %2138 = vdwg.mxu0
        %v2139 = vadd.f32 %v1932, %v2131
        %v2140 = vadd.f32 %v1933, %v2136
        %v2141 = vld [vmem:[%s2] sm:$0xff]
        %v2142 = vld [vmem:[%s2 + $0x8] sm:$0xff]
        %2144 = vset.pattern.permute.xlu0 0
        %2145 = vperm.xlu0 %2144, %v2141
        %v2146 = vpop.permute.xlu0 %2145
        %2149 = vset.pattern.permute.xlu0 0
        %2150 = vperm.xlu0 %2149, %v2142
        %v2151 = vpop.permute.xlu0 %2150
        %v2153 = vadd.f32 %v2139, %v2146
        %v2154 = vadd.f32 %v2140, %v2151
        %v2155 = vmax.f32 %v2153, 0.0
        %v2156 = vmax.f32 %v2154, 0.0
        %v2157 = vld [vmem:[%s3] sm:$0xff]
        %v2158 = vld [vmem:[%s3 + $0x8] sm:$0xff]
        %v2159 = vld [vmem:[%s3 + $0x10] sm:$0xff]
        %v2160 = vld [vmem:[%s3 + $0x18] sm:$0xff]
        %v2162 = vrot.slane %v2155, 4
        %2163 = vrot.lane.b32.xlu0 %v2162, 16
        %v2164 = vpop.permute.xlu0 %2163
        %v2166 = vsel %vm430, %v2155, %v2164
        %v2168 = vsel %vm432, %v2166, 0
        %2170 = vmatprep.subr.mxu0 0.0
        %2171 = vmatpush1.msra.mxu0 %v2157
        %2172 = vmatprep.subr.mxu0 0.0
        %2173 = vmatpush1.msra.mxu0 %v2158
        %2174 = vmatprep.subr.mxu0 0.0
        %2175 = vmatpush1.msra.mxu0 %v2159
        %2176 = vmatprep.subr.mxu0 0.0
        %2177 = vmatpush1.msra.mxu0 %v2160
        %2178 = vmatprep.subr.mxu0 0.0
        %2179 = vmatpush1.msra.mxu0 0.0
        %2180 = vmatprep.subr.mxu0 0.0
        %2181 = vmatpush1.msra.mxu0 0.0
        %2182 = vmatprep.subr.mxu0 0.0
        %2183 = vmatpush1.msra.mxu0 0.0
        %2184 = vmatprep.subr.mxu0 0.0
        %2185 = vmatpush1.msra.mxu0 0.0
        %2186 = vmatprep.subr.mxu0 0.0
        %2187 = vmatpush1.msra.mxu0 0.0
        %2188 = vmatprep.subr.mxu0 0.0
        %2189 = vmatpush1.msra.mxu0 0.0
        %2190 = vmatprep.subr.mxu0 0.0
        %2191 = vmatpush1.msra.mxu0 0.0
        %2192 = vmatprep.subr.mxu0 0.0
        %2193 = vmatpush1.msra.mxu0 0.0
        %2194 = vmatprep.subr.mxu0 0.0
        %2195 = vmatpush1.msra.mxu0 0.0
        %2196 = vmatprep.subr.mxu0 0.0
        %2197 = vmatpush1.msra.mxu0 0.0
        %2198 = vmatprep.subr.mxu0 0.0
        %2199 = vmatpush1.msra.mxu0 0.0
        %2200 = vmatprep.subr.mxu0 0.0
        %2201 = vmatpush1.msra.mxu0 0.0
        %2202 = vmatprep.subr.mxu0 0.0
        %2203 = vmatpush1.msra.mxu0 0.0
        %2204 = vmatprep.subr.mxu0 0.0
        %2205 = vmatpush1.msra.mxu0 0.0
        %2206 = vmatprep.subr.mxu0 0.0
        %2207 = vmatpush1.msra.mxu0 0.0
        %2208 = vmatprep.subr.mxu0 0.0
        %2209 = vmatpush1.msra.mxu0 0.0
        %2210 = vmatprep.subr.mxu0 0.0
        %2211 = vmatpush1.msra.mxu0 0.0
        %2212 = vmatprep.subr.mxu0 0.0
        %2213 = vmatpush1.msra.mxu0 0.0
        %2214 = vmatprep.subr.mxu0 0.0
        %2215 = vmatpush1.msra.mxu0 0.0
        %2216 = vmatprep.subr.mxu0 0.0
        %2217 = vmatpush1.msra.mxu0 0.0
        %2218 = vmatprep.subr.mxu0 0.0
        %2219 = vmatpush1.msra.mxu0 0.0
        %2220 = vmatprep.subr.mxu0 0.0
        %2221 = vmatpush1.msra.mxu0 0.0
        %2222 = vmatprep.subr.mxu0 0.0
        %2223 = vmatpush1.msra.mxu0 0.0
        %2224 = vmatprep.subr.mxu0 0.0
        %2225 = vmatpush1.msra.mxu0 0.0
        %2226 = vmatprep.subr.mxu0 0.0
        %2227 = vmatpush1.msra.mxu0 0.0
        %2228 = vmatprep.subr.mxu0 0.0
        %2229 = vmatpush1.msra.mxu0 0.0
        %2230 = vmatprep.subr.mxu0 0.0
        %2231 = vmatpush1.msra.mxu0 0.0
        %2232 = vmatprep.subr.mxu0 0.0
        %2233 = vmatpush1.msra.mxu0 0.0
        %2234 = vmatprep.mubr.f32.mxu0 0.0
        %2235 = vmatmul.mubr.f32.gmra.mrb[0].mxu0 %v2168
        %v2236 = vpop.f32.mrb[0].mxu0
        %v2237 = vadd.f32 0.0, %v2236
        %v2238 = vpop.f32.mrb[0].mxu0
        %2239 = vdwg.mxu0
        %v2242 = vunpack.c.l.s4 1966171168
        %v2243 = vunpack.c.0.s8 %v2242
        %v2244 = vlaneseq
        %v2245 = vshrl.u32 %v2244, 7
        %v2246 = vsub.s32 %v2243, %v2245
        %v2247 = vrot.slane %v2237, %v2246
        %v2248 = vcombine.high %v2247, %v2247
        %v2250 = vunpack.c.l.s4 1966171168
        %v2251 = vunpack.c.0.s8 %v2250
        %v2252 = vlaneseq
        %v2253 = vshrl.u32 %v2252, 7
        %v2254 = vsub.s32 %v2251, %v2253
        %v2255 = vrot.slane %v2247, %v2254
        %v2257 = vunpack.c.l.s4 1966171168
        %v2258 = vunpack.c.0.s8 %v2257
        %v2259 = vlaneseq
        %v2260 = vshrl.u32 %v2259, 7
        %v2261 = vsub.s32 %v2258, %v2260
        %v2262 = vrot.slane %v2248, %v2261
        %v2263 = vcombine.high %v2255, %v2255
        %v2264 = vcombine.high %v2262, %v2262
        %vm2269 = vcmask 253952
        %2270 = vst.msk [vmem:[%s229] sm:$0x1] %vm2269, %v2255
        %2271 = vst.msk [vmem:[%s229 + $0x10] sm:$0x1] %vm2269, %v2262
        %2272 = vst.msk [vmem:[%s229 + $0x20] sm:$0x1] %vm2269, %v2263
        %2273 = vst.msk [vmem:[%s229 + $0x30] sm:$0x1] %vm2269, %v2264
        %2274 = vrot.lane.b32.xlu0 %v2155, 112
        %v2275 = vpop.permute.xlu0 %2274
        %v2278 = vsel %vm430, %v2275, %v2162
        %v2280 = vsel %vm432, %v2278, 0
        %2282 = vmatprep.subr.mxu0 0.0
        %2283 = vmatpush1.msra.mxu0 %v2157
        %2284 = vmatprep.subr.mxu0 0.0
        %2285 = vmatpush1.msra.mxu0 %v2158
        %2286 = vmatprep.subr.mxu0 0.0
        %2287 = vmatpush1.msra.mxu0 %v2159
        %2288 = vmatprep.subr.mxu0 0.0
        %2289 = vmatpush1.msra.mxu0 %v2160
        %2290 = vmatprep.subr.mxu0 0.0
        %2291 = vmatpush1.msra.mxu0 0.0
        %2292 = vmatprep.subr.mxu0 0.0
        %2293 = vmatpush1.msra.mxu0 0.0
        %2294 = vmatprep.subr.mxu0 0.0
        %2295 = vmatpush1.msra.mxu0 0.0
        %2296 = vmatprep.subr.mxu0 0.0
        %2297 = vmatpush1.msra.mxu0 0.0
        %2298 = vmatprep.subr.mxu0 0.0
        %2299 = vmatpush1.msra.mxu0 0.0
        %2300 = vmatprep.subr.mxu0 0.0
        %2301 = vmatpush1.msra.mxu0 0.0
        %2302 = vmatprep.subr.mxu0 0.0
        %2303 = vmatpush1.msra.mxu0 0.0
        %2304 = vmatprep.subr.mxu0 0.0
        %2305 = vmatpush1.msra.mxu0 0.0
        %2306 = vmatprep.subr.mxu0 0.0
        %2307 = vmatpush1.msra.mxu0 0.0
        %2308 = vmatprep.subr.mxu0 0.0
        %2309 = vmatpush1.msra.mxu0 0.0
        %2310 = vmatprep.subr.mxu0 0.0
        %2311 = vmatpush1.msra.mxu0 0.0
        %2312 = vmatprep.subr.mxu0 0.0
        %2313 = vmatpush1.msra.mxu0 0.0
        %2314 = vmatprep.subr.mxu0 0.0
        %2315 = vmatpush1.msra.mxu0 0.0
        %2316 = vmatprep.subr.mxu0 0.0
        %2317 = vmatpush1.msra.mxu0 0.0
        %2318 = vmatprep.subr.mxu0 0.0
        %2319 = vmatpush1.msra.mxu0 0.0
        %2320 = vmatprep.subr.mxu0 0.0
        %2321 = vmatpush1.msra.mxu0 0.0
        %2322 = vmatprep.subr.mxu0 0.0
        %2323 = vmatpush1.msra.mxu0 0.0
        %2324 = vmatprep.subr.mxu0 0.0
        %2325 = vmatpush1.msra.mxu0 0.0
        %2326 = vmatprep.subr.mxu0 0.0
        %2327 = vmatpush1.msra.mxu0 0.0
        %2328 = vmatprep.subr.mxu0 0.0
        %2329 = vmatpush1.msra.mxu0 0.0
        %2330 = vmatprep.subr.mxu0 0.0
        %2331 = vmatpush1.msra.mxu0 0.0
        %2332 = vmatprep.subr.mxu0 0.0
        %2333 = vmatpush1.msra.mxu0 0.0
        %2334 = vmatprep.subr.mxu0 0.0
        %2335 = vmatpush1.msra.mxu0 0.0
        %2336 = vmatprep.subr.mxu0 0.0
        %2337 = vmatpush1.msra.mxu0 0.0
        %2338 = vmatprep.subr.mxu0 0.0
        %2339 = vmatpush1.msra.mxu0 0.0
        %2340 = vmatprep.subr.mxu0 0.0
        %2341 = vmatpush1.msra.mxu0 0.0
        %2342 = vmatprep.subr.mxu0 0.0
        %2343 = vmatpush1.msra.mxu0 0.0
        %2344 = vmatprep.subr.mxu0 0.0
        %2345 = vmatpush1.msra.mxu0 0.0
        %2346 = vmatprep.mubr.f32.mxu0 0.0
        %2347 = vmatmul.mubr.f32.gmra.mrb[0].mxu0 %v2280
        %v2348 = vpop.f32.mrb[0].mxu0
        %v2349 = vadd.f32 0.0, %v2348
        %v2350 = vpop.f32.mrb[0].mxu0
        %2351 = vdwg.mxu0
        %v2354 = vunpack.c.l.s4 1966171168
        %v2355 = vunpack.c.0.s8 %v2354
        %v2356 = vlaneseq
        %v2357 = vshrl.u32 %v2356, 7
        %v2358 = vsub.s32 %v2355, %v2357
        %v2359 = vrot.slane %v2349, %v2358
        %v2360 = vcombine.high %v2359, %v2359
        %v2362 = vunpack.c.l.s4 1966171168
        %v2363 = vunpack.c.0.s8 %v2362
        %v2364 = vlaneseq
        %v2365 = vshrl.u32 %v2364, 7
        %v2366 = vsub.s32 %v2363, %v2365
        %v2367 = vrot.slane %v2359, %v2366
        %v2369 = vunpack.c.l.s4 1966171168
        %v2370 = vunpack.c.0.s8 %v2369
        %v2371 = vlaneseq
        %v2372 = vshrl.u32 %v2371, 7
        %v2373 = vsub.s32 %v2370, %v2372
        %v2374 = vrot.slane %v2360, %v2373
        %v2375 = vcombine.high %v2367, %v2367
        %v2376 = vcombine.high %v2374, %v2374
        %s2381 = scalar_lea.vmem %s229, 2 [#allocation5]
        %2382 = vst.msk [vmem:[%s2381] sm:$0x1] %vm2269, %v2367
        %2383 = vst.msk [vmem:[%s2381 + $0x10] sm:$0x1] %vm2269, %v2374
        %2384 = vst.msk [vmem:[%s2381 + $0x20] sm:$0x1] %vm2269, %v2375
        %2385 = vst.msk [vmem:[%s2381 + $0x30] sm:$0x1] %vm2269, %v2376
        %2386 = vrot.lane.b32.xlu0 %v2155, 96
        %v2387 = vpop.permute.xlu0 %2386
        %2389 = vrot.lane.b32.xlu0 %v2162, 112
        %v2390 = vpop.permute.xlu0 %2389
        %v2392 = vsel %vm430, %v2387, %v2390
        %v2394 = vsel %vm432, %v2392, 0
        %2396 = vmatprep.subr.mxu0 0.0
        %2397 = vmatpush1.msra.mxu0 %v2157
        %2398 = vmatprep.subr.mxu0 0.0
        %2399 = vmatpush1.msra.mxu0 %v2158
        %2400 = vmatprep.subr.mxu0 0.0
        %2401 = vmatpush1.msra.mxu0 %v2159
        %2402 = vmatprep.subr.mxu0 0.0
        %2403 = vmatpush1.msra.mxu0 %v2160
        %2404 = vmatprep.subr.mxu0 0.0
        %2405 = vmatpush1.msra.mxu0 0.0
        %2406 = vmatprep.subr.mxu0 0.0
        %2407 = vmatpush1.msra.mxu0 0.0
        %2408 = vmatprep.subr.mxu0 0.0
        %2409 = vmatpush1.msra.mxu0 0.0
        %2410 = vmatprep.subr.mxu0 0.0
        %2411 = vmatpush1.msra.mxu0 0.0
        %2412 = vmatprep.subr.mxu0 0.0
        %2413 = vmatpush1.msra.mxu0 0.0
        %2414 = vmatprep.subr.mxu0 0.0
        %2415 = vmatpush1.msra.mxu0 0.0
        %2416 = vmatprep.subr.mxu0 0.0
        %2417 = vmatpush1.msra.mxu0 0.0
        %2418 = vmatprep.subr.mxu0 0.0
        %2419 = vmatpush1.msra.mxu0 0.0
        %2420 = vmatprep.subr.mxu0 0.0
        %2421 = vmatpush1.msra.mxu0 0.0
        %2422 = vmatprep.subr.mxu0 0.0
        %2423 = vmatpush1.msra.mxu0 0.0
        %2424 = vmatprep.subr.mxu0 0.0
        %2425 = vmatpush1.msra.mxu0 0.0
        %2426 = vmatprep.subr.mxu0 0.0
        %2427 = vmatpush1.msra.mxu0 0.0
        %2428 = vmatprep.subr.mxu0 0.0
        %2429 = vmatpush1.msra.mxu0 0.0
        %2430 = vmatprep.subr.mxu0 0.0
        %2431 = vmatpush1.msra.mxu0 0.0
        %2432 = vmatprep.subr.mxu0 0.0
        %2433 = vmatpush1.msra.mxu0 0.0
        %2434 = vmatprep.subr.mxu0 0.0
        %2435 = vmatpush1.msra.mxu0 0.0
        %2436 = vmatprep.subr.mxu0 0.0
        %2437 = vmatpush1.msra.mxu0 0.0
        %2438 = vmatprep.subr.mxu0 0.0
        %2439 = vmatpush1.msra.mxu0 0.0
        %2440 = vmatprep.subr.mxu0 0.0
        %2441 = vmatpush1.msra.mxu0 0.0
        %2442 = vmatprep.subr.mxu0 0.0
        %2443 = vmatpush1.msra.mxu0 0.0
        %2444 = vmatprep.subr.mxu0 0.0
        %2445 = vmatpush1.msra.mxu0 0.0
        %2446 = vmatprep.subr.mxu0 0.0
        %2447 = vmatpush1.msra.mxu0 0.0
        %2448 = vmatprep.subr.mxu0 0.0
        %2449 = vmatpush1.msra.mxu0 0.0
        %2450 = vmatprep.subr.mxu0 0.0
        %2451 = vmatpush1.msra.mxu0 0.0
        %2452 = vmatprep.subr.mxu0 0.0
        %2453 = vmatpush1.msra.mxu0 0.0
        %2454 = vmatprep.subr.mxu0 0.0
        %2455 = vmatpush1.msra.mxu0 0.0
        %2456 = vmatprep.subr.mxu0 0.0
        %2457 = vmatpush1.msra.mxu0 0.0
        %2458 = vmatprep.subr.mxu0 0.0
        %2459 = vmatpush1.msra.mxu0 0.0
        %2460 = vmatprep.mubr.f32.mxu0 0.0
        %2461 = vmatmul.mubr.f32.gmra.mrb[0].mxu0 %v2394
        %v2462 = vpop.f32.mrb[0].mxu0
        %v2463 = vadd.f32 0.0, %v2462
        %v2464 = vpop.f32.mrb[0].mxu0
        %2465 = vdwg.mxu0
        %v2468 = vunpack.c.l.s4 1966171168
        %v2469 = vunpack.c.0.s8 %v2468
        %v2470 = vlaneseq
        %v2471 = vshrl.u32 %v2470, 7
        %v2472 = vsub.s32 %v2469, %v2471
        %v2473 = vrot.slane %v2463, %v2472
        %v2474 = vcombine.high %v2473, %v2473
        %v2476 = vunpack.c.l.s4 1966171168
        %v2477 = vunpack.c.0.s8 %v2476
        %v2478 = vlaneseq
        %v2479 = vshrl.u32 %v2478, 7
        %v2480 = vsub.s32 %v2477, %v2479
        %v2481 = vrot.slane %v2473, %v2480
        %v2483 = vunpack.c.l.s4 1966171168
        %v2484 = vunpack.c.0.s8 %v2483
        %v2485 = vlaneseq
        %v2486 = vshrl.u32 %v2485, 7
        %v2487 = vsub.s32 %v2484, %v2486
        %v2488 = vrot.slane %v2474, %v2487
        %v2489 = vcombine.high %v2481, %v2481
        %v2490 = vcombine.high %v2488, %v2488
        %s2495 = scalar_lea.vmem %s229, 4 [#allocation5]
        %2496 = vst.msk [vmem:[%s2495] sm:$0x1] %vm2269, %v2481
        %2497 = vst.msk [vmem:[%s2495 + $0x10] sm:$0x1] %vm2269, %v2488
        %2498 = vst.msk [vmem:[%s2495 + $0x20] sm:$0x1] %vm2269, %v2489
        %2499 = vst.msk [vmem:[%s2495 + $0x30] sm:$0x1] %vm2269, %v2490
        %2500 = vrot.lane.b32.xlu0 %v2155, 80
        %v2501 = vpop.permute.xlu0 %2500
        %2503 = vrot.lane.b32.xlu0 %v2162, 96
        %v2504 = vpop.permute.xlu0 %2503
        %v2506 = vsel %vm430, %v2501, %v2504
        %v2508 = vsel %vm432, %v2506, 0
        %2510 = vmatprep.subr.mxu0 0.0
        %2511 = vmatpush1.msra.mxu0 %v2157
        %2512 = vmatprep.subr.mxu0 0.0
        %2513 = vmatpush1.msra.mxu0 %v2158
        %2514 = vmatprep.subr.mxu0 0.0
        %2515 = vmatpush1.msra.mxu0 %v2159
        %2516 = vmatprep.subr.mxu0 0.0
        %2517 = vmatpush1.msra.mxu0 %v2160
        %2518 = vmatprep.subr.mxu0 0.0
        %2519 = vmatpush1.msra.mxu0 0.0
        %2520 = vmatprep.subr.mxu0 0.0
        %2521 = vmatpush1.msra.mxu0 0.0
        %2522 = vmatprep.subr.mxu0 0.0
        %2523 = vmatpush1.msra.mxu0 0.0
        %2524 = vmatprep.subr.mxu0 0.0
        %2525 = vmatpush1.msra.mxu0 0.0
        %2526 = vmatprep.subr.mxu0 0.0
        %2527 = vmatpush1.msra.mxu0 0.0
        %2528 = vmatprep.subr.mxu0 0.0
        %2529 = vmatpush1.msra.mxu0 0.0
        %2530 = vmatprep.subr.mxu0 0.0
        %2531 = vmatpush1.msra.mxu0 0.0
        %2532 = vmatprep.subr.mxu0 0.0
        %2533 = vmatpush1.msra.mxu0 0.0
        %2534 = vmatprep.subr.mxu0 0.0
        %2535 = vmatpush1.msra.mxu0 0.0
        %2536 = vmatprep.subr.mxu0 0.0
        %2537 = vmatpush1.msra.mxu0 0.0
        %2538 = vmatprep.subr.mxu0 0.0
        %2539 = vmatpush1.msra.mxu0 0.0
        %2540 = vmatprep.subr.mxu0 0.0
        %2541 = vmatpush1.msra.mxu0 0.0
        %2542 = vmatprep.subr.mxu0 0.0
        %2543 = vmatpush1.msra.mxu0 0.0
        %2544 = vmatprep.subr.mxu0 0.0
        %2545 = vmatpush1.msra.mxu0 0.0
        %2546 = vmatprep.subr.mxu0 0.0
        %2547 = vmatpush1.msra.mxu0 0.0
        %2548 = vmatprep.subr.mxu0 0.0
        %2549 = vmatpush1.msra.mxu0 0.0
        %2550 = vmatprep.subr.mxu0 0.0
        %2551 = vmatpush1.msra.mxu0 0.0
        %2552 = vmatprep.subr.mxu0 0.0
        %2553 = vmatpush1.msra.mxu0 0.0
        %2554 = vmatprep.subr.mxu0 0.0
        %2555 = vmatpush1.msra.mxu0 0.0
        %2556 = vmatprep.subr.mxu0 0.0
        %2557 = vmatpush1.msra.mxu0 0.0
        %2558 = vmatprep.subr.mxu0 0.0
        %2559 = vmatpush1.msra.mxu0 0.0
        %2560 = vmatprep.subr.mxu0 0.0
        %2561 = vmatpush1.msra.mxu0 0.0
        %2562 = vmatprep.subr.mxu0 0.0
        %2563 = vmatpush1.msra.mxu0 0.0
        %2564 = vmatprep.subr.mxu0 0.0
        %2565 = vmatpush1.msra.mxu0 0.0
        %2566 = vmatprep.subr.mxu0 0.0
        %2567 = vmatpush1.msra.mxu0 0.0
        %2568 = vmatprep.subr.mxu0 0.0
        %2569 = vmatpush1.msra.mxu0 0.0
        %2570 = vmatprep.subr.mxu0 0.0
        %2571 = vmatpush1.msra.mxu0 0.0
        %2572 = vmatprep.subr.mxu0 0.0
        %2573 = vmatpush1.msra.mxu0 0.0
        %2574 = vmatprep.mubr.f32.mxu0 0.0
        %2575 = vmatmul.mubr.f32.gmra.mrb[0].mxu0 %v2508
        %v2576 = vpop.f32.mrb[0].mxu0
        %v2577 = vadd.f32 0.0, %v2576
        %v2578 = vpop.f32.mrb[0].mxu0
        %2579 = vdwg.mxu0
        %v2582 = vunpack.c.l.s4 1966171168
        %v2583 = vunpack.c.0.s8 %v2582
        %v2584 = vlaneseq
        %v2585 = vshrl.u32 %v2584, 7
        %v2586 = vsub.s32 %v2583, %v2585
        %v2587 = vrot.slane %v2577, %v2586
        %v2588 = vcombine.high %v2587, %v2587
        %v2590 = vunpack.c.l.s4 1966171168
        %v2591 = vunpack.c.0.s8 %v2590
        %v2592 = vlaneseq
        %v2593 = vshrl.u32 %v2592, 7
        %v2594 = vsub.s32 %v2591, %v2593
        %v2595 = vrot.slane %v2587, %v2594
        %v2597 = vunpack.c.l.s4 1966171168
        %v2598 = vunpack.c.0.s8 %v2597
        %v2599 = vlaneseq
        %v2600 = vshrl.u32 %v2599, 7
        %v2601 = vsub.s32 %v2598, %v2600
        %v2602 = vrot.slane %v2588, %v2601
        %v2603 = vcombine.high %v2595, %v2595
        %v2604 = vcombine.high %v2602, %v2602
        %s2609 = scalar_lea.vmem %s229, 6 [#allocation5]
        %2610 = vst.msk [vmem:[%s2609] sm:$0x1] %vm2269, %v2595
        %2611 = vst.msk [vmem:[%s2609 + $0x10] sm:$0x1] %vm2269, %v2602
        %2612 = vst.msk [vmem:[%s2609 + $0x20] sm:$0x1] %vm2269, %v2603
        %2613 = vst.msk [vmem:[%s2609 + $0x30] sm:$0x1] %vm2269, %v2604
        %2614 = vrot.lane.b32.xlu0 %v2155, 64
        %v2615 = vpop.permute.xlu0 %2614
        %2617 = vrot.lane.b32.xlu0 %v2162, 80
        %v2618 = vpop.permute.xlu0 %2617
        %v2620 = vsel %vm430, %v2615, %v2618
        %v2622 = vsel %vm432, %v2620, 0
        %2624 = vmatprep.subr.mxu0 0.0
        %2625 = vmatpush1.msra.mxu0 %v2157
        %2626 = vmatprep.subr.mxu0 0.0
        %2627 = vmatpush1.msra.mxu0 %v2158
        %2628 = vmatprep.subr.mxu0 0.0
        %2629 = vmatpush1.msra.mxu0 %v2159
        %2630 = vmatprep.subr.mxu0 0.0
        %2631 = vmatpush1.msra.mxu0 %v2160
        %2632 = vmatprep.subr.mxu0 0.0
        %2633 = vmatpush1.msra.mxu0 0.0
        %2634 = vmatprep.subr.mxu0 0.0
        %2635 = vmatpush1.msra.mxu0 0.0
        %2636 = vmatprep.subr.mxu0 0.0
        %2637 = vmatpush1.msra.mxu0 0.0
        %2638 = vmatprep.subr.mxu0 0.0
        %2639 = vmatpush1.msra.mxu0 0.0
        %2640 = vmatprep.subr.mxu0 0.0
        %2641 = vmatpush1.msra.mxu0 0.0
        %2642 = vmatprep.subr.mxu0 0.0
        %2643 = vmatpush1.msra.mxu0 0.0
        %2644 = vmatprep.subr.mxu0 0.0
        %2645 = vmatpush1.msra.mxu0 0.0
        %2646 = vmatprep.subr.mxu0 0.0
        %2647 = vmatpush1.msra.mxu0 0.0
        %2648 = vmatprep.subr.mxu0 0.0
        %2649 = vmatpush1.msra.mxu0 0.0
        %2650 = vmatprep.subr.mxu0 0.0
        %2651 = vmatpush1.msra.mxu0 0.0
        %2652 = vmatprep.subr.mxu0 0.0
        %2653 = vmatpush1.msra.mxu0 0.0
        %2654 = vmatprep.subr.mxu0 0.0
        %2655 = vmatpush1.msra.mxu0 0.0
        %2656 = vmatprep.subr.mxu0 0.0
        %2657 = vmatpush1.msra.mxu0 0.0
        %2658 = vmatprep.subr.mxu0 0.0
        %2659 = vmatpush1.msra.mxu0 0.0
        %2660 = vmatprep.subr.mxu0 0.0
        %2661 = vmatpush1.msra.mxu0 0.0
        %2662 = vmatprep.subr.mxu0 0.0
        %2663 = vmatpush1.msra.mxu0 0.0
        %2664 = vmatprep.subr.mxu0 0.0
        %2665 = vmatpush1.msra.mxu0 0.0
        %2666 = vmatprep.subr.mxu0 0.0
        %2667 = vmatpush1.msra.mxu0 0.0
        %2668 = vmatprep.subr.mxu0 0.0
        %2669 = vmatpush1.msra.mxu0 0.0
        %2670 = vmatprep.subr.mxu0 0.0
        %2671 = vmatpush1.msra.mxu0 0.0
        %2672 = vmatprep.subr.mxu0 0.0
        %2673 = vmatpush1.msra.mxu0 0.0
        %2674 = vmatprep.subr.mxu0 0.0
        %2675 = vmatpush1.msra.mxu0 0.0
        %2676 = vmatprep.subr.mxu0 0.0
        %2677 = vmatpush1.msra.mxu0 0.0
        %2678 = vmatprep.subr.mxu0 0.0
        %2679 = vmatpush1.msra.mxu0 0.0
        %2680 = vmatprep.subr.mxu0 0.0
        %2681 = vmatpush1.msra.mxu0 0.0
        %2682 = vmatprep.subr.mxu0 0.0
        %2683 = vmatpush1.msra.mxu0 0.0
        %2684 = vmatprep.subr.mxu0 0.0
        %2685 = vmatpush1.msra.mxu0 0.0
        %2686 = vmatprep.subr.mxu0 0.0
        %2687 = vmatpush1.msra.mxu0 0.0
        %2688 = vmatprep.mubr.f32.mxu0 0.0
        %2689 = vmatmul.mubr.f32.gmra.mrb[0].mxu0 %v2622
        %v2690 = vpop.f32.mrb[0].mxu0
        %v2691 = vadd.f32 0.0, %v2690
        %v2692 = vpop.f32.mrb[0].mxu0
        %2693 = vdwg.mxu0
        %v2696 = vunpack.c.l.s4 1966171168
        %v2697 = vunpack.c.0.s8 %v2696
        %v2698 = vlaneseq
        %v2699 = vshrl.u32 %v2698, 7
        %v2700 = vsub.s32 %v2697, %v2699
        %v2701 = vrot.slane %v2691, %v2700
        %v2702 = vcombine.high %v2701, %v2701
        %v2704 = vunpack.c.l.s4 1966171168
        %v2705 = vunpack.c.0.s8 %v2704
        %v2706 = vlaneseq
        %v2707 = vshrl.u32 %v2706, 7
        %v2708 = vsub.s32 %v2705, %v2707
        %v2709 = vrot.slane %v2701, %v2708
        %v2711 = vunpack.c.l.s4 1966171168
        %v2712 = vunpack.c.0.s8 %v2711
        %v2713 = vlaneseq
        %v2714 = vshrl.u32 %v2713, 7
        %v2715 = vsub.s32 %v2712, %v2714
        %v2716 = vrot.slane %v2702, %v2715
        %v2717 = vcombine.high %v2709, %v2709
        %v2718 = vcombine.high %v2716, %v2716
        %s2723 = scalar_lea.vmem %s229, 8 [#allocation5]
        %2724 = vst.msk [vmem:[%s2723] sm:$0x1] %vm2269, %v2709
        %2725 = vst.msk [vmem:[%s2723 + $0x10] sm:$0x1] %vm2269, %v2716
        %2726 = vst.msk [vmem:[%s2723 + $0x20] sm:$0x1] %vm2269, %v2717
        %2727 = vst.msk [vmem:[%s2723 + $0x30] sm:$0x1] %vm2269, %v2718
        %2728 = vrot.lane.b32.xlu0 %v2155, 48
        %v2729 = vpop.permute.xlu0 %2728
        %2731 = vrot.lane.b32.xlu0 %v2162, 64
        %v2732 = vpop.permute.xlu0 %2731
        %v2734 = vsel %vm430, %v2729, %v2732
        %v2736 = vsel %vm432, %v2734, 0
        %2738 = vmatprep.subr.mxu0 0.0
        %2739 = vmatpush1.msra.mxu0 %v2157
        %2740 = vmatprep.subr.mxu0 0.0
        %2741 = vmatpush1.msra.mxu0 %v2158
        %2742 = vmatprep.subr.mxu0 0.0
        %2743 = vmatpush1.msra.mxu0 %v2159
        %2744 = vmatprep.subr.mxu0 0.0
        %2745 = vmatpush1.msra.mxu0 %v2160
        %2746 = vmatprep.subr.mxu0 0.0
        %2747 = vmatpush1.msra.mxu0 0.0
        %2748 = vmatprep.subr.mxu0 0.0
        %2749 = vmatpush1.msra.mxu0 0.0
        %2750 = vmatprep.subr.mxu0 0.0
        %2751 = vmatpush1.msra.mxu0 0.0
        %2752 = vmatprep.subr.mxu0 0.0
        %2753 = vmatpush1.msra.mxu0 0.0
        %2754 = vmatprep.subr.mxu0 0.0
        %2755 = vmatpush1.msra.mxu0 0.0
        %2756 = vmatprep.subr.mxu0 0.0
        %2757 = vmatpush1.msra.mxu0 0.0
        %2758 = vmatprep.subr.mxu0 0.0
        %2759 = vmatpush1.msra.mxu0 0.0
        %2760 = vmatprep.subr.mxu0 0.0
        %2761 = vmatpush1.msra.mxu0 0.0
        %2762 = vmatprep.subr.mxu0 0.0
        %2763 = vmatpush1.msra.mxu0 0.0
        %2764 = vmatprep.subr.mxu0 0.0
        %2765 = vmatpush1.msra.mxu0 0.0
        %2766 = vmatprep.subr.mxu0 0.0
        %2767 = vmatpush1.msra.mxu0 0.0
        %2768 = vmatprep.subr.mxu0 0.0
        %2769 = vmatpush1.msra.mxu0 0.0
        %2770 = vmatprep.subr.mxu0 0.0
        %2771 = vmatpush1.msra.mxu0 0.0
        %2772 = vmatprep.subr.mxu0 0.0
        %2773 = vmatpush1.msra.mxu0 0.0
        %2774 = vmatprep.subr.mxu0 0.0
        %2775 = vmatpush1.msra.mxu0 0.0
        %2776 = vmatprep.subr.mxu0 0.0
        %2777 = vmatpush1.msra.mxu0 0.0
        %2778 = vmatprep.subr.mxu0 0.0
        %2779 = vmatpush1.msra.mxu0 0.0
        %2780 = vmatprep.subr.mxu0 0.0
        %2781 = vmatpush1.msra.mxu0 0.0
        %2782 = vmatprep.subr.mxu0 0.0
        %2783 = vmatpush1.msra.mxu0 0.0
        %2784 = vmatprep.subr.mxu0 0.0
        %2785 = vmatpush1.msra.mxu0 0.0
        %2786 = vmatprep.subr.mxu0 0.0
        %2787 = vmatpush1.msra.mxu0 0.0
        %2788 = vmatprep.subr.mxu0 0.0
        %2789 = vmatpush1.msra.mxu0 0.0
        %2790 = vmatprep.subr.mxu0 0.0
        %2791 = vmatpush1.msra.mxu0 0.0
        %2792 = vmatprep.subr.mxu0 0.0
        %2793 = vmatpush1.msra.mxu0 0.0
        %2794 = vmatprep.subr.mxu0 0.0
        %2795 = vmatpush1.msra.mxu0 0.0
        %2796 = vmatprep.subr.mxu0 0.0
        %2797 = vmatpush1.msra.mxu0 0.0
        %2798 = vmatprep.subr.mxu0 0.0
        %2799 = vmatpush1.msra.mxu0 0.0
        %2800 = vmatprep.subr.mxu0 0.0
        %2801 = vmatpush1.msra.mxu0 0.0
        %2802 = vmatprep.mubr.f32.mxu0 0.0
        %2803 = vmatmul.mubr.f32.gmra.mrb[0].mxu0 %v2736
        %v2804 = vpop.f32.mrb[0].mxu0
        %v2805 = vadd.f32 0.0, %v2804
        %v2806 = vpop.f32.mrb[0].mxu0
        %2807 = vdwg.mxu0
        %v2810 = vunpack.c.l.s4 1966171168
        %v2811 = vunpack.c.0.s8 %v2810
        %v2812 = vlaneseq
        %v2813 = vshrl.u32 %v2812, 7
        %v2814 = vsub.s32 %v2811, %v2813
        %v2815 = vrot.slane %v2805, %v2814
        %v2816 = vcombine.high %v2815, %v2815
        %v2818 = vunpack.c.l.s4 1966171168
        %v2819 = vunpack.c.0.s8 %v2818
        %v2820 = vlaneseq
        %v2821 = vshrl.u32 %v2820, 7
        %v2822 = vsub.s32 %v2819, %v2821
        %v2823 = vrot.slane %v2815, %v2822
        %v2825 = vunpack.c.l.s4 1966171168
        %v2826 = vunpack.c.0.s8 %v2825
        %v2827 = vlaneseq
        %v2828 = vshrl.u32 %v2827, 7
        %v2829 = vsub.s32 %v2826, %v2828
        %v2830 = vrot.slane %v2816, %v2829
        %v2831 = vcombine.high %v2823, %v2823
        %v2832 = vcombine.high %v2830, %v2830
        %s2837 = scalar_lea.vmem %s229, 10 [#allocation5]
        %2838 = vst.msk [vmem:[%s2837] sm:$0x1] %vm2269, %v2823
        %2839 = vst.msk [vmem:[%s2837 + $0x10] sm:$0x1] %vm2269, %v2830
        %2840 = vst.msk [vmem:[%s2837 + $0x20] sm:$0x1] %vm2269, %v2831
        %2841 = vst.msk [vmem:[%s2837 + $0x30] sm:$0x1] %vm2269, %v2832
        %2842 = vrot.lane.b32.xlu0 %v2155, 32
        %v2843 = vpop.permute.xlu0 %2842
        %2845 = vrot.lane.b32.xlu0 %v2162, 48
        %v2846 = vpop.permute.xlu0 %2845
        %v2848 = vsel %vm430, %v2843, %v2846
        %v2850 = vsel %vm432, %v2848, 0
        %2852 = vmatprep.subr.mxu0 0.0
        %2853 = vmatpush1.msra.mxu0 %v2157
        %2854 = vmatprep.subr.mxu0 0.0
        %2855 = vmatpush1.msra.mxu0 %v2158
        %2856 = vmatprep.subr.mxu0 0.0
        %2857 = vmatpush1.msra.mxu0 %v2159
        %2858 = vmatprep.subr.mxu0 0.0
        %2859 = vmatpush1.msra.mxu0 %v2160
        %2860 = vmatprep.subr.mxu0 0.0
        %2861 = vmatpush1.msra.mxu0 0.0
        %2862 = vmatprep.subr.mxu0 0.0
        %2863 = vmatpush1.msra.mxu0 0.0
        %2864 = vmatprep.subr.mxu0 0.0
        %2865 = vmatpush1.msra.mxu0 0.0
        %2866 = vmatprep.subr.mxu0 0.0
        %2867 = vmatpush1.msra.mxu0 0.0
        %2868 = vmatprep.subr.mxu0 0.0
        %2869 = vmatpush1.msra.mxu0 0.0
        %2870 = vmatprep.subr.mxu0 0.0
        %2871 = vmatpush1.msra.mxu0 0.0
        %2872 = vmatprep.subr.mxu0 0.0
        %2873 = vmatpush1.msra.mxu0 0.0
        %2874 = vmatprep.subr.mxu0 0.0
        %2875 = vmatpush1.msra.mxu0 0.0
        %2876 = vmatprep.subr.mxu0 0.0
        %2877 = vmatpush1.msra.mxu0 0.0
        %2878 = vmatprep.subr.mxu0 0.0
        %2879 = vmatpush1.msra.mxu0 0.0
        %2880 = vmatprep.subr.mxu0 0.0
        %2881 = vmatpush1.msra.mxu0 0.0
        %2882 = vmatprep.subr.mxu0 0.0
        %2883 = vmatpush1.msra.mxu0 0.0
        %2884 = vmatprep.subr.mxu0 0.0
        %2885 = vmatpush1.msra.mxu0 0.0
        %2886 = vmatprep.subr.mxu0 0.0
        %2887 = vmatpush1.msra.mxu0 0.0
        %2888 = vmatprep.subr.mxu0 0.0
        %2889 = vmatpush1.msra.mxu0 0.0
        %2890 = vmatprep.subr.mxu0 0.0
        %2891 = vmatpush1.msra.mxu0 0.0
        %2892 = vmatprep.subr.mxu0 0.0
        %2893 = vmatpush1.msra.mxu0 0.0
        %2894 = vmatprep.subr.mxu0 0.0
        %2895 = vmatpush1.msra.mxu0 0.0
        %2896 = vmatprep.subr.mxu0 0.0
        %2897 = vmatpush1.msra.mxu0 0.0
        %2898 = vmatprep.subr.mxu0 0.0
        %2899 = vmatpush1.msra.mxu0 0.0
        %2900 = vmatprep.subr.mxu0 0.0
        %2901 = vmatpush1.msra.mxu0 0.0
        %2902 = vmatprep.subr.mxu0 0.0
        %2903 = vmatpush1.msra.mxu0 0.0
        %2904 = vmatprep.subr.mxu0 0.0
        %2905 = vmatpush1.msra.mxu0 0.0
        %2906 = vmatprep.subr.mxu0 0.0
        %2907 = vmatpush1.msra.mxu0 0.0
        %2908 = vmatprep.subr.mxu0 0.0
        %2909 = vmatpush1.msra.mxu0 0.0
        %2910 = vmatprep.subr.mxu0 0.0
        %2911 = vmatpush1.msra.mxu0 0.0
        %2912 = vmatprep.subr.mxu0 0.0
        %2913 = vmatpush1.msra.mxu0 0.0
        %2914 = vmatprep.subr.mxu0 0.0
        %2915 = vmatpush1.msra.mxu0 0.0
        %2916 = vmatprep.mubr.f32.mxu0 0.0
        %2917 = vmatmul.mubr.f32.gmra.mrb[0].mxu0 %v2850
        %v2918 = vpop.f32.mrb[0].mxu0
        %v2919 = vadd.f32 0.0, %v2918
        %v2920 = vpop.f32.mrb[0].mxu0
        %2921 = vdwg.mxu0
        %v2924 = vunpack.c.l.s4 1966171168
        %v2925 = vunpack.c.0.s8 %v2924
        %v2926 = vlaneseq
        %v2927 = vshrl.u32 %v2926, 7
        %v2928 = vsub.s32 %v2925, %v2927
        %v2929 = vrot.slane %v2919, %v2928
        %v2930 = vcombine.high %v2929, %v2929
        %v2932 = vunpack.c.l.s4 1966171168
        %v2933 = vunpack.c.0.s8 %v2932
        %v2934 = vlaneseq
        %v2935 = vshrl.u32 %v2934, 7
        %v2936 = vsub.s32 %v2933, %v2935
        %v2937 = vrot.slane %v2929, %v2936
        %v2939 = vunpack.c.l.s4 1966171168
        %v2940 = vunpack.c.0.s8 %v2939
        %v2941 = vlaneseq
        %v2942 = vshrl.u32 %v2941, 7
        %v2943 = vsub.s32 %v2940, %v2942
        %v2944 = vrot.slane %v2930, %v2943
        %v2945 = vcombine.high %v2937, %v2937
        %v2946 = vcombine.high %v2944, %v2944
        %s2951 = scalar_lea.vmem %s229, 12 [#allocation5]
        %2952 = vst.msk [vmem:[%s2951] sm:$0x1] %vm2269, %v2937
        %2953 = vst.msk [vmem:[%s2951 + $0x10] sm:$0x1] %vm2269, %v2944
        %2954 = vst.msk [vmem:[%s2951 + $0x20] sm:$0x1] %vm2269, %v2945
        %2955 = vst.msk [vmem:[%s2951 + $0x30] sm:$0x1] %vm2269, %v2946
        %2956 = vrot.lane.b32.xlu0 %v2155, 16
        %v2957 = vpop.permute.xlu0 %2956
        %2959 = vrot.lane.b32.xlu0 %v2162, 32
        %v2960 = vpop.permute.xlu0 %2959
        %v2962 = vsel %vm430, %v2957, %v2960
        %v2964 = vsel %vm432, %v2962, 0
        %2966 = vmatprep.subr.mxu0 0.0
        %2967 = vmatpush1.msra.mxu0 %v2157
        %2968 = vmatprep.subr.mxu0 0.0
        %2969 = vmatpush1.msra.mxu0 %v2158
        %2970 = vmatprep.subr.mxu0 0.0
        %2971 = vmatpush1.msra.mxu0 %v2159
        %2972 = vmatprep.subr.mxu0 0.0
        %2973 = vmatpush1.msra.mxu0 %v2160
        %2974 = vmatprep.subr.mxu0 0.0
        %2975 = vmatpush1.msra.mxu0 0.0
        %2976 = vmatprep.subr.mxu0 0.0
        %2977 = vmatpush1.msra.mxu0 0.0
        %2978 = vmatprep.subr.mxu0 0.0
        %2979 = vmatpush1.msra.mxu0 0.0
        %2980 = vmatprep.subr.mxu0 0.0
        %2981 = vmatpush1.msra.mxu0 0.0
        %2982 = vmatprep.subr.mxu0 0.0
        %2983 = vmatpush1.msra.mxu0 0.0
        %2984 = vmatprep.subr.mxu0 0.0
        %2985 = vmatpush1.msra.mxu0 0.0
        %2986 = vmatprep.subr.mxu0 0.0
        %2987 = vmatpush1.msra.mxu0 0.0
        %2988 = vmatprep.subr.mxu0 0.0
        %2989 = vmatpush1.msra.mxu0 0.0
        %2990 = vmatprep.subr.mxu0 0.0
        %2991 = vmatpush1.msra.mxu0 0.0
        %2992 = vmatprep.subr.mxu0 0.0
        %2993 = vmatpush1.msra.mxu0 0.0
        %2994 = vmatprep.subr.mxu0 0.0
        %2995 = vmatpush1.msra.mxu0 0.0
        %2996 = vmatprep.subr.mxu0 0.0
        %2997 = vmatpush1.msra.mxu0 0.0
        %2998 = vmatprep.subr.mxu0 0.0
        %2999 = vmatpush1.msra.mxu0 0.0
        %3000 = vmatprep.subr.mxu0 0.0
        %3001 = vmatpush1.msra.mxu0 0.0
        %3002 = vmatprep.subr.mxu0 0.0
        %3003 = vmatpush1.msra.mxu0 0.0
        %3004 = vmatprep.subr.mxu0 0.0
        %3005 = vmatpush1.msra.mxu0 0.0
        %3006 = vmatprep.subr.mxu0 0.0
        %3007 = vmatpush1.msra.mxu0 0.0
        %3008 = vmatprep.subr.mxu0 0.0
        %3009 = vmatpush1.msra.mxu0 0.0
        %3010 = vmatprep.subr.mxu0 0.0
        %3011 = vmatpush1.msra.mxu0 0.0
        %3012 = vmatprep.subr.mxu0 0.0
        %3013 = vmatpush1.msra.mxu0 0.0
        %3014 = vmatprep.subr.mxu0 0.0
        %3015 = vmatpush1.msra.mxu0 0.0
        %3016 = vmatprep.subr.mxu0 0.0
        %3017 = vmatpush1.msra.mxu0 0.0
        %3018 = vmatprep.subr.mxu0 0.0
        %3019 = vmatpush1.msra.mxu0 0.0
        %3020 = vmatprep.subr.mxu0 0.0
        %3021 = vmatpush1.msra.mxu0 0.0
        %3022 = vmatprep.subr.mxu0 0.0
        %3023 = vmatpush1.msra.mxu0 0.0
        %3024 = vmatprep.subr.mxu0 0.0
        %3025 = vmatpush1.msra.mxu0 0.0
        %3026 = vmatprep.subr.mxu0 0.0
        %3027 = vmatpush1.msra.mxu0 0.0
        %3028 = vmatprep.subr.mxu0 0.0
        %3029 = vmatpush1.msra.mxu0 0.0
        %3030 = vmatprep.mubr.f32.mxu0 0.0
        %3031 = vmatmul.mubr.f32.gmra.mrb[0].mxu0 %v2964
        %v3032 = vpop.f32.mrb[0].mxu0
        %v3033 = vadd.f32 0.0, %v3032
        %v3034 = vpop.f32.mrb[0].mxu0
        %3035 = vdwg.mxu0
        %v3038 = vunpack.c.l.s4 1966171168
        %v3039 = vunpack.c.0.s8 %v3038
        %v3040 = vlaneseq
        %v3041 = vshrl.u32 %v3040, 7
        %v3042 = vsub.s32 %v3039, %v3041
        %v3043 = vrot.slane %v3033, %v3042
        %v3044 = vcombine.high %v3043, %v3043
        %v3046 = vunpack.c.l.s4 1966171168
        %v3047 = vunpack.c.0.s8 %v3046
        %v3048 = vlaneseq
        %v3049 = vshrl.u32 %v3048, 7
        %v3050 = vsub.s32 %v3047, %v3049
        %v3051 = vrot.slane %v3043, %v3050
        %v3053 = vunpack.c.l.s4 1966171168
        %v3054 = vunpack.c.0.s8 %v3053
        %v3055 = vlaneseq
        %v3056 = vshrl.u32 %v3055, 7
        %v3057 = vsub.s32 %v3054, %v3056
        %v3058 = vrot.slane %v3044, %v3057
        %v3059 = vcombine.high %v3051, %v3051
        %v3060 = vcombine.high %v3058, %v3058
        %s3065 = scalar_lea.vmem %s229, 14 [#allocation5]
        %3066 = vst.msk [vmem:[%s3065] sm:$0x1] %vm2269, %v3051
        %3067 = vst.msk [vmem:[%s3065 + $0x10] sm:$0x1] %vm2269, %v3058
        %3068 = vst.msk [vmem:[%s3065 + $0x20] sm:$0x1] %vm2269, %v3059
        %3069 = vst.msk [vmem:[%s3065 + $0x30] sm:$0x1] %vm2269, %v3060
        %v3071 = vrot.slane %v2156, 4
        %3072 = vrot.lane.b32.xlu0 %v3071, 16
        %v3073 = vpop.permute.xlu0 %3072
        %v3075 = vsel %vm430, %v2156, %v3073
        %v3077 = vsel %vm432, %v3075, 0
        %3079 = vmatprep.subr.mxu0 0.0
        %3080 = vmatpush1.msra.mxu0 %v2157
        %3081 = vmatprep.subr.mxu0 0.0
        %3082 = vmatpush1.msra.mxu0 %v2158
        %3083 = vmatprep.subr.mxu0 0.0
        %3084 = vmatpush1.msra.mxu0 %v2159
        %3085 = vmatprep.subr.mxu0 0.0
        %3086 = vmatpush1.msra.mxu0 %v2160
        %3087 = vmatprep.subr.mxu0 0.0
        %3088 = vmatpush1.msra.mxu0 0.0
        %3089 = vmatprep.subr.mxu0 0.0
        %3090 = vmatpush1.msra.mxu0 0.0
        %3091 = vmatprep.subr.mxu0 0.0
        %3092 = vmatpush1.msra.mxu0 0.0
        %3093 = vmatprep.subr.mxu0 0.0
        %3094 = vmatpush1.msra.mxu0 0.0
        %3095 = vmatprep.subr.mxu0 0.0
        %3096 = vmatpush1.msra.mxu0 0.0
        %3097 = vmatprep.subr.mxu0 0.0
        %3098 = vmatpush1.msra.mxu0 0.0
        %3099 = vmatprep.subr.mxu0 0.0
        %3100 = vmatpush1.msra.mxu0 0.0
        %3101 = vmatprep.subr.mxu0 0.0
        %3102 = vmatpush1.msra.mxu0 0.0
        %3103 = vmatprep.subr.mxu0 0.0
        %3104 = vmatpush1.msra.mxu0 0.0
        %3105 = vmatprep.subr.mxu0 0.0
        %3106 = vmatpush1.msra.mxu0 0.0
        %3107 = vmatprep.subr.mxu0 0.0
        %3108 = vmatpush1.msra.mxu0 0.0
        %3109 = vmatprep.subr.mxu0 0.0
        %3110 = vmatpush1.msra.mxu0 0.0
        %3111 = vmatprep.subr.mxu0 0.0
        %3112 = vmatpush1.msra.mxu0 0.0
        %3113 = vmatprep.subr.mxu0 0.0
        %3114 = vmatpush1.msra.mxu0 0.0
        %3115 = vmatprep.subr.mxu0 0.0
        %3116 = vmatpush1.msra.mxu0 0.0
        %3117 = vmatprep.subr.mxu0 0.0
        %3118 = vmatpush1.msra.mxu0 0.0
        %3119 = vmatprep.subr.mxu0 0.0
        %3120 = vmatpush1.msra.mxu0 0.0
        %3121 = vmatprep.subr.mxu0 0.0
        %3122 = vmatpush1.msra.mxu0 0.0
        %3123 = vmatprep.subr.mxu0 0.0
        %3124 = vmatpush1.msra.mxu0 0.0
        %3125 = vmatprep.subr.mxu0 0.0
        %3126 = vmatpush1.msra.mxu0 0.0
        %3127 = vmatprep.subr.mxu0 0.0
        %3128 = vmatpush1.msra.mxu0 0.0
        %3129 = vmatprep.subr.mxu0 0.0
        %3130 = vmatpush1.msra.mxu0 0.0
        %3131 = vmatprep.subr.mxu0 0.0
        %3132 = vmatpush1.msra.mxu0 0.0
        %3133 = vmatprep.subr.mxu0 0.0
        %3134 = vmatpush1.msra.mxu0 0.0
        %3135 = vmatprep.subr.mxu0 0.0
        %3136 = vmatpush1.msra.mxu0 0.0
        %3137 = vmatprep.subr.mxu0 0.0
        %3138 = vmatpush1.msra.mxu0 0.0
        %3139 = vmatprep.subr.mxu0 0.0
        %3140 = vmatpush1.msra.mxu0 0.0
        %3141 = vmatprep.subr.mxu0 0.0
        %3142 = vmatpush1.msra.mxu0 0.0
        %3143 = vmatprep.mubr.f32.mxu0 0.0
        %3144 = vmatmul.mubr.f32.gmra.mrb[0].mxu0 %v3077
        %v3145 = vpop.f32.mrb[0].mxu0
        %v3146 = vadd.f32 0.0, %v3145
        %v3147 = vpop.f32.mrb[0].mxu0
        %3148 = vdwg.mxu0
        %v3151 = vunpack.c.l.s4 1966171168
        %v3152 = vunpack.c.0.s8 %v3151
        %v3153 = vlaneseq
        %v3154 = vshrl.u32 %v3153, 7
        %v3155 = vsub.s32 %v3152, %v3154
        %v3156 = vrot.slane %v3146, %v3155
        %v3157 = vcombine.high %v3156, %v3156
        %v3159 = vunpack.c.l.s4 1966171168
        %v3160 = vunpack.c.0.s8 %v3159
        %v3161 = vlaneseq
        %v3162 = vshrl.u32 %v3161, 7
        %v3163 = vsub.s32 %v3160, %v3162
        %v3164 = vrot.slane %v3156, %v3163
        %v3166 = vunpack.c.l.s4 1966171168
        %v3167 = vunpack.c.0.s8 %v3166
        %v3168 = vlaneseq
        %v3169 = vshrl.u32 %v3168, 7
        %v3170 = vsub.s32 %v3167, %v3169
        %v3171 = vrot.slane %v3157, %v3170
        %v3172 = vcombine.high %v3164, %v3164
        %v3173 = vcombine.high %v3171, %v3171
        %3178 = vst.msk [vmem:[%s229 + $0x1] sm:$0x1] %vm2269, %v3164
        %3179 = vst.msk [vmem:[%s229 + $0x11] sm:$0x1] %vm2269, %v3171
        %3180 = vst.msk [vmem:[%s229 + $0x21] sm:$0x1] %vm2269, %v3172
        %3181 = vst.msk [vmem:[%s229 + $0x31] sm:$0x1] %vm2269, %v3173
        %3182 = vrot.lane.b32.xlu0 %v2156, 112
        %v3183 = vpop.permute.xlu0 %3182
        %v3186 = vsel %vm430, %v3183, %v3071
        %v3188 = vsel %vm432, %v3186, 0
        %3190 = vmatprep.subr.mxu0 0.0
        %3191 = vmatpush1.msra.mxu0 %v2157
        %3192 = vmatprep.subr.mxu0 0.0
        %3193 = vmatpush1.msra.mxu0 %v2158
        %3194 = vmatprep.subr.mxu0 0.0
        %3195 = vmatpush1.msra.mxu0 %v2159
        %3196 = vmatprep.subr.mxu0 0.0
        %3197 = vmatpush1.msra.mxu0 %v2160
        %3198 = vmatprep.subr.mxu0 0.0
        %3199 = vmatpush1.msra.mxu0 0.0
        %3200 = vmatprep.subr.mxu0 0.0
        %3201 = vmatpush1.msra.mxu0 0.0
        %3202 = vmatprep.subr.mxu0 0.0
        %3203 = vmatpush1.msra.mxu0 0.0
        %3204 = vmatprep.subr.mxu0 0.0
        %3205 = vmatpush1.msra.mxu0 0.0
        %3206 = vmatprep.subr.mxu0 0.0
        %3207 = vmatpush1.msra.mxu0 0.0
        %3208 = vmatprep.subr.mxu0 0.0
        %3209 = vmatpush1.msra.mxu0 0.0
        %3210 = vmatprep.subr.mxu0 0.0
        %3211 = vmatpush1.msra.mxu0 0.0
        %3212 = vmatprep.subr.mxu0 0.0
        %3213 = vmatpush1.msra.mxu0 0.0
        %3214 = vmatprep.subr.mxu0 0.0
        %3215 = vmatpush1.msra.mxu0 0.0
        %3216 = vmatprep.subr.mxu0 0.0
        %3217 = vmatpush1.msra.mxu0 0.0
        %3218 = vmatprep.subr.mxu0 0.0
        %3219 = vmatpush1.msra.mxu0 0.0
        %3220 = vmatprep.subr.mxu0 0.0
        %3221 = vmatpush1.msra.mxu0 0.0
        %3222 = vmatprep.subr.mxu0 0.0
        %3223 = vmatpush1.msra.mxu0 0.0
        %3224 = vmatprep.subr.mxu0 0.0
        %3225 = vmatpush1.msra.mxu0 0.0
        %3226 = vmatprep.subr.mxu0 0.0
        %3227 = vmatpush1.msra.mxu0 0.0
        %3228 = vmatprep.subr.mxu0 0.0
        %3229 = vmatpush1.msra.mxu0 0.0
        %3230 = vmatprep.subr.mxu0 0.0
        %3231 = vmatpush1.msra.mxu0 0.0
        %3232 = vmatprep.subr.mxu0 0.0
        %3233 = vmatpush1.msra.mxu0 0.0
        %3234 = vmatprep.subr.mxu0 0.0
        %3235 = vmatpush1.msra.mxu0 0.0
        %3236 = vmatprep.subr.mxu0 0.0
        %3237 = vmatpush1.msra.mxu0 0.0
        %3238 = vmatprep.subr.mxu0 0.0
        %3239 = vmatpush1.msra.mxu0 0.0
        %3240 = vmatprep.subr.mxu0 0.0
        %3241 = vmatpush1.msra.mxu0 0.0
        %3242 = vmatprep.subr.mxu0 0.0
        %3243 = vmatpush1.msra.mxu0 0.0
        %3244 = vmatprep.subr.mxu0 0.0
        %3245 = vmatpush1.msra.mxu0 0.0
        %3246 = vmatprep.subr.mxu0 0.0
        %3247 = vmatpush1.msra.mxu0 0.0
        %3248 = vmatprep.subr.mxu0 0.0
        %3249 = vmatpush1.msra.mxu0 0.0
        %3250 = vmatprep.subr.mxu0 0.0
        %3251 = vmatpush1.msra.mxu0 0.0
        %3252 = vmatprep.subr.mxu0 0.0
        %3253 = vmatpush1.msra.mxu0 0.0
        %3254 = vmatprep.mubr.f32.mxu0 0.0
        %3255 = vmatmul.mubr.f32.gmra.mrb[0].mxu0 %v3188
        %v3256 = vpop.f32.mrb[0].mxu0
        %v3257 = vadd.f32 0.0, %v3256
        %v3258 = vpop.f32.mrb[0].mxu0
        %3259 = vdwg.mxu0
        %v3262 = vunpack.c.l.s4 1966171168
        %v3263 = vunpack.c.0.s8 %v3262
        %v3264 = vlaneseq
        %v3265 = vshrl.u32 %v3264, 7
        %v3266 = vsub.s32 %v3263, %v3265
        %v3267 = vrot.slane %v3257, %v3266
        %v3268 = vcombine.high %v3267, %v3267
        %v3270 = vunpack.c.l.s4 1966171168
        %v3271 = vunpack.c.0.s8 %v3270
        %v3272 = vlaneseq
        %v3273 = vshrl.u32 %v3272, 7
        %v3274 = vsub.s32 %v3271, %v3273
        %v3275 = vrot.slane %v3267, %v3274
        %v3277 = vunpack.c.l.s4 1966171168
        %v3278 = vunpack.c.0.s8 %v3277
        %v3279 = vlaneseq
        %v3280 = vshrl.u32 %v3279, 7
        %v3281 = vsub.s32 %v3278, %v3280
        %v3282 = vrot.slane %v3268, %v3281
        %v3283 = vcombine.high %v3275, %v3275
        %v3284 = vcombine.high %v3282, %v3282
        %3289 = vst.msk [vmem:[%s2381 + $0x1] sm:$0x1] %vm2269, %v3275
        %3290 = vst.msk [vmem:[%s2381 + $0x11] sm:$0x1] %vm2269, %v3282
        %3291 = vst.msk [vmem:[%s2381 + $0x21] sm:$0x1] %vm2269, %v3283
        %3292 = vst.msk [vmem:[%s2381 + $0x31] sm:$0x1] %vm2269, %v3284
        %3293 = vrot.lane.b32.xlu0 %v2156, 96
        %v3294 = vpop.permute.xlu0 %3293
        %3296 = vrot.lane.b32.xlu0 %v3071, 112
        %v3297 = vpop.permute.xlu0 %3296
        %v3299 = vsel %vm430, %v3294, %v3297
        %v3301 = vsel %vm432, %v3299, 0
        %3303 = vmatprep.subr.mxu0 0.0
        %3304 = vmatpush1.msra.mxu0 %v2157
        %3305 = vmatprep.subr.mxu0 0.0
        %3306 = vmatpush1.msra.mxu0 %v2158
        %3307 = vmatprep.subr.mxu0 0.0
        %3308 = vmatpush1.msra.mxu0 %v2159
        %3309 = vmatprep.subr.mxu0 0.0
        %3310 = vmatpush1.msra.mxu0 %v2160
        %3311 = vmatprep.subr.mxu0 0.0
        %3312 = vmatpush1.msra.mxu0 0.0
        %3313 = vmatprep.subr.mxu0 0.0
        %3314 = vmatpush1.msra.mxu0 0.0
        %3315 = vmatprep.subr.mxu0 0.0
        %3316 = vmatpush1.msra.mxu0 0.0
        %3317 = vmatprep.subr.mxu0 0.0
        %3318 = vmatpush1.msra.mxu0 0.0
        %3319 = vmatprep.subr.mxu0 0.0
        %3320 = vmatpush1.msra.mxu0 0.0
        %3321 = vmatprep.subr.mxu0 0.0
        %3322 = vmatpush1.msra.mxu0 0.0
        %3323 = vmatprep.subr.mxu0 0.0
        %3324 = vmatpush1.msra.mxu0 0.0
        %3325 = vmatprep.subr.mxu0 0.0
        %3326 = vmatpush1.msra.mxu0 0.0
        %3327 = vmatprep.subr.mxu0 0.0
        %3328 = vmatpush1.msra.mxu0 0.0
        %3329 = vmatprep.subr.mxu0 0.0
        %3330 = vmatpush1.msra.mxu0 0.0
        %3331 = vmatprep.subr.mxu0 0.0
        %3332 = vmatpush1.msra.mxu0 0.0
        %3333 = vmatprep.subr.mxu0 0.0
        %3334 = vmatpush1.msra.mxu0 0.0
        %3335 = vmatprep.subr.mxu0 0.0
        %3336 = vmatpush1.msra.mxu0 0.0
        %3337 = vmatprep.subr.mxu0 0.0
        %3338 = vmatpush1.msra.mxu0 0.0
        %3339 = vmatprep.subr.mxu0 0.0
        %3340 = vmatpush1.msra.mxu0 0.0
        %3341 = vmatprep.subr.mxu0 0.0
        %3342 = vmatpush1.msra.mxu0 0.0
        %3343 = vmatprep.subr.mxu0 0.0
        %3344 = vmatpush1.msra.mxu0 0.0
        %3345 = vmatprep.subr.mxu0 0.0
        %3346 = vmatpush1.msra.mxu0 0.0
        %3347 = vmatprep.subr.mxu0 0.0
        %3348 = vmatpush1.msra.mxu0 0.0
        %3349 = vmatprep.subr.mxu0 0.0
        %3350 = vmatpush1.msra.mxu0 0.0
        %3351 = vmatprep.subr.mxu0 0.0
        %3352 = vmatpush1.msra.mxu0 0.0
        %3353 = vmatprep.subr.mxu0 0.0
        %3354 = vmatpush1.msra.mxu0 0.0
        %3355 = vmatprep.subr.mxu0 0.0
        %3356 = vmatpush1.msra.mxu0 0.0
        %3357 = vmatprep.subr.mxu0 0.0
        %3358 = vmatpush1.msra.mxu0 0.0
        %3359 = vmatprep.subr.mxu0 0.0
        %3360 = vmatpush1.msra.mxu0 0.0
        %3361 = vmatprep.subr.mxu0 0.0
        %3362 = vmatpush1.msra.mxu0 0.0
        %3363 = vmatprep.subr.mxu0 0.0
        %3364 = vmatpush1.msra.mxu0 0.0
        %3365 = vmatprep.subr.mxu0 0.0
        %3366 = vmatpush1.msra.mxu0 0.0
        %3367 = vmatprep.mubr.f32.mxu0 0.0
        %3368 = vmatmul.mubr.f32.gmra.mrb[0].mxu0 %v3301
        %v3369 = vpop.f32.mrb[0].mxu0
        %v3370 = vadd.f32 0.0, %v3369
        %v3371 = vpop.f32.mrb[0].mxu0
        %3372 = vdwg.mxu0
        %v3375 = vunpack.c.l.s4 1966171168
        %v3376 = vunpack.c.0.s8 %v3375
        %v3377 = vlaneseq
        %v3378 = vshrl.u32 %v3377, 7
        %v3379 = vsub.s32 %v3376, %v3378
        %v3380 = vrot.slane %v3370, %v3379
        %v3381 = vcombine.high %v3380, %v3380
        %v3383 = vunpack.c.l.s4 1966171168
        %v3384 = vunpack.c.0.s8 %v3383
        %v3385 = vlaneseq
        %v3386 = vshrl.u32 %v3385, 7
        %v3387 = vsub.s32 %v3384, %v3386
        %v3388 = vrot.slane %v3380, %v3387
        %v3390 = vunpack.c.l.s4 1966171168
        %v3391 = vunpack.c.0.s8 %v3390
        %v3392 = vlaneseq
        %v3393 = vshrl.u32 %v3392, 7
        %v3394 = vsub.s32 %v3391, %v3393
        %v3395 = vrot.slane %v3381, %v3394
        %v3396 = vcombine.high %v3388, %v3388
        %v3397 = vcombine.high %v3395, %v3395
        %3402 = vst.msk [vmem:[%s2495 + $0x1] sm:$0x1] %vm2269, %v3388
        %3403 = vst.msk [vmem:[%s2495 + $0x11] sm:$0x1] %vm2269, %v3395
        %3404 = vst.msk [vmem:[%s2495 + $0x21] sm:$0x1] %vm2269, %v3396
        %3405 = vst.msk [vmem:[%s2495 + $0x31] sm:$0x1] %vm2269, %v3397
        %3406 = vrot.lane.b32.xlu0 %v2156, 80
        %v3407 = vpop.permute.xlu0 %3406
        %3409 = vrot.lane.b32.xlu0 %v3071, 96
        %v3410 = vpop.permute.xlu0 %3409
        %v3412 = vsel %vm430, %v3407, %v3410
        %v3414 = vsel %vm432, %v3412, 0
        %3416 = vmatprep.subr.mxu0 0.0
        %3417 = vmatpush1.msra.mxu0 %v2157
        %3418 = vmatprep.subr.mxu0 0.0
        %3419 = vmatpush1.msra.mxu0 %v2158
        %3420 = vmatprep.subr.mxu0 0.0
        %3421 = vmatpush1.msra.mxu0 %v2159
        %3422 = vmatprep.subr.mxu0 0.0
        %3423 = vmatpush1.msra.mxu0 %v2160
        %3424 = vmatprep.subr.mxu0 0.0
        %3425 = vmatpush1.msra.mxu0 0.0
        %3426 = vmatprep.subr.mxu0 0.0
        %3427 = vmatpush1.msra.mxu0 0.0
        %3428 = vmatprep.subr.mxu0 0.0
        %3429 = vmatpush1.msra.mxu0 0.0
        %3430 = vmatprep.subr.mxu0 0.0
        %3431 = vmatpush1.msra.mxu0 0.0
        %3432 = vmatprep.subr.mxu0 0.0
        %3433 = vmatpush1.msra.mxu0 0.0
        %3434 = vmatprep.subr.mxu0 0.0
        %3435 = vmatpush1.msra.mxu0 0.0
        %3436 = vmatprep.subr.mxu0 0.0
        %3437 = vmatpush1.msra.mxu0 0.0
        %3438 = vmatprep.subr.mxu0 0.0
        %3439 = vmatpush1.msra.mxu0 0.0
        %3440 = vmatprep.subr.mxu0 0.0
        %3441 = vmatpush1.msra.mxu0 0.0
        %3442 = vmatprep.subr.mxu0 0.0
        %3443 = vmatpush1.msra.mxu0 0.0
        %3444 = vmatprep.subr.mxu0 0.0
        %3445 = vmatpush1.msra.mxu0 0.0
        %3446 = vmatprep.subr.mxu0 0.0
        %3447 = vmatpush1.msra.mxu0 0.0
        %3448 = vmatprep.subr.mxu0 0.0
        %3449 = vmatpush1.msra.mxu0 0.0
        %3450 = vmatprep.subr.mxu0 0.0
        %3451 = vmatpush1.msra.mxu0 0.0
        %3452 = vmatprep.subr.mxu0 0.0
        %3453 = vmatpush1.msra.mxu0 0.0
        %3454 = vmatprep.subr.mxu0 0.0
        %3455 = vmatpush1.msra.mxu0 0.0
        %3456 = vmatprep.subr.mxu0 0.0
        %3457 = vmatpush1.msra.mxu0 0.0
        %3458 = vmatprep.subr.mxu0 0.0
        %3459 = vmatpush1.msra.mxu0 0.0
        %3460 = vmatprep.subr.mxu0 0.0
        %3461 = vmatpush1.msra.mxu0 0.0
        %3462 = vmatprep.subr.mxu0 0.0
        %3463 = vmatpush1.msra.mxu0 0.0
        %3464 = vmatprep.subr.mxu0 0.0
        %3465 = vmatpush1.msra.mxu0 0.0
        %3466 = vmatprep.subr.mxu0 0.0
        %3467 = vmatpush1.msra.mxu0 0.0
        %3468 = vmatprep.subr.mxu0 0.0
        %3469 = vmatpush1.msra.mxu0 0.0
        %3470 = vmatprep.subr.mxu0 0.0
        %3471 = vmatpush1.msra.mxu0 0.0
        %3472 = vmatprep.subr.mxu0 0.0
        %3473 = vmatpush1.msra.mxu0 0.0
        %3474 = vmatprep.subr.mxu0 0.0
        %3475 = vmatpush1.msra.mxu0 0.0
        %3476 = vmatprep.subr.mxu0 0.0
        %3477 = vmatpush1.msra.mxu0 0.0
        %3478 = vmatprep.subr.mxu0 0.0
        %3479 = vmatpush1.msra.mxu0 0.0
        %3480 = vmatprep.mubr.f32.mxu0 0.0
        %3481 = vmatmul.mubr.f32.gmra.mrb[0].mxu0 %v3414
        %v3482 = vpop.f32.mrb[0].mxu0
        %v3483 = vadd.f32 0.0, %v3482
        %v3484 = vpop.f32.mrb[0].mxu0
        %3485 = vdwg.mxu0
        %v3488 = vunpack.c.l.s4 1966171168
        %v3489 = vunpack.c.0.s8 %v3488
        %v3490 = vlaneseq
        %v3491 = vshrl.u32 %v3490, 7
        %v3492 = vsub.s32 %v3489, %v3491
        %v3493 = vrot.slane %v3483, %v3492
        %v3494 = vcombine.high %v3493, %v3493
        %v3496 = vunpack.c.l.s4 1966171168
        %v3497 = vunpack.c.0.s8 %v3496
        %v3498 = vlaneseq
        %v3499 = vshrl.u32 %v3498, 7
        %v3500 = vsub.s32 %v3497, %v3499
        %v3501 = vrot.slane %v3493, %v3500
        %v3503 = vunpack.c.l.s4 1966171168
        %v3504 = vunpack.c.0.s8 %v3503
        %v3505 = vlaneseq
        %v3506 = vshrl.u32 %v3505, 7
        %v3507 = vsub.s32 %v3504, %v3506
        %v3508 = vrot.slane %v3494, %v3507
        %v3509 = vcombine.high %v3501, %v3501
        %v3510 = vcombine.high %v3508, %v3508
        %3515 = vst.msk [vmem:[%s2609 + $0x1] sm:$0x1] %vm2269, %v3501
        %3516 = vst.msk [vmem:[%s2609 + $0x11] sm:$0x1] %vm2269, %v3508
        %3517 = vst.msk [vmem:[%s2609 + $0x21] sm:$0x1] %vm2269, %v3509
        %3518 = vst.msk [vmem:[%s2609 + $0x31] sm:$0x1] %vm2269, %v3510
        %3519 = vrot.lane.b32.xlu0 %v2156, 64
        %v3520 = vpop.permute.xlu0 %3519
        %3522 = vrot.lane.b32.xlu0 %v3071, 80
        %v3523 = vpop.permute.xlu0 %3522
        %v3525 = vsel %vm430, %v3520, %v3523
        %v3527 = vsel %vm432, %v3525, 0
        %3529 = vmatprep.subr.mxu0 0.0
        %3530 = vmatpush1.msra.mxu0 %v2157
        %3531 = vmatprep.subr.mxu0 0.0
        %3532 = vmatpush1.msra.mxu0 %v2158
        %3533 = vmatprep.subr.mxu0 0.0
        %3534 = vmatpush1.msra.mxu0 %v2159
        %3535 = vmatprep.subr.mxu0 0.0
        %3536 = vmatpush1.msra.mxu0 %v2160
        %3537 = vmatprep.subr.mxu0 0.0
        %3538 = vmatpush1.msra.mxu0 0.0
        %3539 = vmatprep.subr.mxu0 0.0
        %3540 = vmatpush1.msra.mxu0 0.0
        %3541 = vmatprep.subr.mxu0 0.0
        %3542 = vmatpush1.msra.mxu0 0.0
        %3543 = vmatprep.subr.mxu0 0.0
        %3544 = vmatpush1.msra.mxu0 0.0
        %3545 = vmatprep.subr.mxu0 0.0
        %3546 = vmatpush1.msra.mxu0 0.0
        %3547 = vmatprep.subr.mxu0 0.0
        %3548 = vmatpush1.msra.mxu0 0.0
        %3549 = vmatprep.subr.mxu0 0.0
        %3550 = vmatpush1.msra.mxu0 0.0
        %3551 = vmatprep.subr.mxu0 0.0
        %3552 = vmatpush1.msra.mxu0 0.0
        %3553 = vmatprep.subr.mxu0 0.0
        %3554 = vmatpush1.msra.mxu0 0.0
        %3555 = vmatprep.subr.mxu0 0.0
        %3556 = vmatpush1.msra.mxu0 0.0
        %3557 = vmatprep.subr.mxu0 0.0
        %3558 = vmatpush1.msra.mxu0 0.0
        %3559 = vmatprep.subr.mxu0 0.0
        %3560 = vmatpush1.msra.mxu0 0.0
        %3561 = vmatprep.subr.mxu0 0.0
        %3562 = vmatpush1.msra.mxu0 0.0
        %3563 = vmatprep.subr.mxu0 0.0
        %3564 = vmatpush1.msra.mxu0 0.0
        %3565 = vmatprep.subr.mxu0 0.0
        %3566 = vmatpush1.msra.mxu0 0.0
        %3567 = vmatprep.subr.mxu0 0.0
        %3568 = vmatpush1.msra.mxu0 0.0
        %3569 = vmatprep.subr.mxu0 0.0
        %3570 = vmatpush1.msra.mxu0 0.0
        %3571 = vmatprep.subr.mxu0 0.0
        %3572 = vmatpush1.msra.mxu0 0.0
        %3573 = vmatprep.subr.mxu0 0.0
        %3574 = vmatpush1.msra.mxu0 0.0
        %3575 = vmatprep.subr.mxu0 0.0
        %3576 = vmatpush1.msra.mxu0 0.0
        %3577 = vmatprep.subr.mxu0 0.0
        %3578 = vmatpush1.msra.mxu0 0.0
        %3579 = vmatprep.subr.mxu0 0.0
        %3580 = vmatpush1.msra.mxu0 0.0
        %3581 = vmatprep.subr.mxu0 0.0
        %3582 = vmatpush1.msra.mxu0 0.0
        %3583 = vmatprep.subr.mxu0 0.0
        %3584 = vmatpush1.msra.mxu0 0.0
        %3585 = vmatprep.subr.mxu0 0.0
        %3586 = vmatpush1.msra.mxu0 0.0
        %3587 = vmatprep.subr.mxu0 0.0
        %3588 = vmatpush1.msra.mxu0 0.0
        %3589 = vmatprep.subr.mxu0 0.0
        %3590 = vmatpush1.msra.mxu0 0.0
        %3591 = vmatprep.subr.mxu0 0.0
        %3592 = vmatpush1.msra.mxu0 0.0
        %3593 = vmatprep.mubr.f32.mxu0 0.0
        %3594 = vmatmul.mubr.f32.gmra.mrb[0].mxu0 %v3527
        %v3595 = vpop.f32.mrb[0].mxu0
        %v3596 = vadd.f32 0.0, %v3595
        %v3597 = vpop.f32.mrb[0].mxu0
        %3598 = vdwg.mxu0
        %v3601 = vunpack.c.l.s4 1966171168
        %v3602 = vunpack.c.0.s8 %v3601
        %v3603 = vlaneseq
        %v3604 = vshrl.u32 %v3603, 7
        %v3605 = vsub.s32 %v3602, %v3604
        %v3606 = vrot.slane %v3596, %v3605
        %v3607 = vcombine.high %v3606, %v3606
        %v3609 = vunpack.c.l.s4 1966171168
        %v3610 = vunpack.c.0.s8 %v3609
        %v3611 = vlaneseq
        %v3612 = vshrl.u32 %v3611, 7
        %v3613 = vsub.s32 %v3610, %v3612
        %v3614 = vrot.slane %v3606, %v3613
        %v3616 = vunpack.c.l.s4 1966171168
        %v3617 = vunpack.c.0.s8 %v3616
        %v3618 = vlaneseq
        %v3619 = vshrl.u32 %v3618, 7
        %v3620 = vsub.s32 %v3617, %v3619
        %v3621 = vrot.slane %v3607, %v3620
        %v3622 = vcombine.high %v3614, %v3614
        %v3623 = vcombine.high %v3621, %v3621
        %3628 = vst.msk [vmem:[%s2723 + $0x1] sm:$0x1] %vm2269, %v3614
        %3629 = vst.msk [vmem:[%s2723 + $0x11] sm:$0x1] %vm2269, %v3621
        %3630 = vst.msk [vmem:[%s2723 + $0x21] sm:$0x1] %vm2269, %v3622
        %3631 = vst.msk [vmem:[%s2723 + $0x31] sm:$0x1] %vm2269, %v3623
        %3632 = vrot.lane.b32.xlu0 %v2156, 48
        %v3633 = vpop.permute.xlu0 %3632
        %3635 = vrot.lane.b32.xlu0 %v3071, 64
        %v3636 = vpop.permute.xlu0 %3635
        %v3638 = vsel %vm430, %v3633, %v3636
        %v3640 = vsel %vm432, %v3638, 0
        %3642 = vmatprep.subr.mxu0 0.0
        %3643 = vmatpush1.msra.mxu0 %v2157
        %3644 = vmatprep.subr.mxu0 0.0
        %3645 = vmatpush1.msra.mxu0 %v2158
        %3646 = vmatprep.subr.mxu0 0.0
        %3647 = vmatpush1.msra.mxu0 %v2159
        %3648 = vmatprep.subr.mxu0 0.0
        %3649 = vmatpush1.msra.mxu0 %v2160
        %3650 = vmatprep.subr.mxu0 0.0
        %3651 = vmatpush1.msra.mxu0 0.0
        %3652 = vmatprep.subr.mxu0 0.0
        %3653 = vmatpush1.msra.mxu0 0.0
        %3654 = vmatprep.subr.mxu0 0.0
        %3655 = vmatpush1.msra.mxu0 0.0
        %3656 = vmatprep.subr.mxu0 0.0
        %3657 = vmatpush1.msra.mxu0 0.0
        %3658 = vmatprep.subr.mxu0 0.0
        %3659 = vmatpush1.msra.mxu0 0.0
        %3660 = vmatprep.subr.mxu0 0.0
        %3661 = vmatpush1.msra.mxu0 0.0
        %3662 = vmatprep.subr.mxu0 0.0
        %3663 = vmatpush1.msra.mxu0 0.0
        %3664 = vmatprep.subr.mxu0 0.0
        %3665 = vmatpush1.msra.mxu0 0.0
        %3666 = vmatprep.subr.mxu0 0.0
        %3667 = vmatpush1.msra.mxu0 0.0
        %3668 = vmatprep.subr.mxu0 0.0
        %3669 = vmatpush1.msra.mxu0 0.0
        %3670 = vmatprep.subr.mxu0 0.0
        %3671 = vmatpush1.msra.mxu0 0.0
        %3672 = vmatprep.subr.mxu0 0.0
        %3673 = vmatpush1.msra.mxu0 0.0
        %3674 = vmatprep.subr.mxu0 0.0
        %3675 = vmatpush1.msra.mxu0 0.0
        %3676 = vmatprep.subr.mxu0 0.0
        %3677 = vmatpush1.msra.mxu0 0.0
        %3678 = vmatprep.subr.mxu0 0.0
        %3679 = vmatpush1.msra.mxu0 0.0
        %3680 = vmatprep.subr.mxu0 0.0
        %3681 = vmatpush1.msra.mxu0 0.0
        %3682 = vmatprep.subr.mxu0 0.0
        %3683 = vmatpush1.msra.mxu0 0.0
        %3684 = vmatprep.subr.mxu0 0.0
        %3685 = vmatpush1.msra.mxu0 0.0
        %3686 = vmatprep.subr.mxu0 0.0
        %3687 = vmatpush1.msra.mxu0 0.0
        %3688 = vmatprep.subr.mxu0 0.0
        %3689 = vmatpush1.msra.mxu0 0.0
        %3690 = vmatprep.subr.mxu0 0.0
        %3691 = vmatpush1.msra.mxu0 0.0
        %3692 = vmatprep.subr.mxu0 0.0
        %3693 = vmatpush1.msra.mxu0 0.0
        %3694 = vmatprep.subr.mxu0 0.0
        %3695 = vmatpush1.msra.mxu0 0.0
        %3696 = vmatprep.subr.mxu0 0.0
        %3697 = vmatpush1.msra.mxu0 0.0
        %3698 = vmatprep.subr.mxu0 0.0
        %3699 = vmatpush1.msra.mxu0 0.0
        %3700 = vmatprep.subr.mxu0 0.0
        %3701 = vmatpush1.msra.mxu0 0.0
        %3702 = vmatprep.subr.mxu0 0.0
        %3703 = vmatpush1.msra.mxu0 0.0
        %3704 = vmatprep.subr.mxu0 0.0
        %3705 = vmatpush1.msra.mxu0 0.0
        %3706 = vmatprep.mubr.f32.mxu0 0.0
        %3707 = vmatmul.mubr.f32.gmra.mrb[0].mxu0 %v3640
        %v3708 = vpop.f32.mrb[0].mxu0
        %v3709 = vadd.f32 0.0, %v3708
        %v3710 = vpop.f32.mrb[0].mxu0
        %3711 = vdwg.mxu0
        %v3714 = vunpack.c.l.s4 1966171168
        %v3715 = vunpack.c.0.s8 %v3714
        %v3716 = vlaneseq
        %v3717 = vshrl.u32 %v3716, 7
        %v3718 = vsub.s32 %v3715, %v3717
        %v3719 = vrot.slane %v3709, %v3718
        %v3720 = vcombine.high %v3719, %v3719
        %v3722 = vunpack.c.l.s4 1966171168
        %v3723 = vunpack.c.0.s8 %v3722
        %v3724 = vlaneseq
        %v3725 = vshrl.u32 %v3724, 7
        %v3726 = vsub.s32 %v3723, %v3725
        %v3727 = vrot.slane %v3719, %v3726
        %v3729 = vunpack.c.l.s4 1966171168
        %v3730 = vunpack.c.0.s8 %v3729
        %v3731 = vlaneseq
        %v3732 = vshrl.u32 %v3731, 7
        %v3733 = vsub.s32 %v3730, %v3732
        %v3734 = vrot.slane %v3720, %v3733
        %v3735 = vcombine.high %v3727, %v3727
        %v3736 = vcombine.high %v3734, %v3734
        %3741 = vst.msk [vmem:[%s2837 + $0x1] sm:$0x1] %vm2269, %v3727
        %3742 = vst.msk [vmem:[%s2837 + $0x11] sm:$0x1] %vm2269, %v3734
        %3743 = vst.msk [vmem:[%s2837 + $0x21] sm:$0x1] %vm2269, %v3735
        %3744 = vst.msk [vmem:[%s2837 + $0x31] sm:$0x1] %vm2269, %v3736
        %3745 = vrot.lane.b32.xlu0 %v2156, 32
        %v3746 = vpop.permute.xlu0 %3745
        %3748 = vrot.lane.b32.xlu0 %v3071, 48
        %v3749 = vpop.permute.xlu0 %3748
        %v3751 = vsel %vm430, %v3746, %v3749
        %v3753 = vsel %vm432, %v3751, 0
        %3755 = vmatprep.subr.mxu0 0.0
        %3756 = vmatpush1.msra.mxu0 %v2157
        %3757 = vmatprep.subr.mxu0 0.0
        %3758 = vmatpush1.msra.mxu0 %v2158
        %3759 = vmatprep.subr.mxu0 0.0
        %3760 = vmatpush1.msra.mxu0 %v2159
        %3761 = vmatprep.subr.mxu0 0.0
        %3762 = vmatpush1.msra.mxu0 %v2160
        %3763 = vmatprep.subr.mxu0 0.0
        %3764 = vmatpush1.msra.mxu0 0.0
        %3765 = vmatprep.subr.mxu0 0.0
        %3766 = vmatpush1.msra.mxu0 0.0
        %3767 = vmatprep.subr.mxu0 0.0
        %3768 = vmatpush1.msra.mxu0 0.0
        %3769 = vmatprep.subr.mxu0 0.0
        %3770 = vmatpush1.msra.mxu0 0.0
        %3771 = vmatprep.subr.mxu0 0.0
        %3772 = vmatpush1.msra.mxu0 0.0
        %3773 = vmatprep.subr.mxu0 0.0
        %3774 = vmatpush1.msra.mxu0 0.0
        %3775 = vmatprep.subr.mxu0 0.0
        %3776 = vmatpush1.msra.mxu0 0.0
        %3777 = vmatprep.subr.mxu0 0.0
        %3778 = vmatpush1.msra.mxu0 0.0
        %3779 = vmatprep.subr.mxu0 0.0
        %3780 = vmatpush1.msra.mxu0 0.0
        %3781 = vmatprep.subr.mxu0 0.0
        %3782 = vmatpush1.msra.mxu0 0.0
        %3783 = vmatprep.subr.mxu0 0.0
        %3784 = vmatpush1.msra.mxu0 0.0
        %3785 = vmatprep.subr.mxu0 0.0
        %3786 = vmatpush1.msra.mxu0 0.0
        %3787 = vmatprep.subr.mxu0 0.0
        %3788 = vmatpush1.msra.mxu0 0.0
        %3789 = vmatprep.subr.mxu0 0.0
        %3790 = vmatpush1.msra.mxu0 0.0
        %3791 = vmatprep.subr.mxu0 0.0
        %3792 = vmatpush1.msra.mxu0 0.0
        %3793 = vmatprep.subr.mxu0 0.0
        %3794 = vmatpush1.msra.mxu0 0.0
        %3795 = vmatprep.subr.mxu0 0.0
        %3796 = vmatpush1.msra.mxu0 0.0
        %3797 = vmatprep.subr.mxu0 0.0
        %3798 = vmatpush1.msra.mxu0 0.0
        %3799 = vmatprep.subr.mxu0 0.0
        %3800 = vmatpush1.msra.mxu0 0.0
        %3801 = vmatprep.subr.mxu0 0.0
        %3802 = vmatpush1.msra.mxu0 0.0
        %3803 = vmatprep.subr.mxu0 0.0
        %3804 = vmatpush1.msra.mxu0 0.0
        %3805 = vmatprep.subr.mxu0 0.0
        %3806 = vmatpush1.msra.mxu0 0.0
        %3807 = vmatprep.subr.mxu0 0.0
        %3808 = vmatpush1.msra.mxu0 0.0
        %3809 = vmatprep.subr.mxu0 0.0
        %3810 = vmatpush1.msra.mxu0 0.0
        %3811 = vmatprep.subr.mxu0 0.0
        %3812 = vmatpush1.msra.mxu0 0.0
        %3813 = vmatprep.subr.mxu0 0.0
        %3814 = vmatpush1.msra.mxu0 0.0
        %3815 = vmatprep.subr.mxu0 0.0
        %3816 = vmatpush1.msra.mxu0 0.0
        %3817 = vmatprep.subr.mxu0 0.0
        %3818 = vmatpush1.msra.mxu0 0.0
        %3819 = vmatprep.mubr.f32.mxu0 0.0
        %3820 = vmatmul.mubr.f32.gmra.mrb[0].mxu0 %v3753
        %v3821 = vpop.f32.mrb[0].mxu0
        %v3822 = vadd.f32 0.0, %v3821
        %v3823 = vpop.f32.mrb[0].mxu0
        %3824 = vdwg.mxu0
        %v3827 = vunpack.c.l.s4 1966171168
        %v3828 = vunpack.c.0.s8 %v3827
        %v3829 = vlaneseq
        %v3830 = vshrl.u32 %v3829, 7
        %v3831 = vsub.s32 %v3828, %v3830
        %v3832 = vrot.slane %v3822, %v3831
        %v3833 = vcombine.high %v3832, %v3832
        %v3835 = vunpack.c.l.s4 1966171168
        %v3836 = vunpack.c.0.s8 %v3835
        %v3837 = vlaneseq
        %v3838 = vshrl.u32 %v3837, 7
        %v3839 = vsub.s32 %v3836, %v3838
        %v3840 = vrot.slane %v3832, %v3839
        %v3842 = vunpack.c.l.s4 1966171168
        %v3843 = vunpack.c.0.s8 %v3842
        %v3844 = vlaneseq
        %v3845 = vshrl.u32 %v3844, 7
        %v3846 = vsub.s32 %v3843, %v3845
        %v3847 = vrot.slane %v3833, %v3846
        %v3848 = vcombine.high %v3840, %v3840
        %v3849 = vcombine.high %v3847, %v3847
        %3854 = vst.msk [vmem:[%s2951 + $0x1] sm:$0x1] %vm2269, %v3840
        %3855 = vst.msk [vmem:[%s2951 + $0x11] sm:$0x1] %vm2269, %v3847
        %3856 = vst.msk [vmem:[%s2951 + $0x21] sm:$0x1] %vm2269, %v3848
        %3857 = vst.msk [vmem:[%s2951 + $0x31] sm:$0x1] %vm2269, %v3849
        %3858 = vrot.lane.b32.xlu0 %v2156, 16
        %v3859 = vpop.permute.xlu0 %3858
        %3861 = vrot.lane.b32.xlu0 %v3071, 32
        %v3862 = vpop.permute.xlu0 %3861
        %v3864 = vsel %vm430, %v3859, %v3862
        %v3866 = vsel %vm432, %v3864, 0
        %3868 = vmatprep.subr.mxu0 0.0
        %3869 = vmatpush1.msra.mxu0 %v2157
        %3870 = vmatprep.subr.mxu0 0.0
        %3871 = vmatpush1.msra.mxu0 %v2158
        %3872 = vmatprep.subr.mxu0 0.0
        %3873 = vmatpush1.msra.mxu0 %v2159
        %3874 = vmatprep.subr.mxu0 0.0
        %3875 = vmatpush1.msra.mxu0 %v2160
        %3876 = vmatprep.subr.mxu0 0.0
        %3877 = vmatpush1.msra.mxu0 0.0
        %3878 = vmatprep.subr.mxu0 0.0
        %3879 = vmatpush1.msra.mxu0 0.0
        %3880 = vmatprep.subr.mxu0 0.0
        %3881 = vmatpush1.msra.mxu0 0.0
        %3882 = vmatprep.subr.mxu0 0.0
        %3883 = vmatpush1.msra.mxu0 0.0
        %3884 = vmatprep.subr.mxu0 0.0
        %3885 = vmatpush1.msra.mxu0 0.0
        %3886 = vmatprep.subr.mxu0 0.0
        %3887 = vmatpush1.msra.mxu0 0.0
        %3888 = vmatprep.subr.mxu0 0.0
        %3889 = vmatpush1.msra.mxu0 0.0
        %3890 = vmatprep.subr.mxu0 0.0
        %3891 = vmatpush1.msra.mxu0 0.0
        %3892 = vmatprep.subr.mxu0 0.0
        %3893 = vmatpush1.msra.mxu0 0.0
        %3894 = vmatprep.subr.mxu0 0.0
        %3895 = vmatpush1.msra.mxu0 0.0
        %3896 = vmatprep.subr.mxu0 0.0
        %3897 = vmatpush1.msra.mxu0 0.0
        %3898 = vmatprep.subr.mxu0 0.0
        %3899 = vmatpush1.msra.mxu0 0.0
        %3900 = vmatprep.subr.mxu0 0.0
        %3901 = vmatpush1.msra.mxu0 0.0
        %3902 = vmatprep.subr.mxu0 0.0
        %3903 = vmatpush1.msra.mxu0 0.0
        %3904 = vmatprep.subr.mxu0 0.0
        %3905 = vmatpush1.msra.mxu0 0.0
        %3906 = vmatprep.subr.mxu0 0.0
        %3907 = vmatpush1.msra.mxu0 0.0
        %3908 = vmatprep.subr.mxu0 0.0
        %3909 = vmatpush1.msra.mxu0 0.0
        %3910 = vmatprep.subr.mxu0 0.0
        %3911 = vmatpush1.msra.mxu0 0.0
        %3912 = vmatprep.subr.mxu0 0.0
        %3913 = vmatpush1.msra.mxu0 0.0
        %3914 = vmatprep.subr.mxu0 0.0
        %3915 = vmatpush1.msra.mxu0 0.0
        %3916 = vmatprep.subr.mxu0 0.0
        %3917 = vmatpush1.msra.mxu0 0.0
        %3918 = vmatprep.subr.mxu0 0.0
        %3919 = vmatpush1.msra.mxu0 0.0
        %3920 = vmatprep.subr.mxu0 0.0
        %3921 = vmatpush1.msra.mxu0 0.0
        %3922 = vmatprep.subr.mxu0 0.0
        %3923 = vmatpush1.msra.mxu0 0.0
        %3924 = vmatprep.subr.mxu0 0.0
        %3925 = vmatpush1.msra.mxu0 0.0
        %3926 = vmatprep.subr.mxu0 0.0
        %3927 = vmatpush1.msra.mxu0 0.0
        %3928 = vmatprep.subr.mxu0 0.0
        %3929 = vmatpush1.msra.mxu0 0.0
        %3930 = vmatprep.subr.mxu0 0.0
        %3931 = vmatpush1.msra.mxu0 0.0
        %3932 = vmatprep.mubr.f32.mxu0 0.0
        %3933 = vmatmul.mubr.f32.gmra.mrb[0].mxu0 %v3866
        %v3934 = vpop.f32.mrb[0].mxu0
        %v3935 = vadd.f32 0.0, %v3934
        %v3936 = vpop.f32.mrb[0].mxu0
        %3937 = vdwg.mxu0
        %v3940 = vunpack.c.l.s4 1966171168
        %v3941 = vunpack.c.0.s8 %v3940
        %v3942 = vlaneseq
        %v3943 = vshrl.u32 %v3942, 7
        %v3944 = vsub.s32 %v3941, %v3943
        %v3945 = vrot.slane %v3935, %v3944
        %v3946 = vcombine.high %v3945, %v3945
        %v3948 = vunpack.c.l.s4 1966171168
        %v3949 = vunpack.c.0.s8 %v3948
        %v3950 = vlaneseq
        %v3951 = vshrl.u32 %v3950, 7
        %v3952 = vsub.s32 %v3949, %v3951
        %v3953 = vrot.slane %v3945, %v3952
        %v3955 = vunpack.c.l.s4 1966171168
        %v3956 = vunpack.c.0.s8 %v3955
        %v3957 = vlaneseq
        %v3958 = vshrl.u32 %v3957, 7
        %v3959 = vsub.s32 %v3956, %v3958
        %v3960 = vrot.slane %v3946, %v3959
        %v3961 = vcombine.high %v3953, %v3953
        %v3962 = vcombine.high %v3960, %v3960
        %3967 = vst.msk [vmem:[%s3065 + $0x1] sm:$0x1] %vm2269, %v3953
        %3968 = vst.msk [vmem:[%s3065 + $0x11] sm:$0x1] %vm2269, %v3960
        %3969 = vst.msk [vmem:[%s3065 + $0x21] sm:$0x1] %vm2269, %v3961
        %3970 = vst.msk [vmem:[%s3065 + $0x31] sm:$0x1] %vm2269, %v3962
        %s3971 = sand.u32 %s132, 1
        %s3972 = scalar_lea.sflag [#allocation4], %s3971
        %s3973 = sand.u32 %s132, 1
        %s3974 = smul.addr %s3973, 64
        %s3975 = scalar_lea.vmem [#allocation5], %s3974
        // Predicated region
        $region41: #{a_call__.1} parent=35 // pred_check
          %p3976 = pneg %p142
        $region42: #{a_call__.1} parent=35 // pred_check_branch
          %3978 = sbr.rel (%p3976) target = $region44
        $region43: #{a_call__.1} parent=35 // pred_region
          #allocation7 [shape = 'u32[6]{0}', space=smem, size = 0x18, scoped, tag = 'DMA stride descriptor']
          %s3979 = smul.u32 8, %s26
          %s3981 = ssub.s32 1024, 1024
          %3982 = vsyncadd %s3972, %s3981
          %s3983 = smul.addr %s25, 64
          %s3984 = sadd.s32 %s3979, %s3983
          %s3985 = smul.addr %s3984, 32
          %s3986 = scalar_lea.hbm %s4, %s3985
          %s3988 = sshll.u32 1, 14
          %s3989 = sxor.u32 4294967295, %s3988
          %s3992 = sshll.u32 7, 18
          %s3993 = sxor.u32 4294967295, %s3992
          %s3994 = sand.u32 0, %s3993
          %s3996 = sor.u32 %s3994, 0
          %s3998 = sshll.u32 3, 24
          %s3999 = sxor.u32 4294967295, %s3998
          %s4000 = sand.u32 %s3996, %s3999
          %s4002 = sor.u32 %s4000, 0
          %s4003 = sshll.u32 %s3975, 4
          %s4004 = int_to_ptr.vmem [resolvable:$true] %s4003
          %4010 = sst [smem:[#allocation7]] 256
          %s4011 = scalar_lea.smem [#allocation7], 1
          %4012 = sst [smem:[%s4011]] 512
          %s4013 = scalar_lea.smem [#allocation7], 2
          %4014 = sst [smem:[%s4013]] 8
          %s4015 = scalar_lea.smem [#allocation7], 3
          %4016 = sst [smem:[%s4015]] 32
          %s4017 = scalar_lea.smem [#allocation7], 4
          %4018 = sst [smem:[%s4017]] 32
          %s4019 = scalar_lea.smem [#allocation7], 5
          %4020 = sst [smem:[%s4019]] 2
          %4022 = dma.general %s4004, 1024, %s3986, %s3972, [#allocation6], [#allocation7], %s4002, 0
        $region44: #{a_call__.1} parent=35 // pred_fallthru
          _
      $region36: #{a_call__.1} parent=5 // pred_fallthru
        _
      %p4023 = scmp.le.s32.totalorder 2, %s16
      // Predicated region
      $region45: #{a_call__.1} parent=5 // pred_check
        %p4024 = pneg %p4023
      $region46: #{a_call__.1} parent=5 // pred_check_branch
        %4026 = sbr.rel (%p4024) target = $region48
      $region47: #{a_call__.1} parent=5 // pred_region
        %s4027 = ssub.s32 %s16, 2
        // Predicated region
        $region49: #{a_call__.1} parent=47 // pred_check
          %p4028 = pneg %p148
        $region50: #{a_call__.1} parent=47 // pred_check_branch
          %4030 = sbr.rel (%p4028) target = $region52
        $region51: #{a_call__.1} parent=47 // pred_region
          %s4031 = sand.u32 %s133, 1
          %s4032 = scalar_lea.sflag [#allocation4], %s4031
          %s4033 = sand.u32 %s133, 1
          %s4034 = smul.addr %s4033, 64
          %s4035 = scalar_lea.vmem [#allocation5], %s4034
          %4036 = dma.done %s4032, 1024
        $region52: #{a_call__.1} parent=47 // pred_fallthru
          _
      $region48: #{a_call__.1} parent=5 // pred_fallthru
        _
    $region6: #{a_call__.1} parent=1 // loop_footer
      %s20 = sadd.s32 1, %s16
    $region7: #{a_call__.1} parent=1 // loop_footer_branch
      %15 = sbr.rel target = $region3
    $region8: #{a_call__.1} parent=1 // loop_exit
      _
    %4037 = vsyncpa [#allocation3], 1
    %s4038 = scalar_lea.sflag [#allocation3], 1
    %4039 = vsyncpa %s4038, 1
    %4040 = vsyncpa [#allocation4], 1
    %s4041 = scalar_lea.sflag [#allocation4], 1
    %4042 = vsyncpa %s4041, 1

</llo_original>
